<compile_context>
chip_gen: v6e
topology: v6e:2x2x1
jax: 0.10.0
libtpu: 0.0.40
codegen_flags: <defaults>
</compile_context>

<pallas_src>
import functools

import numpy as np

import jax
import jax.numpy as jnp
from jax.experimental import pallas as pl
from jax.experimental.pallas import tpu as pltpu


NUM_CLASSES = 10
OUT_LANES = 128          # lane-dense output block width


# ----------------------------------------------------------------------------
# Constant (weight-independent) width-pooling matrices (TB-independent).
# ----------------------------------------------------------------------------
def _width_pool_matrices():
    # conv1 stage: width 28 -> 14 (6 channels interleaved in lanes), weight 0.5.
    p1 = np.zeros((28 * 6, 14 * 6), np.float32)
    for wo in range(14):
        for dw in range(2):
            for c in range(6):
                p1[(2 * wo + dw) * 6 + c, wo * 6 + c] = 0.5
    # conv2 stage: width 10 -> 5 (16 channels interleaved in lanes), weight 0.5.
    p2 = np.zeros((10 * 16, 5 * 16), np.float32)
    for wo in range(5):
        for dw in range(2):
            for c in range(16):
                p2[(2 * wo + dw) * 16 + c, wo * 16 + c] = 0.5
    return p1, p2


_P1_NP, _P2_NP = _width_pool_matrices()

# fc1 flatten map: lane layout (w*16 + c) at pooled row h  ->  torch feature
# index c*25 + h*5 + w (matching x.view(-1, 16*5*5) on an NCHW tensor).
_FC1_FMAP = np.array(
    [[c * 25 + h * 5 + w for w in range(5) for c in range(16)]
     for h in range(5)], dtype=np.int32)


# ----------------------------------------------------------------------------
# Weight repacking (tiny O(params) glue, batch-independent)
# ----------------------------------------------------------------------------
def _packed_conv1(w1):
    """(6,1,5,5) torch conv weight -> (160, 168) deep-K matrix.

    M[kh*32 + wi, wo*6 + co] = w1[co, 0, kh, wi - wo] for 0 <= wi - wo < 5.
    """
    kh, kw, wo, co = (a.ravel() for a in np.meshgrid(
        np.arange(5), np.arange(5), np.arange(28), np.arange(6), indexing="ij"))
    vals = w1[co, 0, kh, kw]
    return jnp.zeros((5 * 32, 28 * 6), jnp.float32).at[
        kh * 32 + wo + kw, wo * 6 + co].set(vals)


def _banded_conv2(w2):
    """(16,6,5,5) torch conv weight -> (5, 84, 160) banded matrices M2[kh].

    M2[kh][wi*6 + ci, wo*16 + co] = w2[co, ci, kh, wi - wo] for 0 <= wi-wo < 5.
    """
    kh, kw, wo, ci, co = (a.ravel() for a in np.meshgrid(
        np.arange(5), np.arange(5), np.arange(10), np.arange(6), np.arange(16),
        indexing="ij"))
    vals = w2[co, ci, kh, kw]
    return jnp.zeros((5, 14 * 6, 10 * 16), jnp.float32).at[
        kh, (wo + kw) * 6 + ci, wo * 16 + co].set(vals)


# ----------------------------------------------------------------------------
# The fused Pallas kernel (one grid step = TB images)
# ----------------------------------------------------------------------------
def _lenet_kernel(TB,
                  xp_ref, m1_ref, b1_ref, p1_ref,
                  m2_ref, b2_ref, p2_ref,
                  w1h_ref, bf1_ref, wf2_ref, bf2_ref, wf3_ref, bf3_ref,
                  out_ref, wp1_ref, a1_ref, wp2_ref):
    f32 = jnp.float32
    bf16 = jnp.bfloat16
    H1 = TB * 32          # conv1 rows (row = b*32 + ho; ho < 28 valid)
    H2 = TB * 16          # pooled-1 / conv2 rows (row = b*16 + ho)

    # --- conv1 (5x5, 1->6): ONE deep-K matmul (K=160) + bias + tanh ----------
    y1 = jnp.dot(xp_ref[...], m1_ref[...], preferred_element_type=f32)
    t1 = jnp.tanh(y1 + b1_ref[...]).astype(bf16)           # (H1, 168)

    # --- avgpool1: width/chan pool (matmul) + height pool (stride-2 reads) ---
    wp1_ref[...] = jnp.dot(t1, p1_ref[...], preferred_element_type=f32)
    a1 = 0.5 * (wp1_ref[pl.ds(0, H2, stride=2), :] +
                wp1_ref[pl.ds(1, H2, stride=2), :])         # (H2, 84)
    a1_ref[0:H2, :] = a1
    a1_ref[H2:H2 + 8, :] = jnp.zeros((8, 84), f32)          # pad rows for kh shifts

    # --- conv2 (5x5, 6->16): banded accumulation over kernel rows ------------
    # TODO(synk): pack the 5 shifted slices along K for one K=420 matmul.
    y2 = jnp.dot(a1_ref[0:H2, :].astype(bf16), m2_ref[0],
                 preferred_element_type=f32)
    for kh in range(1, 5):
        y2 = y2 + jnp.dot(a1_ref[kh:kh + H2, :].astype(bf16), m2_ref[kh],
                          preferred_element_type=f32)
    t2 = jnp.tanh(y2 + b2_ref[...]).astype(bf16)            # (H2, 160)

    # --- avgpool2 width pool -> scratch ---------------------------------------
    wp2_ref[...] = jnp.dot(t2, p2_ref[...], preferred_element_type=f32)

    # --- fc1 (400->120): height pool + torch flatten folded into 5 banded ----
    # matmuls over the 5 pooled rows, gathered with stride-16 sublane reads.
    z1 = jnp.zeros((TB, 120), f32)
    for h in range(5):
        row = 0.5 * (wp2_ref[pl.ds(2 * h, TB, stride=16), :] +
                     wp2_ref[pl.ds(2 * h + 1, TB, stride=16), :])  # (TB, 80)
        z1 = z1 + jnp.dot(row.astype(bf16), w1h_ref[h],
                          preferred_element_type=f32)
    z1 = jnp.tanh(z1 + bf1_ref[...]).astype(bf16)            # (TB, 120)

    # --- fc2 (120->84) + tanh, fc3 (84->10, lane-padded to 128) + softmax ----
    z2 = jnp.tanh(jnp.dot(z1, wf2_ref[...], preferred_element_type=f32)
                  + bf2_ref[...]).astype(bf16)               # (TB, 84)
    logits = (jnp.dot(z2, wf3_ref[...], preferred_element_type=f32)
              + bf3_ref[...])                                # (TB, 128); pads=-1e30
    logits = logits - jnp.max(logits, axis=-1, keepdims=True)
    e = jnp.exp(logits)                                      # pad lanes -> 0.0
    denom = jnp.sum(e, axis=-1, keepdims=True)
    # approx=False keeps softmax rows summing to 1 within f32 rounding.
    out_ref[...] = (e * pl.reciprocal(denom, approx=False)).astype(out_ref.dtype)


# ----------------------------------------------------------------------------
# Batch-tile selection (keeps grid >= 2 for medium batches -> v7x both TCs)
# ----------------------------------------------------------------------------
def _pick_tb(batch):
    b8 = ((batch + 7) // 8) * 8
    if b8 >= 64:
        return 32
    if b8 >= 32:
        return 16
    return 8


# ----------------------------------------------------------------------------
# Forward pass wrapper (single pallas_call)
# ----------------------------------------------------------------------------
@jax.jit
def lenet5_forward(params, x_nchw):
    B = x_nchw.shape[0]
    TB = _pick_tb(B)
    Bp = ((B + TB - 1) // TB) * TB          # padded batch (multiple of TB)

    # --- input packing: deep-K conv1 operand, bf16 ----------------------------
    x = x_nchw.astype(jnp.float32).reshape(B, 32, 32)
    if Bp != B:
        x = jnp.concatenate([x, jnp.zeros((Bp - B, 32, 32), jnp.float32)], 0)
    x2d = x.reshape(Bp * 32, 32)            # rows = (image, h), lanes = w
    x2d = jnp.concatenate([x2d, jnp.zeros((4, 32), jnp.float32)], 0)
    # xp[r, kh*32 + w] = x2d[r + kh, w]  ->  conv1 as one K=160 matmul.
    xp = jnp.concatenate([x2d[kh:kh + Bp * 32] for kh in range(5)],
                         axis=1).astype(jnp.bfloat16)

    # --- weight repacking (bf16 matmul operands, f32 biases) ------------------
    M1p = _packed_conv1(params["conv1_w"]).astype(jnp.bfloat16)      # (160,168)
    M2b = _banded_conv2(params["conv2_w"]).astype(jnp.bfloat16)      # (5,84,160)
    W1hb = params["fc1_w"][_FC1_FMAP].astype(jnp.bfloat16)           # (5,80,120)
    P1b = jnp.asarray(_P1_NP, jnp.bfloat16)                          # (168,84)
    P2b = jnp.asarray(_P2_NP, jnp.bfloat16)                          # (160,80)
    Wf2b = params["fc2_w"].astype(jnp.bfloat16)                      # (120,84)
    Wf3p = (jnp.zeros((84, OUT_LANES), jnp.float32)
            .at[:, :NUM_CLASSES].set(params["fc3_w"])
            .astype(jnp.bfloat16))                                   # (84,128)
    b1t = jnp.tile(params["conv1_b"], 28).reshape(1, 168)
    b2t = jnp.tile(params["conv2_b"], 10).reshape(1, 160)
    bf1 = params["fc1_b"].reshape(1, 120)
    bf2 = params["fc2_b"].reshape(1, 84)
    # Pad logits get bias -1e30 -> exp underflows to 0 -> exact masked softmax.
    bf3p = (jnp.full((1, OUT_LANES), -1e30, jnp.float32)
            .at[0, :NUM_CLASSES].set(params["fc3_b"]))

    def rep2(shape):
        return pl.BlockSpec(shape, lambda i: (0, 0))

    def rep3(shape):
        return pl.BlockSpec(shape, lambda i: (0, 0, 0))

    out = pl.pallas_call(
        functools.partial(_lenet_kernel, TB),
        out_shape=jax.ShapeDtypeStruct((Bp, OUT_LANES), jnp.float32),
        grid=(Bp // TB,),
        in_specs=[
            pl.BlockSpec((TB * 32, 160), lambda i: (i, 0)),  # xp (gridded)
            rep2((160, 168)),                                # M1p (resident)
            rep2((1, 168)),                                  # conv1 bias (tiled)
            rep2((168, 84)),                                 # P1
            rep3((5, 84, 160)),                              # M2
            rep2((1, 160)),                                  # conv2 bias (tiled)
            rep2((160, 80)),                                 # P2
            rep3((5, 80, 120)),                              # fc1 banded weights
            rep2((1, 120)),                                  # fc1 bias
            rep2((120, 84)),                                 # fc2 weight
            rep2((1, 84)),                                   # fc2 bias
            rep2((84, OUT_LANES)),                           # fc3 weight (padded)
            rep2((1, OUT_LANES)),                            # fc3 bias (padded)
        ],
        out_specs=pl.BlockSpec((TB, OUT_LANES), lambda i: (i, 0)),
        scratch_shapes=[
            pltpu.VMEM((TB * 32, 84), jnp.float32),          # width-pooled conv1
            pltpu.VMEM((TB * 16 + 8, 84), jnp.float32),      # pooled conv1 (+pad)
            pltpu.VMEM((TB * 16, 80), jnp.float32),          # width-pooled conv2
        ],
        compiler_params=pltpu.CompilerParams(
            dimension_semantics=("parallel",)),
    )(xp, M1p, b1t, P1b, M2b, b2t, P2b, W1hb, bf1, Wf2b, bf2, Wf3p, bf3p)

    return out[:B, :NUM_CLASSES]


# ----------------------------------------------------------------------------
# Pure-JAX reference (for in-script correctness verification only)
# ----------------------------------------------------------------------------
@jax.jit
def lenet5_reference(params, x_nchw):
    x = x_nchw.astype(jnp.float32)
    dn = ("NCHW", "OIHW", "NCHW")
    y = jax.lax.conv_general_dilated(x, params["conv1_w"], (1, 1), "VALID",
                                     dimension_numbers=dn)
    y = jnp.tanh(y + params["conv1_b"][None, :, None, None])
    y = jax.lax.reduce_window(y, 0.0, jax.lax.add,
                              (1, 1, 2, 2), (1, 1, 2, 2), "VALID") * 0.25
    y = jax.lax.conv_general_dilated(y, params["conv2_w"], (1, 1), "VALID",
                                     dimension_numbers=dn)
    y = jnp.tanh(y + params["conv2_b"][None, :, None, None])
    y = jax.lax.reduce_window(y, 0.0, jax.lax.add,
                              (1, 1, 2, 2), (1, 1, 2, 2), "VALID") * 0.25
    y = y.reshape(y.shape[0], 16 * 5 * 5)                    # torch view(-1, 400)
    y = jnp.tanh(y @ params["fc1_w"] + params["fc1_b"])
    y = jnp.tanh(y @ params["fc2_w"] + params["fc2_b"])
    logits = y @ params["fc3_w"] + params["fc3_b"]
    return jax.nn.softmax(logits, axis=-1)


# ----------------------------------------------------------------------------
# Parameters (deterministic, torch-like init, (in, out) fc layout)
# ----------------------------------------------------------------------------
def init_params(key):
    def uniform(key, shape, fan_in):
        bound = 1.0 / jnp.sqrt(float(fan_in))
        return jax.random.uniform(key, shape, jnp.float32, -bound, bound)

    keys = jax.random.split(key, 10)
    return {
        "conv1_w": uniform(keys[0], (6, 1, 5, 5), 1 * 5 * 5),
        "conv1_b": uniform(keys[1], (6,), 1 * 5 * 5),
        "conv2_w": uniform(keys[2], (16, 6, 5, 5), 6 * 5 * 5),
        "conv2_b": uniform(keys[3], (16,), 6 * 5 * 5),
        "fc1_w": uniform(keys[4], (400, 120), 400),   # rows: torch flatten order
        "fc1_b": uniform(keys[5], (120,), 400),       # c*25 + h*5 + w
        "fc2_w": uniform(keys[6], (120, 84), 120),
        "fc2_b": uniform(keys[7], (84,), 120),
        "fc3_w": uniform(keys[8], (84, 10), 84),
        "fc3_b": uniform(keys[9], (10,), 84),
    }


if __name__ == "__main__":
    key = jax.random.PRNGKey(0)
    k_params, k_x = jax.random.split(key)
    params = init_params(k_params)

    # B=2: TB=8, grid 1.  B=10: TB=8, grid 2 (batch padding).
    # B=64: TB=32, grid 2 (large-tile path, both v7x TensorCores busy).
    for B in (2, 10, 64):
        x = jax.random.normal(jax.random.fold_in(k_x, B),
                              (B, 1, 32, 32), jnp.float32)
        out = jax.block_until_ready(lenet5_forward(params, x))
        ref = jax.block_until_ready(lenet5_reference(params, x))

        assert out.shape == (B, 10)
        assert out.dtype == jnp.float32
        # softmax rows sum to ~1
        assert bool(jnp.all(jnp.abs(jnp.sum(out, axis=-1) - 1.0) < 1e-4))
        # match the pure-f32 JAX reference forward pass (bf16 matmul operands)
        err = float(jnp.max(jnp.abs(out - ref)))
        assert err < 1e-2, f"B={B}: mismatch vs reference: {err}"

    print("KERNEL_OK")
</pallas_src>

<mosaic_0001>
module attributes {stable_mosaic.version = 11 : i64} {
  func.func @_lenet_kernel(%arg0: i32, %arg1: memref<256x160xbf16, #tpu.memory_space<vmem>>, %arg2: memref<160x168xbf16, #tpu.memory_space<vmem>>, %arg3: memref<1x168xf32, #tpu.memory_space<vmem>>, %arg4: memref<168x84xbf16, #tpu.memory_space<vmem>>, %arg5: memref<5x84x160xbf16, #tpu.memory_space<vmem>>, %arg6: memref<1x160xf32, #tpu.memory_space<vmem>>, %arg7: memref<160x80xbf16, #tpu.memory_space<vmem>>, %arg8: memref<5x80x120xbf16, #tpu.memory_space<vmem>>, %arg9: memref<1x120xf32, #tpu.memory_space<vmem>>, %arg10: memref<120x84xbf16, #tpu.memory_space<vmem>>, %arg11: memref<1x84xf32, #tpu.memory_space<vmem>>, %arg12: memref<84x128xbf16, #tpu.memory_space<vmem>>, %arg13: memref<1x128xf32, #tpu.memory_space<vmem>>, %arg14: memref<8x128xf32, #tpu.memory_space<vmem>>, %arg15: memref<256x84xf32, #tpu.memory_space<vmem>>, %arg16: memref<136x84xf32, #tpu.memory_space<vmem>>, %arg17: memref<128x80xf32, #tpu.memory_space<vmem>>) attributes {dimension_semantics = [#tpu.dimension_semantics<parallel>], iteration_bounds = array<i64: 1>, scalar_prefetch = 0 : i64, scratch_operands = 3 : i64, tpu.core_type = #tpu.core_type<tc>, window_params = [{transform_indices = @transform_0, window_bounds = array<i64: 256, 160>}, {pipeline_mode = #tpu.pipeline_mode<synchronous>, transform_indices = @transform_1, window_bounds = array<i64: 160, 168>}, {pipeline_mode = #tpu.pipeline_mode<synchronous>, transform_indices = @transform_2, window_bounds = array<i64: 1, 168>}, {pipeline_mode = #tpu.pipeline_mode<synchronous>, transform_indices = @transform_3, window_bounds = array<i64: 168, 84>}, {pipeline_mode = #tpu.pipeline_mode<synchronous>, transform_indices = @transform_4, window_bounds = array<i64: 5, 84, 160>}, {pipeline_mode = #tpu.pipeline_mode<synchronous>, transform_indices = @transform_5, window_bounds = array<i64: 1, 160>}, {pipeline_mode = #tpu.pipeline_mode<synchronous>, transform_indices = @transform_6, window_bounds = array<i64: 160, 80>}, {pipeline_mode = #tpu.pipeline_mode<synchronous>, transform_indices = @transform_7, window_bounds = array<i64: 5, 80, 120>}, {pipeline_mode = #tpu.pipeline_mode<synchronous>, transform_indices = @transform_8, window_bounds = array<i64: 1, 120>}, {pipeline_mode = #tpu.pipeline_mode<synchronous>, transform_indices = @transform_9, window_bounds = array<i64: 120, 84>}, {pipeline_mode = #tpu.pipeline_mode<synchronous>, transform_indices = @transform_10, window_bounds = array<i64: 1, 84>}, {pipeline_mode = #tpu.pipeline_mode<synchronous>, transform_indices = @transform_11, window_bounds = array<i64: 84, 128>}, {pipeline_mode = #tpu.pipeline_mode<synchronous>, transform_indices = @transform_12, window_bounds = array<i64: 1, 128>}, {transform_indices = @transform_13, window_bounds = array<i64: 8, 128>}]} {
    %c0 = arith.constant 0 : index
    %c0_0 = arith.constant 0 : index
    %0 = vector.load %arg1[%c0, %c0_0] : memref<256x160xbf16, #tpu.memory_space<vmem>>, vector<256x160xbf16>
    %c0_1 = arith.constant 0 : index
    %c0_2 = arith.constant 0 : index
    %1 = vector.load %arg2[%c0_1, %c0_2] : memref<160x168xbf16, #tpu.memory_space<vmem>>, vector<160x168xbf16>
    %cst = arith.constant dense<0.000000e+00> : vector<256x168xf32>
    %2 = tpu.matmul %0, %1, %cst {dimension_numbers = #tpu.dot_dimension_numbers<[1], [0], [0], [1], [0, 0, 1, 1], [], []>} : vector<256x160xbf16>, vector<160x168xbf16>, vector<256x168xf32> -> vector<256x168xf32>
    %c0_3 = arith.constant 0 : index
    %c0_4 = arith.constant 0 : index
    %3 = vector.load %arg3[%c0_3, %c0_4] : memref<1x168xf32, #tpu.memory_space<vmem>>, vector<1x168xf32>
    %4 = vector.broadcast %3 : vector<1x168xf32> to vector<256x168xf32>
    %5 = arith.addf %2, %4 : vector<256x168xf32>
    %6 = math.tanh %5 : vector<256x168xf32>
    %7 = arith.truncf %6 : vector<256x168xf32> to vector<256x168xbf16>
    %c0_5 = arith.constant 0 : index
    %c0_6 = arith.constant 0 : index
    %8 = vector.load %arg4[%c0_5, %c0_6] : memref<168x84xbf16, #tpu.memory_space<vmem>>, vector<168x84xbf16>
    %cst_7 = arith.constant dense<0.000000e+00> : vector<256x84xf32>
    %9 = tpu.matmul %7, %8, %cst_7 {dimension_numbers = #tpu.dot_dimension_numbers<[1], [0], [0], [1], [0, 0, 1, 1], [], []>} : vector<256x168xbf16>, vector<168x84xbf16>, vector<256x84xf32> -> vector<256x84xf32>
    %c0_8 = arith.constant 0 : index
    %c0_9 = arith.constant 0 : index
    %10 = vector.load %arg15[%c0_8, %c0_9] : memref<256x84xf32, #tpu.memory_space<vmem>>, vector<256x84xf32>
    tpu.vector_store %arg15[%c0_8, %c0_9], %9 {strides = array<i32>} : memref<256x84xf32, #tpu.memory_space<vmem>>, vector<256x84xf32>,
    %c0_10 = arith.constant 0 : index
    %c0_11 = arith.constant 0 : index
    %11 = tpu.strided_load %arg15[%c0_10, %c0_11] {strides = array<i32: 2, 1>} : memref<256x84xf32, #tpu.memory_space<vmem>>, vector<128x84xf32>
    %c1 = arith.constant 1 : index
    %c0_12 = arith.constant 0 : index
    %12 = tpu.strided_load %arg15[%c1, %c0_12] {strides = array<i32: 2, 1>} : memref<256x84xf32, #tpu.memory_space<vmem>>, vector<128x84xf32>
    %13 = arith.addf %11, %12 : vector<128x84xf32>
    %cst_13 = arith.constant 5.000000e-01 : f32
    %14 = vector.broadcast %cst_13 : f32 to vector<128x84xf32>
    %15 = arith.mulf %14, %13 : vector<128x84xf32>
    %c0_14 = arith.constant 0 : index
    %c0_15 = arith.constant 0 : index
    %16 = vector.load %arg16[%c0_14, %c0_15] : memref<136x84xf32, #tpu.memory_space<vmem>>, vector<128x84xf32>
    tpu.vector_store %arg16[%c0_14, %c0_15], %15 {strides = array<i32>} : memref<136x84xf32, #tpu.memory_space<vmem>>, vector<128x84xf32>,
    %cst_16 = arith.constant 0.000000e+00 : f32
    %17 = vector.broadcast %cst_16 : f32 to vector<8x84xf32>
    %c128 = arith.constant 128 : index
    %c0_17 = arith.constant 0 : index
    %18 = vector.load %arg16[%c128, %c0_17] : memref<136x84xf32, #tpu.memory_space<vmem>>, vector<8x84xf32>
    tpu.vector_store %arg16[%c128, %c0_17], %17 {strides = array<i32>} : memref<136x84xf32, #tpu.memory_space<vmem>>, vector<8x84xf32>,
    %c0_18 = arith.constant 0 : index
    %c0_19 = arith.constant 0 : index
    %19 = vector.load %arg16[%c0_18, %c0_19] : memref<136x84xf32, #tpu.memory_space<vmem>>, vector<128x84xf32>
    %20 = arith.truncf %19 : vector<128x84xf32> to vector<128x84xbf16>
    %c0_20 = arith.constant 0 : index
    %c0_21 = arith.constant 0 : index
    %c0_22 = arith.constant 0 : index
    %21 = vector.load %arg5[%c0_20, %c0_21, %c0_22] : memref<5x84x160xbf16, #tpu.memory_space<vmem>>, vector<1x84x160xbf16>
    %22 = vector.shape_cast %21 : vector<1x84x160xbf16> to vector<84x160xbf16>
    %cst_23 = arith.constant dense<0.000000e+00> : vector<128x160xf32>
    %23 = tpu.matmul %20, %22, %cst_23 {dimension_numbers = #tpu.dot_dimension_numbers<[1], [0], [0], [1], [0, 0, 1, 1], [], []>} : vector<128x84xbf16>, vector<84x160xbf16>, vector<128x160xf32> -> vector<128x160xf32>
    %c1_24 = arith.constant 1 : index
    %c0_25 = arith.constant 0 : index
    %24 = vector.load %arg16[%c1_24, %c0_25] : memref<136x84xf32, #tpu.memory_space<vmem>>, vector<128x84xf32>
    %25 = arith.truncf %24 : vector<128x84xf32> to vector<128x84xbf16>
    %c1_26 = arith.constant 1 : index
    %c0_27 = arith.constant 0 : index
    %c0_28 = arith.constant 0 : index
    %26 = vector.load %arg5[%c1_26, %c0_27, %c0_28] : memref<5x84x160xbf16, #tpu.memory_space<vmem>>, vector<1x84x160xbf16>
    %27 = vector.shape_cast %26 : vector<1x84x160xbf16> to vector<84x160xbf16>
    %cst_29 = arith.constant dense<0.000000e+00> : vector<128x160xf32>
    %28 = tpu.matmul %25, %27, %cst_29 {dimension_numbers = #tpu.dot_dimension_numbers<[1], [0], [0], [1], [0, 0, 1, 1], [], []>} : vector<128x84xbf16>, vector<84x160xbf16>, vector<128x160xf32> -> vector<128x160xf32>
    %29 = arith.addf %23, %28 : vector<128x160xf32>
    %c2 = arith.constant 2 : index
    %c0_30 = arith.constant 0 : index
    %30 = vector.load %arg16[%c2, %c0_30] : memref<136x84xf32, #tpu.memory_space<vmem>>, vector<128x84xf32>
    %31 = arith.truncf %30 : vector<128x84xf32> to vector<128x84xbf16>
    %c2_31 = arith.constant 2 : index
    %c0_32 = arith.constant 0 : index
    %c0_33 = arith.constant 0 : index
    %32 = vector.load %arg5[%c2_31, %c0_32, %c0_33] : memref<5x84x160xbf16, #tpu.memory_space<vmem>>, vector<1x84x160xbf16>
    %33 = vector.shape_cast %32 : vector<1x84x160xbf16> to vector<84x160xbf16>
    %cst_34 = arith.constant dense<0.000000e+00> : vector<128x160xf32>
    %34 = tpu.matmul %31, %33, %cst_34 {dimension_numbers = #tpu.dot_dimension_numbers<[1], [0], [0], [1], [0, 0, 1, 1], [], []>} : vector<128x84xbf16>, vector<84x160xbf16>, vector<128x160xf32> -> vector<128x160xf32>
    %35 = arith.addf %29, %34 : vector<128x160xf32>
    %c3 = arith.constant 3 : index
    %c0_35 = arith.constant 0 : index
    %36 = vector.load %arg16[%c3, %c0_35] : memref<136x84xf32, #tpu.memory_space<vmem>>, vector<128x84xf32>
    %37 = arith.truncf %36 : vector<128x84xf32> to vector<128x84xbf16>
    %c3_36 = arith.constant 3 : index
    %c0_37 = arith.constant 0 : index
    %c0_38 = arith.constant 0 : index
    %38 = vector.load %arg5[%c3_36, %c0_37, %c0_38] : memref<5x84x160xbf16, #tpu.memory_space<vmem>>, vector<1x84x160xbf16>
    %39 = vector.shape_cast %38 : vector<1x84x160xbf16> to vector<84x160xbf16>
    %cst_39 = arith.constant dense<0.000000e+00> : vector<128x160xf32>
    %40 = tpu.matmul %37, %39, %cst_39 {dimension_numbers = #tpu.dot_dimension_numbers<[1], [0], [0], [1], [0, 0, 1, 1], [], []>} : vector<128x84xbf16>, vector<84x160xbf16>, vector<128x160xf32> -> vector<128x160xf32>
    %41 = arith.addf %35, %40 : vector<128x160xf32>
    %c4 = arith.constant 4 : index
    %c0_40 = arith.constant 0 : index
    %42 = vector.load %arg16[%c4, %c0_40] : memref<136x84xf32, #tpu.memory_space<vmem>>, vector<128x84xf32>
    %43 = arith.truncf %42 : vector<128x84xf32> to vector<128x84xbf16>
    %c4_41 = arith.constant 4 : index
    %c0_42 = arith.constant 0 : index
    %c0_43 = arith.constant 0 : index
    %44 = vector.load %arg5[%c4_41, %c0_42, %c0_43] : memref<5x84x160xbf16, #tpu.memory_space<vmem>>, vector<1x84x160xbf16>
    %45 = vector.shape_cast %44 : vector<1x84x160xbf16> to vector<84x160xbf16>
    %cst_44 = arith.constant dense<0.000000e+00> : vector<128x160xf32>
    %46 = tpu.matmul %43, %45, %cst_44 {dimension_numbers = #tpu.dot_dimension_numbers<[1], [0], [0], [1], [0, 0, 1, 1], [], []>} : vector<128x84xbf16>, vector<84x160xbf16>, vector<128x160xf32> -> vector<128x160xf32>
    %47 = arith.addf %41, %46 : vector<128x160xf32>
    %c0_45 = arith.constant 0 : index
    %c0_46 = arith.constant 0 : index
    %48 = vector.load %arg6[%c0_45, %c0_46] : memref<1x160xf32, #tpu.memory_space<vmem>>, vector<1x160xf32>
    %49 = vector.broadcast %48 : vector<1x160xf32> to vector<128x160xf32>
    %50 = arith.addf %47, %49 : vector<128x160xf32>
    %51 = math.tanh %50 : vector<128x160xf32>
    %52 = arith.truncf %51 : vector<128x160xf32> to vector<128x160xbf16>
    %c0_47 = arith.constant 0 : index
    %c0_48 = arith.constant 0 : index
    %53 = vector.load %arg7[%c0_47, %c0_48] : memref<160x80xbf16, #tpu.memory_space<vmem>>, vector<160x80xbf16>
    %cst_49 = arith.constant dense<0.000000e+00> : vector<128x80xf32>
    %54 = tpu.matmul %52, %53, %cst_49 {dimension_numbers = #tpu.dot_dimension_numbers<[1], [0], [0], [1], [0, 0, 1, 1], [], []>} : vector<128x160xbf16>, vector<160x80xbf16>, vector<128x80xf32> -> vector<128x80xf32>
    %c0_50 = arith.constant 0 : index
    %c0_51 = arith.constant 0 : index
    %55 = vector.load %arg17[%c0_50, %c0_51] : memref<128x80xf32, #tpu.memory_space<vmem>>, vector<128x80xf32>
    tpu.vector_store %arg17[%c0_50, %c0_51], %54 {strides = array<i32>} : memref<128x80xf32, #tpu.memory_space<vmem>>, vector<128x80xf32>,
    %cst_52 = arith.constant 0.000000e+00 : f32
    %56 = vector.broadcast %cst_52 : f32 to vector<8x120xf32>
    %c0_53 = arith.constant 0 : index
    %c0_54 = arith.constant 0 : index
    %57 = tpu.strided_load %arg17[%c0_53, %c0_54] {strides = array<i32: 16, 1>} : memref<128x80xf32, #tpu.memory_space<vmem>>, vector<8x80xf32>
    %c1_55 = arith.constant 1 : index
    %c0_56 = arith.constant 0 : index
    %58 = tpu.strided_load %arg17[%c1_55, %c0_56] {strides = array<i32: 16, 1>} : memref<128x80xf32, #tpu.memory_space<vmem>>, vector<8x80xf32>
    %59 = arith.addf %57, %58 : vector<8x80xf32>
    %cst_57 = arith.constant 5.000000e-01 : f32
    %60 = vector.broadcast %cst_57 : f32 to vector<8x80xf32>
    %61 = arith.mulf %60, %59 : vector<8x80xf32>
    %62 = arith.truncf %61 : vector<8x80xf32> to vector<8x80xbf16>
    %c0_58 = arith.constant 0 : index
    %c0_59 = arith.constant 0 : index
    %c0_60 = arith.constant 0 : index
    %63 = vector.load %arg8[%c0_58, %c0_59, %c0_60] : memref<5x80x120xbf16, #tpu.memory_space<vmem>>, vector<1x80x120xbf16>
    %64 = vector.shape_cast %63 : vector<1x80x120xbf16> to vector<80x120xbf16>
    %cst_61 = arith.constant dense<0.000000e+00> : vector<8x120xf32>
    %65 = tpu.matmul %62, %64, %cst_61 {dimension_numbers = #tpu.dot_dimension_numbers<[1], [0], [0], [1], [0, 0, 1, 1], [], []>} : vector<8x80xbf16>, vector<80x120xbf16>, vector<8x120xf32> -> vector<8x120xf32>
    %66 = arith.addf %56, %65 : vector<8x120xf32>
    %c2_62 = arith.constant 2 : index
    %c0_63 = arith.constant 0 : index
    %67 = tpu.strided_load %arg17[%c2_62, %c0_63] {strides = array<i32: 16, 1>} : memref<128x80xf32, #tpu.memory_space<vmem>>, vector<8x80xf32>
    %c3_64 = arith.constant 3 : index
    %c0_65 = arith.constant 0 : index
    %68 = tpu.strided_load %arg17[%c3_64, %c0_65] {strides = array<i32: 16, 1>} : memref<128x80xf32, #tpu.memory_space<vmem>>, vector<8x80xf32>
    %69 = arith.addf %67, %68 : vector<8x80xf32>
    %cst_66 = arith.constant 5.000000e-01 : f32
    %70 = vector.broadcast %cst_66 : f32 to vector<8x80xf32>
    %71 = arith.mulf %70, %69 : vector<8x80xf32>
    %72 = arith.truncf %71 : vector<8x80xf32> to vector<8x80xbf16>
    %c1_67 = arith.constant 1 : index
    %c0_68 = arith.constant 0 : index
    %c0_69 = arith.constant 0 : index
    %73 = vector.load %arg8[%c1_67, %c0_68, %c0_69] : memref<5x80x120xbf16, #tpu.memory_space<vmem>>, vector<1x80x120xbf16>
    %74 = vector.shape_cast %73 : vector<1x80x120xbf16> to vector<80x120xbf16>
    %cst_70 = arith.constant dense<0.000000e+00> : vector<8x120xf32>
    %75 = tpu.matmul %72, %74, %cst_70 {dimension_numbers = #tpu.dot_dimension_numbers<[1], [0], [0], [1], [0, 0, 1, 1], [], []>} : vector<8x80xbf16>, vector<80x120xbf16>, vector<8x120xf32> -> vector<8x120xf32>
    %76 = arith.addf %66, %75 : vector<8x120xf32>
    %c4_71 = arith.constant 4 : index
    %c0_72 = arith.constant 0 : index
    %77 = tpu.strided_load %arg17[%c4_71, %c0_72] {strides = array<i32: 16, 1>} : memref<128x80xf32, #tpu.memory_space<vmem>>, vector<8x80xf32>
    %c5 = arith.constant 5 : index
    %c0_73 = arith.constant 0 : index
    %78 = tpu.strided_load %arg17[%c5, %c0_73] {strides = array<i32: 16, 1>} : memref<128x80xf32, #tpu.memory_space<vmem>>, vector<8x80xf32>
    %79 = arith.addf %77, %78 : vector<8x80xf32>
    %cst_74 = arith.constant 5.000000e-01 : f32
    %80 = vector.broadcast %cst_74 : f32 to vector<8x80xf32>
    %81 = arith.mulf %80, %79 : vector<8x80xf32>
    %82 = arith.truncf %81 : vector<8x80xf32> to vector<8x80xbf16>
    %c2_75 = arith.constant 2 : index
    %c0_76 = arith.constant 0 : index
    %c0_77 = arith.constant 0 : index
    %83 = vector.load %arg8[%c2_75, %c0_76, %c0_77] : memref<5x80x120xbf16, #tpu.memory_space<vmem>>, vector<1x80x120xbf16>
    %84 = vector.shape_cast %83 : vector<1x80x120xbf16> to vector<80x120xbf16>
    %cst_78 = arith.constant dense<0.000000e+00> : vector<8x120xf32>
    %85 = tpu.matmul %82, %84, %cst_78 {dimension_numbers = #tpu.dot_dimension_numbers<[1], [0], [0], [1], [0, 0, 1, 1], [], []>} : vector<8x80xbf16>, vector<80x120xbf16>, vector<8x120xf32> -> vector<8x120xf32>
    %86 = arith.addf %76, %85 : vector<8x120xf32>
    %c6 = arith.constant 6 : index
    %c0_79 = arith.constant 0 : index
    %87 = tpu.strided_load %arg17[%c6, %c0_79] {strides = array<i32: 16, 1>} : memref<128x80xf32, #tpu.memory_space<vmem>>, vector<8x80xf32>
    %c7 = arith.constant 7 : index
    %c0_80 = arith.constant 0 : index
    %88 = tpu.strided_load %arg17[%c7, %c0_80] {strides = array<i32: 16, 1>} : memref<128x80xf32, #tpu.memory_space<vmem>>, vector<8x80xf32>
    %89 = arith.addf %87, %88 : vector<8x80xf32>
    %cst_81 = arith.constant 5.000000e-01 : f32
    %90 = vector.broadcast %cst_81 : f32 to vector<8x80xf32>
    %91 = arith.mulf %90, %89 : vector<8x80xf32>
    %92 = arith.truncf %91 : vector<8x80xf32> to vector<8x80xbf16>
    %c3_82 = arith.constant 3 : index
    %c0_83 = arith.constant 0 : index
    %c0_84 = arith.constant 0 : index
    %93 = vector.load %arg8[%c3_82, %c0_83, %c0_84] : memref<5x80x120xbf16, #tpu.memory_space<vmem>>, vector<1x80x120xbf16>
    %94 = vector.shape_cast %93 : vector<1x80x120xbf16> to vector<80x120xbf16>
    %cst_85 = arith.constant dense<0.000000e+00> : vector<8x120xf32>
    %95 = tpu.matmul %92, %94, %cst_85 {dimension_numbers = #tpu.dot_dimension_numbers<[1], [0], [0], [1], [0, 0, 1, 1], [], []>} : vector<8x80xbf16>, vector<80x120xbf16>, vector<8x120xf32> -> vector<8x120xf32>
    %96 = arith.addf %86, %95 : vector<8x120xf32>
    %c8 = arith.constant 8 : index
    %c0_86 = arith.constant 0 : index
    %97 = tpu.strided_load %arg17[%c8, %c0_86] {strides = array<i32: 16, 1>} : memref<128x80xf32, #tpu.memory_space<vmem>>, vector<8x80xf32>
    %c9 = arith.constant 9 : index
    %c0_87 = arith.constant 0 : index
    %98 = tpu.strided_load %arg17[%c9, %c0_87] {strides = array<i32: 16, 1>} : memref<128x80xf32, #tpu.memory_space<vmem>>, vector<8x80xf32>
    %99 = arith.addf %97, %98 : vector<8x80xf32>
    %cst_88 = arith.constant 5.000000e-01 : f32
    %100 = vector.broadcast %cst_88 : f32 to vector<8x80xf32>
    %101 = arith.mulf %100, %99 : vector<8x80xf32>
    %102 = arith.truncf %101 : vector<8x80xf32> to vector<8x80xbf16>
    %c4_89 = arith.constant 4 : index
    %c0_90 = arith.constant 0 : index
    %c0_91 = arith.constant 0 : index
    %103 = vector.load %arg8[%c4_89, %c0_90, %c0_91] : memref<5x80x120xbf16, #tpu.memory_space<vmem>>, vector<1x80x120xbf16>
    %104 = vector.shape_cast %103 : vector<1x80x120xbf16> to vector<80x120xbf16>
    %cst_92 = arith.constant dense<0.000000e+00> : vector<8x120xf32>
    %105 = tpu.matmul %102, %104, %cst_92 {dimension_numbers = #tpu.dot_dimension_numbers<[1], [0], [0], [1], [0, 0, 1, 1], [], []>} : vector<8x80xbf16>, vector<80x120xbf16>, vector<8x120xf32> -> vector<8x120xf32>
    %106 = arith.addf %96, %105 : vector<8x120xf32>
    %c0_93 = arith.constant 0 : index
    %c0_94 = arith.constant 0 : index
    %107 = vector.load %arg9[%c0_93, %c0_94] : memref<1x120xf32, #tpu.memory_space<vmem>>, vector<1x120xf32>
    %108 = vector.broadcast %107 : vector<1x120xf32> to vector<8x120xf32>
    %109 = arith.addf %106, %108 : vector<8x120xf32>
    %110 = math.tanh %109 : vector<8x120xf32>
    %111 = arith.truncf %110 : vector<8x120xf32> to vector<8x120xbf16>
    %c0_95 = arith.constant 0 : index
    %c0_96 = arith.constant 0 : index
    %112 = vector.load %arg10[%c0_95, %c0_96] : memref<120x84xbf16, #tpu.memory_space<vmem>>, vector<120x84xbf16>
    %cst_97 = arith.constant dense<0.000000e+00> : vector<8x84xf32>
    %113 = tpu.matmul %111, %112, %cst_97 {dimension_numbers = #tpu.dot_dimension_numbers<[1], [0], [0], [1], [0, 0, 1, 1], [], []>} : vector<8x120xbf16>, vector<120x84xbf16>, vector<8x84xf32> -> vector<8x84xf32>
    %c0_98 = arith.constant 0 : index
    %c0_99 = arith.constant 0 : index
    %114 = vector.load %arg11[%c0_98, %c0_99] : memref<1x84xf32, #tpu.memory_space<vmem>>, vector<1x84xf32>
    %115 = vector.broadcast %114 : vector<1x84xf32> to vector<8x84xf32>
    %116 = arith.addf %113, %115 : vector<8x84xf32>
    %117 = math.tanh %116 : vector<8x84xf32>
    %118 = arith.truncf %117 : vector<8x84xf32> to vector<8x84xbf16>
    %c0_100 = arith.constant 0 : index
    %c0_101 = arith.constant 0 : index
    %119 = vector.load %arg12[%c0_100, %c0_101] : memref<84x128xbf16, #tpu.memory_space<vmem>>, vector<84x128xbf16>
    %cst_102 = arith.constant dense<0.000000e+00> : vector<8x128xf32>
    %120 = tpu.matmul %118, %119, %cst_102 {dimension_numbers = #tpu.dot_dimension_numbers<[1], [0], [0], [1], [0, 0, 1, 1], [], []>} : vector<8x84xbf16>, vector<84x128xbf16>, vector<8x128xf32> -> vector<8x128xf32>
    %c0_103 = arith.constant 0 : index
    %c0_104 = arith.constant 0 : index
    %121 = vector.load %arg13[%c0_103, %c0_104] : memref<1x128xf32, #tpu.memory_space<vmem>>, vector<1x128xf32>
    %122 = vector.broadcast %121 : vector<1x128xf32> to vector<8x128xf32>
    %123 = arith.addf %120, %122 : vector<8x128xf32>
    %cst_105 = arith.constant dense<0xFF800000> : vector<8xf32>
    %124 = vector.multi_reduction <maximumf>, %123, %cst_105 [1] : vector<8x128xf32> to vector<8xf32>
    %125 = vector.shape_cast %124 : vector<8xf32> to vector<8x1xf32>
    %126 = vector.broadcast %125 : vector<8x1xf32> to vector<8x128xf32>
    %127 = arith.subf %123, %126 : vector<8x128xf32>
    %128 = math.exp %127 : vector<8x128xf32>
    %cst_106 = arith.constant dense<0.000000e+00> : vector<8xf32>
    %129 = vector.multi_reduction <add>, %128, %cst_106 [1] : vector<8x128xf32> to vector<8xf32>
    %130 = vector.shape_cast %129 : vector<8xf32> to vector<8x1xf32>
    %131 = tpu.reciprocal %130 : vector<8x1xf32> -> vector<8x1xf32>
    %132 = vector.broadcast %131 : vector<8x1xf32> to vector<8x128xf32>
    %133 = arith.mulf %128, %132 : vector<8x128xf32>
    %c0_107 = arith.constant 0 : index
    %c0_108 = arith.constant 0 : index
    %134 = vector.load %arg14[%c0_107, %c0_108] : memref<8x128xf32, #tpu.memory_space<vmem>>, vector<8x128xf32>
    tpu.vector_store %arg14[%c0_107, %c0_108], %133 {strides = array<i32>} : memref<8x128xf32, #tpu.memory_space<vmem>>, vector<8x128xf32>,
    return
  }
  func.func @transform_0(%arg0: i32) -> (i32, i32) {
    %c0_i32 = arith.constant 0 : i32
    %c0_i32_0 = arith.constant 0 : i32
    return %arg0, %c0_i32 : i32, i32
  }
  func.func @transform_1(%arg0: i32) -> (i32, i32) {
    %c0_i32 = arith.constant 0 : i32
    %c0_i32_0 = arith.constant 0 : i32
    %c0_i32_1 = arith.constant 0 : i32
    return %c0_i32, %c0_i32_0 : i32, i32
  }
  func.func @transform_2(%arg0: i32) -> (i32, i32) {
    %c0_i32 = arith.constant 0 : i32
    %c0_i32_0 = arith.constant 0 : i32
    %c0_i32_1 = arith.constant 0 : i32
    return %c0_i32, %c0_i32_0 : i32, i32
  }
  func.func @transform_3(%arg0: i32) -> (i32, i32) {
    %c0_i32 = arith.constant 0 : i32
    %c0_i32_0 = arith.constant 0 : i32
    %c0_i32_1 = arith.constant 0 : i32
    return %c0_i32, %c0_i32_0 : i32, i32
  }
  func.func @transform_4(%arg0: i32) -> (i32, i32, i32) {
    %c0_i32 = arith.constant 0 : i32
    %c0_i32_0 = arith.constant 0 : i32
    %c0_i32_1 = arith.constant 0 : i32
    %c0_i32_2 = arith.constant 0 : i32
    return %c0_i32, %c0_i32_0, %c0_i32_1 : i32, i32, i32
  }
  func.func @transform_5(%arg0: i32) -> (i32, i32) {
    %c0_i32 = arith.constant 0 : i32
    %c0_i32_0 = arith.constant 0 : i32
    %c0_i32_1 = arith.constant 0 : i32
    return %c0_i32, %c0_i32_0 : i32, i32
  }
  func.func @transform_6(%arg0: i32) -> (i32, i32) {
    %c0_i32 = arith.constant 0 : i32
    %c0_i32_0 = arith.constant 0 : i32
    %c0_i32_1 = arith.constant 0 : i32
    return %c0_i32, %c0_i32_0 : i32, i32
  }
  func.func @transform_7(%arg0: i32) -> (i32, i32, i32) {
    %c0_i32 = arith.constant 0 : i32
    %c0_i32_0 = arith.constant 0 : i32
    %c0_i32_1 = arith.constant 0 : i32
    %c0_i32_2 = arith.constant 0 : i32
    return %c0_i32, %c0_i32_0, %c0_i32_1 : i32, i32, i32
  }
  func.func @transform_8(%arg0: i32) -> (i32, i32) {
    %c0_i32 = arith.constant 0 : i32
    %c0_i32_0 = arith.constant 0 : i32
    %c0_i32_1 = arith.constant 0 : i32
    return %c0_i32, %c0_i32_0 : i32, i32
  }
  func.func @transform_9(%arg0: i32) -> (i32, i32) {
    %c0_i32 = arith.constant 0 : i32
    %c0_i32_0 = arith.constant 0 : i32
    %c0_i32_1 = arith.constant 0 : i32
    return %c0_i32, %c0_i32_0 : i32, i32
  }
  func.func @transform_10(%arg0: i32) -> (i32, i32) {
    %c0_i32 = arith.constant 0 : i32
    %c0_i32_0 = arith.constant 0 : i32
    %c0_i32_1 = arith.constant 0 : i32
    return %c0_i32, %c0_i32_0 : i32, i32
  }
  func.func @transform_11(%arg0: i32) -> (i32, i32) {
    %c0_i32 = arith.constant 0 : i32
    %c0_i32_0 = arith.constant 0 : i32
    %c0_i32_1 = arith.constant 0 : i32
    return %c0_i32, %c0_i32_0 : i32, i32
  }
  func.func @transform_12(%arg0: i32) -> (i32, i32) {
    %c0_i32 = arith.constant 0 : i32
    %c0_i32_0 = arith.constant 0 : i32
    %c0_i32_1 = arith.constant 0 : i32
    return %c0_i32, %c0_i32_0 : i32, i32
  }
  func.func @transform_13(%arg0: i32) -> (i32, i32) {
    %c0_i32 = arith.constant 0 : i32
    %c0_i32_0 = arith.constant 0 : i32
    return %arg0, %c0_i32 : i32, i32
  }
}

</mosaic_0001>

<llo_original>
// kernel: tile.13
$region0: #{tile.13}
  #allocation0 [shape = 's32[1]{0}', space=sflag, size = 0x4, scoped, tag = 'scoped memory for tile.13']
  %s0 = inlined_call_operand.vmem [shape: f32[6], index: 0, kind: input, shape index: {}]
  %s1 = inlined_call_operand.vmem [shape: f32[28,6], index: 1, kind: output, shape index: {}]
  // Predicated region
  $region2: #{tile.13} parent=0 // pred_check
    _
  $region3: #{tile.13} parent=0 // pred_check_branch
    %3 = sbr.rel (0) target = $region5
  $region4: #{tile.13} parent=0 // pred_region
    _
  $region5: #{tile.13} parent=0 // pred_fallthru
    _
  %v4 = vld [vmem:[%s0] ss:$0 sm:$0xff]
  %5 = vst [vmem:[%s1] sm:$0xff] %v4
  %s6 = scalar_lea.vmem %s1, 8
  %7 = vst [vmem:[%s6] sm:$0xff] %v4
  %s8 = scalar_lea.vmem %s1, 16
  %9 = vst [vmem:[%s8] sm:$0xff] %v4
  %s10 = scalar_lea.vmem %s1, 24
  %11 = vst [vmem:[%s10] sm:$0xff] %v4

// kernel: tile.14
$region0: #{tile.14}
  %s0 = inlined_call_operand.vmem [shape: f32[28,6], index: 0, kind: input, shape index: {}]
  %s1 = inlined_call_operand.vmem [shape: f32[1,168], index: 1, kind: output, shape index: {}]
  $region1: #{tile.14} parent=0
    #allocation0 [shape = 'u8[8192]{0}', space=vmem, size = 0x2000, scoped, tag = 'scoped mem for output reshape']
    %v2 = vld [vmem:[%s0] sm:$0x1]
    %vm3 = vcmask 48128
    %4 = vst.msk [vmem:[#allocation0] sm:$0x1] %vm3, %v2
    %s5 = scalar_lea.vmem %s0, 21
    %v6 = vld [vmem:[%s5] sm:$0x1]
    %s7 = scalar_lea.vmem %s0, 21
    %v8 = vld [vmem:[%s7] sm:$0x1]
    %vm9 = vcmask 15360
    %v10 = vsel %vm9, %v8, %v6
    %11 = vrot.lane.b32.xlu0 %v10, 126
    %v12 = vpop.permute.xlu0 %11
    %vm13 = vcmask 31744
    %s14 = scalar_lea.vmem [#allocation0], 8
    %15 = vst.msk [vmem:[%s14] sm:$0x1] %vm13, %v12
    %vm16 = vcmask 1048560
    %17 = vst.msk [vmem:[#allocation0] sm:$0x1] %vm16, %v12
    %s18 = scalar_lea.vmem %s0, 20
    %v19 = vld [vmem:[%s18] sm:$0x1]
    %20 = vrot.lane.b32.xlu0 %v19, 120
    %v21 = vpop.permute.xlu0 %20
    %vm22 = vcmask 1032128
    %23 = vst.msk [vmem:[#allocation0] sm:$0x1] %vm22, %v21
    %s24 = scalar_lea.vmem %s0, 19
    %v25 = vld [vmem:[%s24] sm:$0x1]
    %26 = vrot.lane.b32.xlu0 %v25, 114
    %v27 = vpop.permute.xlu0 %26
    %vm28 = vcmask 982928
    %29 = vst.msk [vmem:[#allocation0] sm:$0x1] %vm28, %v27
    %s30 = scalar_lea.vmem %s0, 18
    %v31 = vld [vmem:[%s30] sm:$0x1]
    %32 = vrot.lane.b32.xlu0 %v31, 108
    %v33 = vpop.permute.xlu0 %32
    %vm34 = vcmask 933728
    %35 = vst.msk [vmem:[#allocation0] sm:$0x1] %vm34, %v33
    %s36 = scalar_lea.vmem %s0, 17
    %v37 = vld [vmem:[%s36] sm:$0x1]
    %38 = vrot.lane.b32.xlu0 %v37, 102
    %v39 = vpop.permute.xlu0 %38
    %vm40 = vcmask 884528
    %41 = vst.msk [vmem:[#allocation0] sm:$0x1] %vm40, %v39
    %s42 = scalar_lea.vmem %s0, 16
    %v43 = vld [vmem:[%s42] sm:$0x1]
    %44 = vrot.lane.b32.xlu0 %v43, 96
    %v45 = vpop.permute.xlu0 %44
    %vm46 = vcmask 835328
    %47 = vst.msk [vmem:[#allocation0] sm:$0x1] %vm46, %v45
    %s48 = scalar_lea.vmem %s0, 15
    %v49 = vld [vmem:[%s48] sm:$0x1]
    %50 = vrot.lane.b32.xlu0 %v49, 90
    %v51 = vpop.permute.xlu0 %50
    %vm52 = vcmask 786128
    %53 = vst.msk [vmem:[#allocation0] sm:$0x1] %vm52, %v51
    %s54 = scalar_lea.vmem %s0, 14
    %v55 = vld [vmem:[%s54] sm:$0x1]
    %56 = vrot.lane.b32.xlu0 %v55, 84
    %v57 = vpop.permute.xlu0 %56
    %vm58 = vcmask 736928
    %59 = vst.msk [vmem:[#allocation0] sm:$0x1] %vm58, %v57
    %s60 = scalar_lea.vmem %s0, 13
    %v61 = vld [vmem:[%s60] sm:$0x1]
    %62 = vrot.lane.b32.xlu0 %v61, 78
    %v63 = vpop.permute.xlu0 %62
    %vm64 = vcmask 687728
    %65 = vst.msk [vmem:[#allocation0] sm:$0x1] %vm64, %v63
    %s66 = scalar_lea.vmem %s0, 12
    %v67 = vld [vmem:[%s66] sm:$0x1]
    %68 = vrot.lane.b32.xlu0 %v67, 72
    %v69 = vpop.permute.xlu0 %68
    %vm70 = vcmask 638528
    %71 = vst.msk [vmem:[#allocation0] sm:$0x1] %vm70, %v69
    %s72 = scalar_lea.vmem %s0, 11
    %v73 = vld [vmem:[%s72] sm:$0x1]
    %74 = vrot.lane.b32.xlu0 %v73, 66
    %v75 = vpop.permute.xlu0 %74
    %vm76 = vcmask 589328
    %77 = vst.msk [vmem:[#allocation0] sm:$0x1] %vm76, %v75
    %s78 = scalar_lea.vmem %s0, 10
    %v79 = vld [vmem:[%s78] sm:$0x1]
    %80 = vrot.lane.b32.xlu0 %v79, 60
    %v81 = vpop.permute.xlu0 %80
    %vm82 = vcmask 540128
    %83 = vst.msk [vmem:[#allocation0] sm:$0x1] %vm82, %v81
    %s84 = scalar_lea.vmem %s0, 9
    %v85 = vld [vmem:[%s84] sm:$0x1]
    %86 = vrot.lane.b32.xlu0 %v85, 54
    %v87 = vpop.permute.xlu0 %86
    %vm88 = vcmask 490928
    %89 = vst.msk [vmem:[#allocation0] sm:$0x1] %vm88, %v87
    %s90 = scalar_lea.vmem %s0, 8
    %v91 = vld [vmem:[%s90] sm:$0x1]
    %92 = vrot.lane.b32.xlu0 %v91, 48
    %v93 = vpop.permute.xlu0 %92
    %vm94 = vcmask 441728
    %95 = vst.msk [vmem:[#allocation0] sm:$0x1] %vm94, %v93
    %s96 = scalar_lea.vmem %s0, 7
    %v97 = vld [vmem:[%s96] sm:$0x1]
    %98 = vrot.lane.b32.xlu0 %v97, 42
    %v99 = vpop.permute.xlu0 %98
    %vm100 = vcmask 392528
    %101 = vst.msk [vmem:[#allocation0] sm:$0x1] %vm100, %v99
    %s102 = scalar_lea.vmem %s0, 6
    %v103 = vld [vmem:[%s102] sm:$0x1]
    %104 = vrot.lane.b32.xlu0 %v103, 36
    %v105 = vpop.permute.xlu0 %104
    %vm106 = vcmask 343328
    %107 = vst.msk [vmem:[#allocation0] sm:$0x1] %vm106, %v105
    %s108 = scalar_lea.vmem %s0, 27
    %v109 = vld [vmem:[%s108] sm:$0x1]
    %110 = vrot.lane.b32.xlu0 %v109, 34
    %v111 = vpop.permute.xlu0 %110
    %vm112 = vcmask 326928
    %s113 = scalar_lea.vmem [#allocation0], 8
    %114 = vst.msk [vmem:[%s113] sm:$0x1] %vm112, %v111
    %s115 = scalar_lea.vmem %s0, 5
    %v116 = vld [vmem:[%s115] sm:$0x1]
    %117 = vrot.lane.b32.xlu0 %v116, 30
    %v118 = vpop.permute.xlu0 %117
    %vm119 = vcmask 294128
    %120 = vst.msk [vmem:[#allocation0] sm:$0x1] %vm119, %v118
    %s121 = scalar_lea.vmem %s0, 26
    %v122 = vld [vmem:[%s121] sm:$0x1]
    %123 = vrot.lane.b32.xlu0 %v122, 28
    %v124 = vpop.permute.xlu0 %123
    %vm125 = vcmask 277728
    %s126 = scalar_lea.vmem [#allocation0], 8
    %127 = vst.msk [vmem:[%s126] sm:$0x1] %vm125, %v124
    %s128 = scalar_lea.vmem %s0, 4
    %v129 = vld [vmem:[%s128] sm:$0x1]
    %130 = vrot.lane.b32.xlu0 %v129, 24
    %v131 = vpop.permute.xlu0 %130
    %vm132 = vcmask 244928
    %133 = vst.msk [vmem:[#allocation0] sm:$0x1] %vm132, %v131
    %s134 = scalar_lea.vmem %s0, 25
    %v135 = vld [vmem:[%s134] sm:$0x1]
    %136 = vrot.lane.b32.xlu0 %v135, 22
    %v137 = vpop.permute.xlu0 %136
    %vm138 = vcmask 228528
    %s139 = scalar_lea.vmem [#allocation0], 8
    %140 = vst.msk [vmem:[%s139] sm:$0x1] %vm138, %v137
    %s141 = scalar_lea.vmem %s0, 3
    %v142 = vld [vmem:[%s141] sm:$0x1]
    %143 = vrot.lane.b32.xlu0 %v142, 18
    %v144 = vpop.permute.xlu0 %143
    %vm145 = vcmask 195728
    %146 = vst.msk [vmem:[#allocation0] sm:$0x1] %vm145, %v144
    %s147 = scalar_lea.vmem %s0, 24
    %v148 = vld [vmem:[%s147] sm:$0x1]
    %149 = vrot.lane.b32.xlu0 %v148, 16
    %v150 = vpop.permute.xlu0 %149
    %vm151 = vcmask 179328
    %s152 = scalar_lea.vmem [#allocation0], 8
    %153 = vst.msk [vmem:[%s152] sm:$0x1] %vm151, %v150
    %s154 = scalar_lea.vmem %s0, 2
    %v155 = vld [vmem:[%s154] sm:$0x1]
    %156 = vrot.lane.b32.xlu0 %v155, 12
    %v157 = vpop.permute.xlu0 %156
    %vm158 = vcmask 146528
    %159 = vst.msk [vmem:[#allocation0] sm:$0x1] %vm158, %v157
    %s160 = scalar_lea.vmem %s0, 23
    %v161 = vld [vmem:[%s160] sm:$0x1]
    %162 = vrot.lane.b32.xlu0 %v161, 10
    %v163 = vpop.permute.xlu0 %162
    %vm164 = vcmask 130128
    %s165 = scalar_lea.vmem [#allocation0], 8
    %166 = vst.msk [vmem:[%s165] sm:$0x1] %vm164, %v163
    %s167 = scalar_lea.vmem %s0, 1
    %v168 = vld [vmem:[%s167] sm:$0x1]
    %169 = vrot.lane.b32.xlu0 %v168, 6
    %v170 = vpop.permute.xlu0 %169
    %vm171 = vcmask 97328
    %172 = vst.msk [vmem:[#allocation0] sm:$0x1] %vm171, %v170
    %s173 = scalar_lea.vmem %s0, 22
    %v174 = vld [vmem:[%s173] sm:$0x1]
    %175 = vrot.lane.b32.xlu0 %v174, 4
    %v176 = vpop.permute.xlu0 %175
    %vm177 = vcmask 80928
    %s178 = scalar_lea.vmem [#allocation0], 8
    %179 = vst.msk [vmem:[%s178] sm:$0x1] %vm177, %v176
    %s181 = sshll.u32 1, 1
    %s182 = ssub.s32 %s181, 1
    %v184 = vld [vmem:[#allocation0] sm:%s182]
    %s185 = sshll.u32 1, 1
    %s186 = ssub.s32 %s185, 1
    %187 = vst [vmem:[%s1] sm:%s186] %v184
    %s188 = scalar_lea.vmem [#allocation0], 8
    %v189 = vld [vmem:[%s188] sm:%s182]
    %s190 = sshll.u32 1, 1
    %s191 = ssub.s32 %s190, 1
    %s192 = scalar_lea.vmem %s1, 1
    %193 = vst [vmem:[%s192] sm:%s191] %v189

// kernel: tile.18
$region0: #{tile.18}
  #allocation0 [shape = 's32[1]{0}', space=sflag, size = 0x4, scoped, tag = 'scoped memory for tile.18']
  %s0 = inlined_call_operand.vmem [shape: f32[16], index: 0, kind: input, shape index: {}]
  %s1 = inlined_call_operand.vmem [shape: f32[10,16], index: 1, kind: output, shape index: {}]
  // Predicated region
  $region2: #{tile.18} parent=0 // pred_check
    _
  $region3: #{tile.18} parent=0 // pred_check_branch
    %3 = sbr.rel (0) target = $region5
  $region4: #{tile.18} parent=0 // pred_region
    _
  $region5: #{tile.18} parent=0 // pred_fallthru
    _
  %v4 = vld [vmem:[%s0] ss:$0 sm:$0xff]
  %5 = vst [vmem:[%s1] sm:$0xff] %v4
  %s6 = scalar_lea.vmem %s1, 8
  %7 = vst [vmem:[%s6] sm:$0xff] %v4

// kernel: tile.19
$region0: #{tile.19}
  %s0 = inlined_call_operand.vmem [shape: f32[10,16], index: 0, kind: input, shape index: {}]
  %s1 = inlined_call_operand.vmem [shape: f32[1,160], index: 1, kind: output, shape index: {}]
  $region1: #{tile.19} parent=0
    #allocation0 [shape = 'u8[8192]{0}', space=vmem, size = 0x2000, scoped, tag = 'scoped mem for output reshape']
    %s2 = smov 3
    %v3 = vld [vmem:[%s0] ss:$8 sm:%s2]
    %vm4 = vcmask 130048
    %5 = vst.msk [vmem:[#allocation0] ss:$8 sm:$0x3] %vm4, %v3
    %s6 = scalar_lea.vmem %s0, 7
    %v7 = vld [vmem:[%s6] sm:$0x1]
    %8 = vrot.lane.b32.xlu0 %v7, 112
    %v9 = vpop.permute.xlu0 %8
    %vm10 = vcmask 1048448
    %11 = vst.msk [vmem:[#allocation0] sm:$0x1] %vm10, %v9
    %s12 = scalar_lea.vmem %s0, 6
    %v13 = vld [vmem:[%s12] sm:$0x1]
    %14 = vrot.lane.b32.xlu0 %v13, 96
    %v15 = vpop.permute.xlu0 %14
    %vm16 = vcmask 917248
    %17 = vst.msk [vmem:[#allocation0] sm:$0x1] %vm16, %v15
    %s18 = scalar_lea.vmem %s0, 5
    %v19 = vld [vmem:[%s18] sm:$0x1]
    %20 = vrot.lane.b32.xlu0 %v19, 80
    %v21 = vpop.permute.xlu0 %20
    %vm22 = vcmask 786048
    %23 = vst.msk [vmem:[#allocation0] sm:$0x1] %vm22, %v21
    %s24 = scalar_lea.vmem %s0, 4
    %v25 = vld [vmem:[%s24] sm:$0x1]
    %26 = vrot.lane.b32.xlu0 %v25, 64
    %v27 = vpop.permute.xlu0 %26
    %vm28 = vcmask 654848
    %29 = vst.msk [vmem:[#allocation0] sm:$0x1] %vm28, %v27
    %s30 = scalar_lea.vmem %s0, 3
    %v31 = vld [vmem:[%s30] sm:$0x1]
    %32 = vrot.lane.b32.xlu0 %v31, 48
    %v33 = vpop.permute.xlu0 %32
    %vm34 = vcmask 523648
    %35 = vst.msk [vmem:[#allocation0] sm:$0x1] %vm34, %v33
    %s36 = scalar_lea.vmem %s0, 2
    %v37 = vld [vmem:[%s36] sm:$0x1]
    %38 = vrot.lane.b32.xlu0 %v37, 32
    %v39 = vpop.permute.xlu0 %38
    %vm40 = vcmask 392448
    %41 = vst.msk [vmem:[#allocation0] sm:$0x1] %vm40, %v39
    %s42 = scalar_lea.vmem %s0, 1
    %s43 = smov 3
    %v44 = vld [vmem:[%s42] ss:$8 sm:%s43]
    %45 = vrot.lane.b32.xlu0 %v44, 16
    %v46 = vpop.permute.xlu0 %45
    %vm47 = vcmask 261248
    %48 = vst.msk [vmem:[#allocation0] ss:$8 sm:$0x3] %vm47, %v46
    %s50 = sshll.u32 1, 1
    %s51 = ssub.s32 %s50, 1
    %v53 = vld [vmem:[#allocation0] sm:%s51]
    %s54 = sshll.u32 1, 1
    %s55 = ssub.s32 %s54, 1
    %56 = vst [vmem:[%s1] sm:%s55] %v53
    %s57 = scalar_lea.vmem [#allocation0], 8
    %v58 = vld [vmem:[%s57] sm:%s51]
    %s59 = sshll.u32 1, 1
    %s60 = ssub.s32 %s59, 1
    %s61 = scalar_lea.vmem %s1, 1
    %62 = vst [vmem:[%s61] sm:%s60] %v58

// kernel: lenet5_forward.1
$region0: #{lenet5_forward.1}
  #allocation0 [shape = 'u32[]', space=smem, size = 0x4, offset = 0x4, fixed_abs, tag = 'smem constant byte address 0x4 - core index']
  #allocation1 [shape = 'u32[144,128]{1,0:T(1,128)}', space=vmem, size = 0x12000, scoped, tag = 'internal scratch']
  #allocation2 [shape = 'f32[256,84]{1,0:T(8,128)}', space=vmem, size = 0x20000, scoped, tag = 'scratch operand']
  #allocation3 [shape = 'f32[136,84]{1,0:T(8,128)}', space=vmem, size = 0x11000, scoped, tag = 'scratch operand']
  #allocation4 [shape = 'f32[128,80]{1,0:T(8,128)}', space=vmem, size = 0x10000, scoped, tag = 'scratch operand']
  %s0 = inlined_call_operand.vmem [shape: bf16[256,160], index: 0, kind: input, shape index: {}]
  %s1 = inlined_call_operand.vmem [shape: bf16[160,168], index: 1, kind: input, shape index: {}]
  %s2 = inlined_call_operand.vmem [shape: f32[1,168], index: 2, kind: input, shape index: {}]
  %s3 = inlined_call_operand.vmem [shape: bf16[168,84], index: 3, kind: input, shape index: {}]
  %s4 = inlined_call_operand.vmem [shape: bf16[5,84,160], index: 4, kind: input, shape index: {}]
  %s5 = inlined_call_operand.vmem [shape: f32[1,160], index: 5, kind: input, shape index: {}]
  %s6 = inlined_call_operand.vmem [shape: bf16[160,80], index: 6, kind: input, shape index: {}]
  %s7 = inlined_call_operand.vmem [shape: bf16[5,80,120], index: 7, kind: input, shape index: {}]
  %s8 = inlined_call_operand.vmem [shape: f32[1,120], index: 8, kind: input, shape index: {}]
  %s9 = inlined_call_operand.vmem [shape: bf16[120,84], index: 9, kind: input, shape index: {}]
  %s10 = inlined_call_operand.vmem [shape: f32[1,84], index: 10, kind: input, shape index: {}]
  %s11 = inlined_call_operand.vmem [shape: bf16[84,128], index: 11, kind: input, shape index: {}]
  %s12 = inlined_call_operand.vmem [shape: f32[1,128], index: 12, kind: input, shape index: {}]
  %s13 = inlined_call_operand.vmem [shape: f32[8,128], index: 13, kind: output, shape index: {}]
  %s14 = sld [smem:[#allocation0]]
  $region62: #{lenet5_forward.1} parent=0
    _
  %s16 = ssub.s32 1, %s14
  %s17 = scalar_select 0, %s16, %s14
  // Predicated region
  $region2: #{lenet5_forward.1} parent=0 // pred_check
    _
  $region3: #{lenet5_forward.1} parent=0 // pred_check_branch
    %19 = sbr.rel (0) target = $region5
  $region4: #{lenet5_forward.1} parent=0 // pred_region
    _
  $region5: #{lenet5_forward.1} parent=0 // pred_fallthru
    _
  // Predicated region
  $region6: #{lenet5_forward.1} parent=0 // pred_check
    _
  $region7: #{lenet5_forward.1} parent=0 // pred_check_branch
    %21 = sbr.rel (0) target = $region9
  $region8: #{lenet5_forward.1} parent=0 // pred_region
    _
  $region9: #{lenet5_forward.1} parent=0 // pred_fallthru
    _
  // Predicated region
  $region10: #{lenet5_forward.1} parent=0 // pred_check
    _
  $region11: #{lenet5_forward.1} parent=0 // pred_check_branch
    %23 = sbr.rel (0) target = $region13
  $region12: #{lenet5_forward.1} parent=0 // pred_region
    _
  $region13: #{lenet5_forward.1} parent=0 // pred_fallthru
    _
  // Predicated region
  $region14: #{lenet5_forward.1} parent=0 // pred_check
    _
  $region15: #{lenet5_forward.1} parent=0 // pred_check_branch
    %25 = sbr.rel (0) target = $region17
  $region16: #{lenet5_forward.1} parent=0 // pred_region
    _
  $region17: #{lenet5_forward.1} parent=0 // pred_fallthru
    _
  // Predicated region
  $region18: #{lenet5_forward.1} parent=0 // pred_check
    _
  $region19: #{lenet5_forward.1} parent=0 // pred_check_branch
    %27 = sbr.rel (0) target = $region21
  $region20: #{lenet5_forward.1} parent=0 // pred_region
    _
  $region21: #{lenet5_forward.1} parent=0 // pred_fallthru
    _
  // Predicated region
  $region22: #{lenet5_forward.1} parent=0 // pred_check
    _
  $region23: #{lenet5_forward.1} parent=0 // pred_check_branch
    %29 = sbr.rel (0) target = $region25
  $region24: #{lenet5_forward.1} parent=0 // pred_region
    _
  $region25: #{lenet5_forward.1} parent=0 // pred_fallthru
    _
  // Predicated region
  $region26: #{lenet5_forward.1} parent=0 // pred_check
    _
  $region27: #{lenet5_forward.1} parent=0 // pred_check_branch
    %31 = sbr.rel (0) target = $region29
  $region28: #{lenet5_forward.1} parent=0 // pred_region
    _
  $region29: #{lenet5_forward.1} parent=0 // pred_fallthru
    _
  // Predicated region
  $region30: #{lenet5_forward.1} parent=0 // pred_check
    _
  $region31: #{lenet5_forward.1} parent=0 // pred_check_branch
    %33 = sbr.rel (0) target = $region33
  $region32: #{lenet5_forward.1} parent=0 // pred_region
    _
  $region33: #{lenet5_forward.1} parent=0 // pred_fallthru
    _
  // Predicated region
  $region34: #{lenet5_forward.1} parent=0 // pred_check
    _
  $region35: #{lenet5_forward.1} parent=0 // pred_check_branch
    %35 = sbr.rel (0) target = $region37
  $region36: #{lenet5_forward.1} parent=0 // pred_region
    _
  $region37: #{lenet5_forward.1} parent=0 // pred_fallthru
    _
  // Predicated region
  $region38: #{lenet5_forward.1} parent=0 // pred_check
    _
  $region39: #{lenet5_forward.1} parent=0 // pred_check_branch
    %37 = sbr.rel (0) target = $region41
  $region40: #{lenet5_forward.1} parent=0 // pred_region
    _
  $region41: #{lenet5_forward.1} parent=0 // pred_fallthru
    _
  // Predicated region
  $region42: #{lenet5_forward.1} parent=0 // pred_check
    _
  $region43: #{lenet5_forward.1} parent=0 // pred_check_branch
    %39 = sbr.rel (0) target = $region45
  $region44: #{lenet5_forward.1} parent=0 // pred_region
    _
  $region45: #{lenet5_forward.1} parent=0 // pred_fallthru
    _
  // Predicated region
  $region46: #{lenet5_forward.1} parent=0 // pred_check
    _
  $region47: #{lenet5_forward.1} parent=0 // pred_check_branch
    %41 = sbr.rel (0) target = $region49
  $region48: #{lenet5_forward.1} parent=0 // pred_region
    _
  $region49: #{lenet5_forward.1} parent=0 // pred_fallthru
    _
  // Predicated region
  $region50: #{lenet5_forward.1} parent=0 // pred_check
    _
  $region51: #{lenet5_forward.1} parent=0 // pred_check_branch
    %43 = sbr.rel (0) target = $region53
  $region52: #{lenet5_forward.1} parent=0 // pred_region
    _
  $region53: #{lenet5_forward.1} parent=0 // pred_fallthru
    _
  %v45 = vld [vmem:[%s0] sm:$0xff]
  %v46 = vld [vmem:[%s0 + $0x8] sm:$0xff]
  %v47 = vld [vmem:[%s0 + $0x10] sm:$0xff]
  %v48 = vld [vmem:[%s0 + $0x18] sm:$0xff]
  %v49 = vld [vmem:[%s0 + $0x20] sm:$0xff]
  %v50 = vld [vmem:[%s0 + $0x28] sm:$0xff]
  %v51 = vld [vmem:[%s0 + $0x30] sm:$0xff]
  %v52 = vld [vmem:[%s0 + $0x38] sm:$0xff]
  %v53 = vld [vmem:[%s0 + $0x40] sm:$0xff]
  %v54 = vld [vmem:[%s0 + $0x48] sm:$0xff]
  %v55 = vld [vmem:[%s0 + $0x50] sm:$0xff]
  %v56 = vld [vmem:[%s0 + $0x58] sm:$0xff]
  %v57 = vld [vmem:[%s0 + $0x60] sm:$0xff]
  %v58 = vld [vmem:[%s0 + $0x68] sm:$0xff]
  %v59 = vld [vmem:[%s0 + $0x70] sm:$0xff]
  %v60 = vld [vmem:[%s0 + $0x78] sm:$0xff]
  %v61 = vld [vmem:[%s0 + $0x80] sm:$0xff]
  %v62 = vld [vmem:[%s0 + $0x88] sm:$0xff]
  %v63 = vld [vmem:[%s0 + $0x90] sm:$0xff]
  %v64 = vld [vmem:[%s0 + $0x98] sm:$0xff]
  %v65 = vld [vmem:[%s0 + $0xa0] sm:$0xff]
  %v66 = vld [vmem:[%s0 + $0xa8] sm:$0xff]
  %v67 = vld [vmem:[%s0 + $0xb0] sm:$0xff]
  %v68 = vld [vmem:[%s0 + $0xb8] sm:$0xff]
  %v69 = vld [vmem:[%s0 + $0xc0] sm:$0xff]
  %v70 = vld [vmem:[%s0 + $0xc8] sm:$0xff]
  %v71 = vld [vmem:[%s0 + $0xd0] sm:$0xff]
  %v72 = vld [vmem:[%s0 + $0xd8] sm:$0xff]
  %v73 = vld [vmem:[%s0 + $0xe0] sm:$0xff]
  %v74 = vld [vmem:[%s0 + $0xe8] sm:$0xff]
  %v75 = vld [vmem:[%s0 + $0xf0] sm:$0xff]
  %v76 = vld [vmem:[%s0 + $0xf8] sm:$0xff]
  %v77 = vld [vmem:[%s1] sm:$0xff]
  %v78 = vld [vmem:[%s1 + $0x8] sm:$0xff]
  %v79 = vld [vmem:[%s1 + $0x10] sm:$0xff]
  %v80 = vld [vmem:[%s1 + $0x18] sm:$0xff]
  %v81 = vld [vmem:[%s1 + $0x20] sm:$0xff]
  %v82 = vld [vmem:[%s1 + $0x28] sm:$0xff]
  %v83 = vld [vmem:[%s1 + $0x30] sm:$0xff]
  %v84 = vld [vmem:[%s1 + $0x38] sm:$0xff]
  %v85 = vld [vmem:[%s1 + $0x40] sm:$0xff]
  %v86 = vld [vmem:[%s1 + $0x48] sm:$0xff]
  %v87 = vld [vmem:[%s1 + $0x50] sm:$0xff]
  %v88 = vld [vmem:[%s1 + $0x58] sm:$0xff]
  %v89 = vld [vmem:[%s1 + $0x60] sm:$0xff]
  %v90 = vld [vmem:[%s1 + $0x68] sm:$0xff]
  %v91 = vld [vmem:[%s1 + $0x70] sm:$0xff]
  %v92 = vld [vmem:[%s1 + $0x78] sm:$0xff]
  %v93 = vld [vmem:[%s1 + $0x80] sm:$0xff]
  %v94 = vld [vmem:[%s1 + $0x88] sm:$0xff]
  %v95 = vld [vmem:[%s1 + $0x90] sm:$0xff]
  %v96 = vld [vmem:[%s1 + $0x98] sm:$0xff]
  %v97 = vld [vmem:[%s2] sm:$0x3]
  %v99 = vlaneseq
  %v100 = vshrl.u32 %v99, 7
  %v101 = vsub.s32 0, %v100
  %v102 = vrot.slane %v97, %v101
  %v103 = vlaneseq
  %v104 = vshrl.u32 %v103, 7
  %v105 = vsub.s32 1, %v104
  %v106 = vrot.slane %v97, %v105
  %v141 = vunpack.c.l.b16 %v45
  %v142 = vunpack.c.h.b16 %v45
  %v143 = vunpack.c.l.b16 %v46
  %v144 = vunpack.c.h.b16 %v46
  %v145 = vunpack.c.l.b16 %v47
  %v146 = vunpack.c.h.b16 %v47
  %v147 = vunpack.c.l.b16 %v48
  %v148 = vunpack.c.h.b16 %v48
  %v149 = vunpack.c.l.b16 %v49
  %v150 = vunpack.c.h.b16 %v49
  %v151 = vunpack.c.l.b16 %v50
  %v152 = vunpack.c.h.b16 %v50
  %v153 = vunpack.c.l.b16 %v51
  %v154 = vunpack.c.h.b16 %v51
  %v155 = vunpack.c.l.b16 %v52
  %v156 = vunpack.c.h.b16 %v52
  %v157 = vunpack.c.l.b16 %v53
  %v158 = vunpack.c.h.b16 %v53
  %v159 = vunpack.c.l.b16 %v54
  %v160 = vunpack.c.h.b16 %v54
  %v161 = vunpack.c.l.b16 %v55
  %v162 = vunpack.c.h.b16 %v55
  %v163 = vunpack.c.l.b16 %v56
  %v164 = vunpack.c.h.b16 %v56
  %v165 = vunpack.c.l.b16 %v57
  %v166 = vunpack.c.h.b16 %v57
  %v167 = vunpack.c.l.b16 %v58
  %v168 = vunpack.c.h.b16 %v58
  %v169 = vunpack.c.l.b16 %v59
  %v170 = vunpack.c.h.b16 %v59
  %v171 = vunpack.c.l.b16 %v60
  %v172 = vunpack.c.h.b16 %v60
  %v173 = vunpack.c.l.b16 %v61
  %v174 = vunpack.c.h.b16 %v61
  %v175 = vunpack.c.l.b16 %v62
  %v176 = vunpack.c.h.b16 %v62
  %v177 = vunpack.c.l.b16 %v63
  %v178 = vunpack.c.h.b16 %v63
  %v179 = vunpack.c.l.b16 %v64
  %v180 = vunpack.c.h.b16 %v64
  %v181 = vunpack.c.l.b16 %v65
  %v182 = vunpack.c.h.b16 %v65
  %v183 = vunpack.c.l.b16 %v66
  %v184 = vunpack.c.h.b16 %v66
  %v185 = vunpack.c.l.b16 %v67
  %v186 = vunpack.c.h.b16 %v67
  %v187 = vunpack.c.l.b16 %v68
  %v188 = vunpack.c.h.b16 %v68
  %v189 = vunpack.c.l.b16 %v69
  %v190 = vunpack.c.h.b16 %v69
  %v191 = vunpack.c.l.b16 %v70
  %v192 = vunpack.c.h.b16 %v70
  %v193 = vunpack.c.l.b16 %v71
  %v194 = vunpack.c.h.b16 %v71
  %v195 = vunpack.c.l.b16 %v72
  %v196 = vunpack.c.h.b16 %v72
  %v197 = vunpack.c.l.b16 %v73
  %v198 = vunpack.c.h.b16 %v73
  %v199 = vunpack.c.l.b16 %v74
  %v200 = vunpack.c.h.b16 %v74
  %v201 = vunpack.c.l.b16 %v75
  %v202 = vunpack.c.h.b16 %v75
  %v203 = vunpack.c.l.b16 %v76
  %v204 = vunpack.c.h.b16 %v76
  %v205 = vpack.c.b16 %v143, %v141
  %v206 = vpack.c.b16 %v144, %v142
  %v207 = vpack.c.b16 %v147, %v145
  %v208 = vpack.c.b16 %v148, %v146
  %v209 = vpack.c.b16 %v151, %v149
  %v210 = vpack.c.b16 %v152, %v150
  %v211 = vpack.c.b16 %v155, %v153
  %v212 = vpack.c.b16 %v156, %v154
  %v213 = vpack.c.b16 %v159, %v157
  %v214 = vpack.c.b16 %v160, %v158
  %v215 = vpack.c.b16 %v163, %v161
  %v216 = vpack.c.b16 %v164, %v162
  %v217 = vpack.c.b16 %v167, %v165
  %v218 = vpack.c.b16 %v168, %v166
  %v219 = vpack.c.b16 %v171, %v169
  %v220 = vpack.c.b16 %v172, %v170
  %v221 = vpack.c.b16 %v175, %v173
  %v222 = vpack.c.b16 %v176, %v174
  %v223 = vpack.c.b16 %v179, %v177
  %v224 = vpack.c.b16 %v180, %v178
  %v225 = vpack.c.b16 %v183, %v181
  %v226 = vpack.c.b16 %v184, %v182
  %v227 = vpack.c.b16 %v187, %v185
  %v228 = vpack.c.b16 %v188, %v186
  %v229 = vpack.c.b16 %v191, %v189
  %v230 = vpack.c.b16 %v192, %v190
  %v231 = vpack.c.b16 %v195, %v193
  %v232 = vpack.c.b16 %v196, %v194
  %v233 = vpack.c.b16 %v199, %v197
  %v234 = vpack.c.b16 %v200, %v198
  %v235 = vpack.c.b16 %v203, %v201
  %v236 = vpack.c.b16 %v204, %v202
  %v273 = vunpack.c.l.b16 %v77
  %v274 = vunpack.c.h.b16 %v77
  %v275 = vunpack.c.l.b16 %v78
  %v276 = vunpack.c.h.b16 %v78
  %v277 = vunpack.c.l.b16 %v79
  %v278 = vunpack.c.h.b16 %v79
  %v279 = vunpack.c.l.b16 %v80
  %v280 = vunpack.c.h.b16 %v80
  %v281 = vunpack.c.l.b16 %v81
  %v282 = vunpack.c.h.b16 %v81
  %v283 = vunpack.c.l.b16 %v82
  %v284 = vunpack.c.h.b16 %v82
  %v285 = vunpack.c.l.b16 %v83
  %v286 = vunpack.c.h.b16 %v83
  %v287 = vunpack.c.l.b16 %v84
  %v288 = vunpack.c.h.b16 %v84
  %v289 = vunpack.c.l.b16 %v85
  %v290 = vunpack.c.h.b16 %v85
  %v291 = vunpack.c.l.b16 %v86
  %v292 = vunpack.c.h.b16 %v86
  %v293 = vunpack.c.l.b16 %v87
  %v294 = vunpack.c.h.b16 %v87
  %v295 = vunpack.c.l.b16 %v88
  %v296 = vunpack.c.h.b16 %v88
  %v297 = vunpack.c.l.b16 %v89
  %v298 = vunpack.c.h.b16 %v89
  %v299 = vunpack.c.l.b16 %v90
  %v300 = vunpack.c.h.b16 %v90
  %v301 = vunpack.c.l.b16 %v91
  %v302 = vunpack.c.h.b16 %v91
  %v303 = vunpack.c.l.b16 %v92
  %v304 = vunpack.c.h.b16 %v92
  %v305 = vunpack.c.l.b16 %v93
  %v306 = vunpack.c.h.b16 %v93
  %v307 = vunpack.c.l.b16 %v94
  %v308 = vunpack.c.h.b16 %v94
  %v309 = vunpack.c.l.b16 %v95
  %v310 = vunpack.c.h.b16 %v95
  %v311 = vunpack.c.l.b16 %v96
  %v312 = vunpack.c.h.b16 %v96
  %v313 = vpack.c.b16 %v275, %v273
  %v314 = vpack.c.b16 %v276, %v274
  %v315 = vpack.c.b16 %v279, %v277
  %v316 = vpack.c.b16 %v280, %v278
  %v317 = vpack.c.b16 %v283, %v281
  %v318 = vpack.c.b16 %v284, %v282
  %v319 = vpack.c.b16 %v287, %v285
  %v320 = vpack.c.b16 %v288, %v286
  %v321 = vpack.c.b16 %v291, %v289
  %v322 = vpack.c.b16 %v292, %v290
  %v323 = vpack.c.b16 %v295, %v293
  %v324 = vpack.c.b16 %v296, %v294
  %v325 = vpack.c.b16 %v299, %v297
  %v326 = vpack.c.b16 %v300, %v298
  %v327 = vpack.c.b16 %v303, %v301
  %v328 = vpack.c.b16 %v304, %v302
  %v329 = vpack.c.b16 %v307, %v305
  %v330 = vpack.c.b16 %v308, %v306
  %v331 = vpack.c.b16 %v311, %v309
  %v332 = vpack.c.b16 %v312, %v310
  %vm353 = vcmask 261120
  %v355 = vsel %vm353, %v206, 0
  %v358 = vsel %vm353, %v208, 0
  %v361 = vsel %vm353, %v210, 0
  %v364 = vsel %vm353, %v212, 0
  %v367 = vsel %vm353, %v214, 0
  %v370 = vsel %vm353, %v216, 0
  %v373 = vsel %vm353, %v218, 0
  %v376 = vsel %vm353, %v220, 0
  %v379 = vsel %vm353, %v222, 0
  %v382 = vsel %vm353, %v224, 0
  %v385 = vsel %vm353, %v226, 0
  %v388 = vsel %vm353, %v228, 0
  %v391 = vsel %vm353, %v230, 0
  %v394 = vsel %vm353, %v232, 0
  %v397 = vsel %vm353, %v234, 0
  %v400 = vsel %vm353, %v236, 0
  %402 = vmatprep.subr.bf16.mxu0 %v328
  %403 = vmatpush1.bf16.msra.mxu0 %v327
  %404 = vmatprep.subr.bf16.mxu0 %v326
  %405 = vmatpush1.bf16.msra.mxu0 %v325
  %406 = vmatprep.subr.bf16.mxu0 %v324
  %407 = vmatpush1.bf16.msra.mxu0 %v323
  %408 = vmatprep.subr.bf16.mxu0 %v322
  %409 = vmatpush1.bf16.msra.mxu0 %v321
  %410 = vmatprep.subr.bf16.mxu0 %v320
  %411 = vmatpush1.bf16.msra.mxu0 %v319
  %412 = vmatprep.subr.bf16.mxu0 %v318
  %413 = vmatpush1.bf16.msra.mxu0 %v317
  %414 = vmatprep.subr.bf16.mxu0 %v316
  %415 = vmatpush1.bf16.msra.mxu0 %v315
  %416 = vmatprep.subr.bf16.mxu0 %v314
  %417 = vmatpush1.bf16.msra.mxu0 %v313
  %418 = vmatprep.subr.bf16.mxu0 0
  %419 = vmatpush2.bf16.msra.mxu0 0
  %420 = vmatprep.subr.bf16.mxu0 0
  %421 = vmatpush2.bf16.msra.mxu0 0
  %422 = vmatprep.subr.bf16.mxu0 0
  %423 = vmatpush2.bf16.msra.mxu0 0
  %424 = vmatprep.subr.bf16.mxu0 0
  %425 = vmatpush2.bf16.msra.mxu0 0
  %426 = vmatprep.subr.bf16.mxu0 0
  %427 = vmatpush2.bf16.msra.mxu0 0
  %428 = vmatprep.subr.bf16.mxu0 0
  %429 = vmatpush2.bf16.msra.mxu0 0
  %430 = vmatprep.subr.bf16.mxu0 %v332
  %431 = vmatpush2.bf16.msra.mxu0 %v331
  %432 = vmatprep.subr.bf16.mxu0 %v330
  %433 = vmatpush2.bf16.msra.mxu0 %v329
  %434 = vmatprep.mubr.bf16.mxu0 %v355
  %435 = vmatmul.mubr.bf16.gmra.mxu0 %v205
  %v436 = vpop.f32.mrf.mxu0
  %v437 = vadd.f32 %v102, %v436
  %v438 = vpop.f32.mrf.mxu0
  %v439 = vadd.f32 %v106, %v438
  %v440 = vpop.f32.mrf.mxu0
  %v441 = vadd.f32 %v102, %v440
  %v442 = vpop.f32.mrf.mxu0
  %v443 = vadd.f32 %v106, %v442
  %444 = vmatprep.mubr.bf16.mxu0 %v358
  %445 = vmatmul.mubr.bf16.gmra.mxu0 %v207
  %v446 = vpop.f32.mrf.mxu0
  %v447 = vadd.f32 %v102, %v446
  %v448 = vpop.f32.mrf.mxu0
  %v449 = vadd.f32 %v106, %v448
  %v450 = vpop.f32.mrf.mxu0
  %v451 = vadd.f32 %v102, %v450
  %v452 = vpop.f32.mrf.mxu0
  %v453 = vadd.f32 %v106, %v452
  %454 = vmatprep.mubr.bf16.mxu0 %v361
  %455 = vmatmul.mubr.bf16.gmra.mxu0 %v209
  %v456 = vpop.f32.mrf.mxu0
  %v457 = vadd.f32 %v102, %v456
  %v458 = vpop.f32.mrf.mxu0
  %v459 = vadd.f32 %v106, %v458
  %v460 = vpop.f32.mrf.mxu0
  %v461 = vadd.f32 %v102, %v460
  %v462 = vpop.f32.mrf.mxu0
  %v463 = vadd.f32 %v106, %v462
  %464 = vmatprep.mubr.bf16.mxu0 %v364
  %465 = vmatmul.mubr.bf16.gmra.mxu0 %v211
  %v466 = vpop.f32.mrf.mxu0
  %v467 = vadd.f32 %v102, %v466
  %v468 = vpop.f32.mrf.mxu0
  %v469 = vadd.f32 %v106, %v468
  %v470 = vpop.f32.mrf.mxu0
  %v471 = vadd.f32 %v102, %v470
  %v472 = vpop.f32.mrf.mxu0
  %v473 = vadd.f32 %v106, %v472
  %474 = vmatprep.mubr.bf16.mxu0 %v367
  %475 = vmatmul.mubr.bf16.gmra.mxu0 %v213
  %v476 = vpop.f32.mrf.mxu0
  %v477 = vadd.f32 %v102, %v476
  %v478 = vpop.f32.mrf.mxu0
  %v479 = vadd.f32 %v106, %v478
  %v480 = vpop.f32.mrf.mxu0
  %v481 = vadd.f32 %v102, %v480
  %v482 = vpop.f32.mrf.mxu0
  %v483 = vadd.f32 %v106, %v482
  %484 = vmatprep.mubr.bf16.mxu0 %v370
  %485 = vmatmul.mubr.bf16.gmra.mxu0 %v215
  %v486 = vpop.f32.mrf.mxu0
  %v487 = vadd.f32 %v102, %v486
  %v488 = vpop.f32.mrf.mxu0
  %v489 = vadd.f32 %v106, %v488
  %v490 = vpop.f32.mrf.mxu0
  %v491 = vadd.f32 %v102, %v490
  %v492 = vpop.f32.mrf.mxu0
  %v493 = vadd.f32 %v106, %v492
  %494 = vmatprep.mubr.bf16.mxu0 %v373
  %495 = vmatmul.mubr.bf16.gmra.mxu0 %v217
  %v496 = vpop.f32.mrf.mxu0
  %v497 = vadd.f32 %v102, %v496
  %v498 = vpop.f32.mrf.mxu0
  %v499 = vadd.f32 %v106, %v498
  %v500 = vpop.f32.mrf.mxu0
  %v501 = vadd.f32 %v102, %v500
  %v502 = vpop.f32.mrf.mxu0
  %v503 = vadd.f32 %v106, %v502
  %504 = vmatprep.mubr.bf16.mxu0 %v376
  %505 = vmatmul.mubr.bf16.gmra.mxu0 %v219
  %v506 = vpop.f32.mrf.mxu0
  %v507 = vadd.f32 %v102, %v506
  %v508 = vpop.f32.mrf.mxu0
  %v509 = vadd.f32 %v106, %v508
  %v510 = vpop.f32.mrf.mxu0
  %v511 = vadd.f32 %v102, %v510
  %v512 = vpop.f32.mrf.mxu0
  %v513 = vadd.f32 %v106, %v512
  %514 = vmatprep.mubr.bf16.mxu0 %v379
  %515 = vmatmul.mubr.bf16.gmra.mxu0 %v221
  %v516 = vpop.f32.mrf.mxu0
  %v517 = vadd.f32 %v102, %v516
  %v518 = vpop.f32.mrf.mxu0
  %v519 = vadd.f32 %v106, %v518
  %v520 = vpop.f32.mrf.mxu0
  %v521 = vadd.f32 %v102, %v520
  %v522 = vpop.f32.mrf.mxu0
  %v523 = vadd.f32 %v106, %v522
  %524 = vmatprep.mubr.bf16.mxu0 %v382
  %525 = vmatmul.mubr.bf16.gmra.mxu0 %v223
  %v526 = vpop.f32.mrf.mxu0
  %v527 = vadd.f32 %v102, %v526
  %v528 = vpop.f32.mrf.mxu0
  %v529 = vadd.f32 %v106, %v528
  %v530 = vpop.f32.mrf.mxu0
  %v531 = vadd.f32 %v102, %v530
  %v532 = vpop.f32.mrf.mxu0
  %v533 = vadd.f32 %v106, %v532
  %534 = vmatprep.mubr.bf16.mxu0 %v385
  %535 = vmatmul.mubr.bf16.gmra.mxu0 %v225
  %v536 = vpop.f32.mrf.mxu0
  %v537 = vadd.f32 %v102, %v536
  %v538 = vpop.f32.mrf.mxu0
  %v539 = vadd.f32 %v106, %v538
  %v540 = vpop.f32.mrf.mxu0
  %v541 = vadd.f32 %v102, %v540
  %v542 = vpop.f32.mrf.mxu0
  %v543 = vadd.f32 %v106, %v542
  %544 = vmatprep.mubr.bf16.mxu0 %v388
  %545 = vmatmul.mubr.bf16.gmra.mxu0 %v227
  %v546 = vpop.f32.mrf.mxu0
  %v547 = vadd.f32 %v102, %v546
  %v548 = vpop.f32.mrf.mxu0
  %v549 = vadd.f32 %v106, %v548
  %v550 = vpop.f32.mrf.mxu0
  %v551 = vadd.f32 %v102, %v550
  %v552 = vpop.f32.mrf.mxu0
  %v553 = vadd.f32 %v106, %v552
  %554 = vmatprep.mubr.bf16.mxu0 %v391
  %555 = vmatmul.mubr.bf16.gmra.mxu0 %v229
  %v556 = vpop.f32.mrf.mxu0
  %v557 = vadd.f32 %v102, %v556
  %v558 = vpop.f32.mrf.mxu0
  %v559 = vadd.f32 %v106, %v558
  %v560 = vpop.f32.mrf.mxu0
  %v561 = vadd.f32 %v102, %v560
  %v562 = vpop.f32.mrf.mxu0
  %v563 = vadd.f32 %v106, %v562
  %564 = vmatprep.mubr.bf16.mxu0 %v394
  %565 = vmatmul.mubr.bf16.gmra.mxu0 %v231
  %v566 = vpop.f32.mrf.mxu0
  %v567 = vadd.f32 %v102, %v566
  %v568 = vpop.f32.mrf.mxu0
  %v569 = vadd.f32 %v106, %v568
  %v570 = vpop.f32.mrf.mxu0
  %v571 = vadd.f32 %v102, %v570
  %v572 = vpop.f32.mrf.mxu0
  %v573 = vadd.f32 %v106, %v572
  %574 = vmatprep.mubr.bf16.mxu0 %v397
  %575 = vmatmul.mubr.bf16.gmra.mxu0 %v233
  %v576 = vpop.f32.mrf.mxu0
  %v577 = vadd.f32 %v102, %v576
  %v578 = vpop.f32.mrf.mxu0
  %v579 = vadd.f32 %v106, %v578
  %v580 = vpop.f32.mrf.mxu0
  %v581 = vadd.f32 %v102, %v580
  %v582 = vpop.f32.mrf.mxu0
  %v583 = vadd.f32 %v106, %v582
  %584 = vmatprep.mubr.bf16.mxu0 %v400
  %585 = vmatmul.mubr.bf16.gmra.mxu0 %v235
  %v586 = vpop.f32.mrf.mxu0
  %v587 = vadd.f32 %v102, %v586
  %v588 = vpop.f32.mrf.mxu0
  %v589 = vadd.f32 %v106, %v588
  %v590 = vpop.f32.mrf.mxu0
  %v591 = vadd.f32 %v102, %v590
  %v592 = vpop.f32.mrf.mxu0
  %v593 = vadd.f32 %v106, %v592
  %594 = vdwg.mxu0
  %v595 = vtanh.pop %v437
  %v596 = vtanh.pop %v439
  %v597 = vtanh.pop %v441
  %v598 = vtanh.pop %v443
  %v599 = vtanh.pop %v447
  %v600 = vtanh.pop %v449
  %v601 = vtanh.pop %v451
  %v602 = vtanh.pop %v453
  %v603 = vtanh.pop %v457
  %v604 = vtanh.pop %v459
  %v605 = vtanh.pop %v461
  %v606 = vtanh.pop %v463
  %v607 = vtanh.pop %v467
  %v608 = vtanh.pop %v469
  %v609 = vtanh.pop %v471
  %v610 = vtanh.pop %v473
  %v611 = vtanh.pop %v477
  %v612 = vtanh.pop %v479
  %v613 = vtanh.pop %v481
  %v614 = vtanh.pop %v483
  %v615 = vtanh.pop %v487
  %v616 = vtanh.pop %v489
  %v617 = vtanh.pop %v491
  %v618 = vtanh.pop %v493
  %v619 = vtanh.pop %v497
  %v620 = vtanh.pop %v499
  %v621 = vtanh.pop %v501
  %v622 = vtanh.pop %v503
  %v623 = vtanh.pop %v507
  %v624 = vtanh.pop %v509
  %v625 = vtanh.pop %v511
  %v626 = vtanh.pop %v513
  %v627 = vtanh.pop %v517
  %v628 = vtanh.pop %v519
  %v629 = vtanh.pop %v521
  %v630 = vtanh.pop %v523
  %v631 = vtanh.pop %v527
  %v632 = vtanh.pop %v529
  %v633 = vtanh.pop %v531
  %v634 = vtanh.pop %v533
  %v635 = vtanh.pop %v537
  %v636 = vtanh.pop %v539
  %v637 = vtanh.pop %v541
  %v638 = vtanh.pop %v543
  %v639 = vtanh.pop %v547
  %v640 = vtanh.pop %v549
  %v641 = vtanh.pop %v551
  %v642 = vtanh.pop %v553
  %v643 = vtanh.pop %v557
  %v644 = vtanh.pop %v559
  %v645 = vtanh.pop %v561
  %v646 = vtanh.pop %v563
  %v647 = vtanh.pop %v567
  %v648 = vtanh.pop %v569
  %v649 = vtanh.pop %v571
  %v650 = vtanh.pop %v573
  %v651 = vtanh.pop %v577
  %v652 = vtanh.pop %v579
  %v653 = vtanh.pop %v581
  %v654 = vtanh.pop %v583
  %v655 = vtanh.pop %v587
  %v656 = vtanh.pop %v589
  %v657 = vtanh.pop %v591
  %v658 = vtanh.pop %v593
  %v659 = vpack.c.bf16 %v597, %v595
  %v660 = vpack.c.bf16 %v598, %v596
  %v661 = vpack.c.bf16 %v601, %v599
  %v662 = vpack.c.bf16 %v602, %v600
  %v663 = vpack.c.bf16 %v605, %v603
  %v664 = vpack.c.bf16 %v606, %v604
  %v665 = vpack.c.bf16 %v609, %v607
  %v666 = vpack.c.bf16 %v610, %v608
  %v667 = vpack.c.bf16 %v613, %v611
  %v668 = vpack.c.bf16 %v614, %v612
  %v669 = vpack.c.bf16 %v617, %v615
  %v670 = vpack.c.bf16 %v618, %v616
  %v671 = vpack.c.bf16 %v621, %v619
  %v672 = vpack.c.bf16 %v622, %v620
  %v673 = vpack.c.bf16 %v625, %v623
  %v674 = vpack.c.bf16 %v626, %v624
  %v675 = vpack.c.bf16 %v629, %v627
  %v676 = vpack.c.bf16 %v630, %v628
  %v677 = vpack.c.bf16 %v633, %v631
  %v678 = vpack.c.bf16 %v634, %v632
  %v679 = vpack.c.bf16 %v637, %v635
  %v680 = vpack.c.bf16 %v638, %v636
  %v681 = vpack.c.bf16 %v641, %v639
  %v682 = vpack.c.bf16 %v642, %v640
  %v683 = vpack.c.bf16 %v645, %v643
  %v684 = vpack.c.bf16 %v646, %v644
  %v685 = vpack.c.bf16 %v649, %v647
  %v686 = vpack.c.bf16 %v650, %v648
  %v687 = vpack.c.bf16 %v653, %v651
  %v688 = vpack.c.bf16 %v654, %v652
  %v689 = vpack.c.bf16 %v657, %v655
  %v690 = vpack.c.bf16 %v658, %v656
  %v691 = vld [vmem:[%s3] sm:$0xf]
  %v692 = vld [vmem:[%s3 + $0x4] sm:$0xf]
  %v693 = vld [vmem:[%s3 + $0x8] sm:$0xf]
  %v694 = vld [vmem:[%s3 + $0xc] sm:$0xf]
  %v695 = vld [vmem:[%s3 + $0x10] sm:$0xf]
  %v696 = vld [vmem:[%s3 + $0x14] sm:$0xf]
  %v697 = vld [vmem:[%s3 + $0x18] sm:$0xf]
  %v698 = vld [vmem:[%s3 + $0x1c] sm:$0xf]
  %v699 = vld [vmem:[%s3 + $0x20] sm:$0xf]
  %v700 = vld [vmem:[%s3 + $0x24] sm:$0xf]
  %v701 = vld [vmem:[%s3 + $0x28] sm:$0xf]
  %v702 = vld [vmem:[%s3 + $0x2c] sm:$0xf]
  %v703 = vld [vmem:[%s3 + $0x30] sm:$0xf]
  %v704 = vld [vmem:[%s3 + $0x34] sm:$0xf]
  %v705 = vld [vmem:[%s3 + $0x38] sm:$0xf]
  %v706 = vld [vmem:[%s3 + $0x3c] sm:$0xf]
  %v707 = vld [vmem:[%s3 + $0x40] sm:$0xf]
  %v708 = vld [vmem:[%s3 + $0x44] sm:$0xf]
  %v709 = vld [vmem:[%s3 + $0x48] sm:$0xf]
  %v710 = vld [vmem:[%s3 + $0x4c] sm:$0xf]
  %v711 = vld [vmem:[%s3 + $0x50] sm:$0xf]
  %v733 = vunpack.c.l.b16 %v691
  %v734 = vunpack.c.l.b16 %v692
  %v735 = vunpack.c.l.b16 %v693
  %v736 = vunpack.c.l.b16 %v694
  %v737 = vunpack.c.l.b16 %v695
  %v738 = vunpack.c.l.b16 %v696
  %v739 = vunpack.c.l.b16 %v697
  %v740 = vunpack.c.l.b16 %v698
  %v741 = vunpack.c.l.b16 %v699
  %v742 = vunpack.c.l.b16 %v700
  %v743 = vunpack.c.l.b16 %v701
  %v744 = vunpack.c.l.b16 %v702
  %v745 = vunpack.c.l.b16 %v703
  %v746 = vunpack.c.l.b16 %v704
  %v747 = vunpack.c.l.b16 %v705
  %v748 = vunpack.c.l.b16 %v706
  %v749 = vunpack.c.l.b16 %v707
  %v750 = vunpack.c.l.b16 %v708
  %v751 = vunpack.c.l.b16 %v709
  %v752 = vunpack.c.l.b16 %v710
  %v753 = vunpack.c.l.b16 %v711
  %v754 = vpack.c.b16 %v734, %v733
  %v755 = vpack.c.b16 %v736, %v735
  %v756 = vpack.c.b16 %v738, %v737
  %v757 = vpack.c.b16 %v740, %v739
  %v758 = vpack.c.b16 %v742, %v741
  %v759 = vpack.c.b16 %v744, %v743
  %v760 = vpack.c.b16 %v746, %v745
  %v761 = vpack.c.b16 %v748, %v747
  %v762 = vpack.c.b16 %v750, %v749
  %v763 = vpack.c.b16 %v752, %v751
  %v764 = vpack.c.b16 %v753, %v753
  %vm775 = vcmask 326656
  %v777 = vsel %vm775, %v660, 0
  %v780 = vsel %vm775, %v662, 0
  %v783 = vsel %vm775, %v664, 0
  %v786 = vsel %vm775, %v666, 0
  %v789 = vsel %vm775, %v668, 0
  %v792 = vsel %vm775, %v670, 0
  %v795 = vsel %vm775, %v672, 0
  %v798 = vsel %vm775, %v674, 0
  %v801 = vsel %vm775, %v676, 0
  %v804 = vsel %vm775, %v678, 0
  %v807 = vsel %vm775, %v680, 0
  %v810 = vsel %vm775, %v682, 0
  %v813 = vsel %vm775, %v684, 0
  %v816 = vsel %vm775, %v686, 0
  %v819 = vsel %vm775, %v688, 0
  %v822 = vsel %vm775, %v690, 0
  %vm824 = vcmask 1043456
  %v826 = vsel %vm824, %v764, 0
  %828 = vmatprep.subr.bf16.mxu0 0
  %829 = vmatpush1.bf16.msra.mxu0 %v761
  %830 = vmatprep.subr.bf16.mxu0 0
  %831 = vmatpush1.bf16.msra.mxu0 %v760
  %832 = vmatprep.subr.bf16.mxu0 0
  %833 = vmatpush1.bf16.msra.mxu0 %v759
  %834 = vmatprep.subr.bf16.mxu0 0
  %835 = vmatpush1.bf16.msra.mxu0 %v758
  %836 = vmatprep.subr.bf16.mxu0 0
  %837 = vmatpush1.bf16.msra.mxu0 %v757
  %838 = vmatprep.subr.bf16.mxu0 0
  %839 = vmatpush1.bf16.msra.mxu0 %v756
  %840 = vmatprep.subr.bf16.mxu0 0
  %841 = vmatpush1.bf16.msra.mxu0 %v755
  %842 = vmatprep.subr.bf16.mxu0 0
  %843 = vmatpush1.bf16.msra.mxu0 %v754
  %844 = vmatprep.subr.bf16.mxu0 0
  %845 = vmatpush2.bf16.msra.mxu0 0
  %846 = vmatprep.subr.bf16.mxu0 0
  %847 = vmatpush2.bf16.msra.mxu0 0
  %848 = vmatprep.subr.bf16.mxu0 0
  %849 = vmatpush2.bf16.msra.mxu0 0
  %850 = vmatprep.subr.bf16.mxu0 0
  %851 = vmatpush2.bf16.msra.mxu0 0
  %852 = vmatprep.subr.bf16.mxu0 0
  %853 = vmatpush2.bf16.msra.mxu0 0
  %854 = vmatprep.subr.bf16.mxu0 0
  %855 = vmatpush2.bf16.msra.mxu0 %v826
  %856 = vmatprep.subr.bf16.mxu0 0
  %857 = vmatpush2.bf16.msra.mxu0 %v763
  %858 = vmatprep.subr.bf16.mxu0 0
  %859 = vmatpush2.bf16.msra.mxu0 %v762
  %860 = vmatprep.mubr.bf16.mxu0 %v777
  %861 = vmatmul.mubr.bf16.gmra.mxu0 %v659
  %v862 = vpop.f32.mrf.mxu0
  %v863 = vadd.f32 0.0, %v862
  %v864 = vpop.f32.mrf.mxu0
  %v865 = vpop.f32.mrf.mxu0
  %v866 = vadd.f32 0.0, %v865
  %v867 = vpop.f32.mrf.mxu0
  %868 = vmatprep.mubr.bf16.mxu0 %v780
  %869 = vmatmul.mubr.bf16.gmra.mxu0 %v661
  %v870 = vpop.f32.mrf.mxu0
  %v871 = vadd.f32 0.0, %v870
  %v872 = vpop.f32.mrf.mxu0
  %v873 = vpop.f32.mrf.mxu0
  %v874 = vadd.f32 0.0, %v873
  %v875 = vpop.f32.mrf.mxu0
  %876 = vmatprep.mubr.bf16.mxu0 %v783
  %877 = vmatmul.mubr.bf16.gmra.mxu0 %v663
  %v878 = vpop.f32.mrf.mxu0
  %v879 = vadd.f32 0.0, %v878
  %v880 = vpop.f32.mrf.mxu0
  %v881 = vpop.f32.mrf.mxu0
  %v882 = vadd.f32 0.0, %v881
  %v883 = vpop.f32.mrf.mxu0
  %884 = vmatprep.mubr.bf16.mxu0 %v786
  %885 = vmatmul.mubr.bf16.gmra.mxu0 %v665
  %v886 = vpop.f32.mrf.mxu0
  %v887 = vadd.f32 0.0, %v886
  %v888 = vpop.f32.mrf.mxu0
  %v889 = vpop.f32.mrf.mxu0
  %v890 = vadd.f32 0.0, %v889
  %v891 = vpop.f32.mrf.mxu0
  %892 = vmatprep.mubr.bf16.mxu0 %v789
  %893 = vmatmul.mubr.bf16.gmra.mxu0 %v667
  %v894 = vpop.f32.mrf.mxu0
  %v895 = vadd.f32 0.0, %v894
  %v896 = vpop.f32.mrf.mxu0
  %v897 = vpop.f32.mrf.mxu0
  %v898 = vadd.f32 0.0, %v897
  %v899 = vpop.f32.mrf.mxu0
  %900 = vmatprep.mubr.bf16.mxu0 %v792
  %901 = vmatmul.mubr.bf16.gmra.mxu0 %v669
  %v902 = vpop.f32.mrf.mxu0
  %v903 = vadd.f32 0.0, %v902
  %v904 = vpop.f32.mrf.mxu0
  %v905 = vpop.f32.mrf.mxu0
  %v906 = vadd.f32 0.0, %v905
  %v907 = vpop.f32.mrf.mxu0
  %908 = vmatprep.mubr.bf16.mxu0 %v795
  %909 = vmatmul.mubr.bf16.gmra.mxu0 %v671
  %v910 = vpop.f32.mrf.mxu0
  %v911 = vadd.f32 0.0, %v910
  %v912 = vpop.f32.mrf.mxu0
  %v913 = vpop.f32.mrf.mxu0
  %v914 = vadd.f32 0.0, %v913
  %v915 = vpop.f32.mrf.mxu0
  %916 = vmatprep.mubr.bf16.mxu0 %v798
  %917 = vmatmul.mubr.bf16.gmra.mxu0 %v673
  %v918 = vpop.f32.mrf.mxu0
  %v919 = vadd.f32 0.0, %v918
  %v920 = vpop.f32.mrf.mxu0
  %v921 = vpop.f32.mrf.mxu0
  %v922 = vadd.f32 0.0, %v921
  %v923 = vpop.f32.mrf.mxu0
  %924 = vmatprep.mubr.bf16.mxu0 %v801
  %925 = vmatmul.mubr.bf16.gmra.mxu0 %v675
  %v926 = vpop.f32.mrf.mxu0
  %v927 = vadd.f32 0.0, %v926
  %v928 = vpop.f32.mrf.mxu0
  %v929 = vpop.f32.mrf.mxu0
  %v930 = vadd.f32 0.0, %v929
  %v931 = vpop.f32.mrf.mxu0
  %932 = vmatprep.mubr.bf16.mxu0 %v804
  %933 = vmatmul.mubr.bf16.gmra.mxu0 %v677
  %v934 = vpop.f32.mrf.mxu0
  %v935 = vadd.f32 0.0, %v934
  %v936 = vpop.f32.mrf.mxu0
  %v937 = vpop.f32.mrf.mxu0
  %v938 = vadd.f32 0.0, %v937
  %v939 = vpop.f32.mrf.mxu0
  %940 = vmatprep.mubr.bf16.mxu0 %v807
  %941 = vmatmul.mubr.bf16.gmra.mxu0 %v679
  %v942 = vpop.f32.mrf.mxu0
  %v943 = vadd.f32 0.0, %v942
  %v944 = vpop.f32.mrf.mxu0
  %v945 = vpop.f32.mrf.mxu0
  %v946 = vadd.f32 0.0, %v945
  %v947 = vpop.f32.mrf.mxu0
  %948 = vmatprep.mubr.bf16.mxu0 %v810
  %949 = vmatmul.mubr.bf16.gmra.mxu0 %v681
  %v950 = vpop.f32.mrf.mxu0
  %v951 = vadd.f32 0.0, %v950
  %v952 = vpop.f32.mrf.mxu0
  %v953 = vpop.f32.mrf.mxu0
  %v954 = vadd.f32 0.0, %v953
  %v955 = vpop.f32.mrf.mxu0
  %956 = vmatprep.mubr.bf16.mxu0 %v813
  %957 = vmatmul.mubr.bf16.gmra.mxu0 %v683
  %v958 = vpop.f32.mrf.mxu0
  %v959 = vadd.f32 0.0, %v958
  %v960 = vpop.f32.mrf.mxu0
  %v961 = vpop.f32.mrf.mxu0
  %v962 = vadd.f32 0.0, %v961
  %v963 = vpop.f32.mrf.mxu0
  %964 = vmatprep.mubr.bf16.mxu0 %v816
  %965 = vmatmul.mubr.bf16.gmra.mxu0 %v685
  %v966 = vpop.f32.mrf.mxu0
  %v967 = vadd.f32 0.0, %v966
  %v968 = vpop.f32.mrf.mxu0
  %v969 = vpop.f32.mrf.mxu0
  %v970 = vadd.f32 0.0, %v969
  %v971 = vpop.f32.mrf.mxu0
  %972 = vmatprep.mubr.bf16.mxu0 %v819
  %973 = vmatmul.mubr.bf16.gmra.mxu0 %v687
  %v974 = vpop.f32.mrf.mxu0
  %v975 = vadd.f32 0.0, %v974
  %v976 = vpop.f32.mrf.mxu0
  %v977 = vpop.f32.mrf.mxu0
  %v978 = vadd.f32 0.0, %v977
  %v979 = vpop.f32.mrf.mxu0
  %980 = vmatprep.mubr.bf16.mxu0 %v822
  %981 = vmatmul.mubr.bf16.gmra.mxu0 %v689
  %v982 = vpop.f32.mrf.mxu0
  %v983 = vadd.f32 0.0, %v982
  %v984 = vpop.f32.mrf.mxu0
  %v985 = vpop.f32.mrf.mxu0
  %v986 = vadd.f32 0.0, %v985
  %v987 = vpop.f32.mrf.mxu0
  %988 = vdwg.mxu0
  %vm989 = vcmask 687104
  %990 = vst.msk [vmem:[#allocation2] sm:$0xff] %vm989, %v863
  %991 = vst.msk [vmem:[#allocation2 + $0x8] sm:$0xff] %vm989, %v866
  %992 = vst.msk [vmem:[#allocation2 + $0x10] sm:$0xff] %vm989, %v871
  %993 = vst.msk [vmem:[#allocation2 + $0x18] sm:$0xff] %vm989, %v874
  %994 = vst.msk [vmem:[#allocation2 + $0x20] sm:$0xff] %vm989, %v879
  %995 = vst.msk [vmem:[#allocation2 + $0x28] sm:$0xff] %vm989, %v882
  %996 = vst.msk [vmem:[#allocation2 + $0x30] sm:$0xff] %vm989, %v887
  %997 = vst.msk [vmem:[#allocation2 + $0x38] sm:$0xff] %vm989, %v890
  %998 = vst.msk [vmem:[#allocation2 + $0x40] sm:$0xff] %vm989, %v895
  %999 = vst.msk [vmem:[#allocation2 + $0x48] sm:$0xff] %vm989, %v898
  %1000 = vst.msk [vmem:[#allocation2 + $0x50] sm:$0xff] %vm989, %v903
  %1001 = vst.msk [vmem:[#allocation2 + $0x58] sm:$0xff] %vm989, %v906
  %1002 = vst.msk [vmem:[#allocation2 + $0x60] sm:$0xff] %vm989, %v911
  %1003 = vst.msk [vmem:[#allocation2 + $0x68] sm:$0xff] %vm989, %v914
  %1004 = vst.msk [vmem:[#allocation2 + $0x70] sm:$0xff] %vm989, %v919
  %1005 = vst.msk [vmem:[#allocation2 + $0x78] sm:$0xff] %vm989, %v922
  %1006 = vst.msk [vmem:[#allocation2 + $0x80] sm:$0xff] %vm989, %v927
  %1007 = vst.msk [vmem:[#allocation2 + $0x88] sm:$0xff] %vm989, %v930
  %1008 = vst.msk [vmem:[#allocation2 + $0x90] sm:$0xff] %vm989, %v935
  %1009 = vst.msk [vmem:[#allocation2 + $0x98] sm:$0xff] %vm989, %v938
  %1010 = vst.msk [vmem:[#allocation2 + $0xa0] sm:$0xff] %vm989, %v943
  %1011 = vst.msk [vmem:[#allocation2 + $0xa8] sm:$0xff] %vm989, %v946
  %1012 = vst.msk [vmem:[#allocation2 + $0xb0] sm:$0xff] %vm989, %v951
  %1013 = vst.msk [vmem:[#allocation2 + $0xb8] sm:$0xff] %vm989, %v954
  %1014 = vst.msk [vmem:[#allocation2 + $0xc0] sm:$0xff] %vm989, %v959
  %1015 = vst.msk [vmem:[#allocation2 + $0xc8] sm:$0xff] %vm989, %v962
  %1016 = vst.msk [vmem:[#allocation2 + $0xd0] sm:$0xff] %vm989, %v967
  %1017 = vst.msk [vmem:[#allocation2 + $0xd8] sm:$0xff] %vm989, %v970
  %1018 = vst.msk [vmem:[#allocation2 + $0xe0] sm:$0xff] %vm989, %v975
  %1019 = vst.msk [vmem:[#allocation2 + $0xe8] sm:$0xff] %vm989, %v978
  %1020 = vst.msk [vmem:[#allocation2 + $0xf0] sm:$0xff] %vm989, %v983
  %1021 = vst.msk [vmem:[#allocation2 + $0xf8] sm:$0xff] %vm989, %v986
  %v1022 = vld [vmem:[#allocation2] ss:$2 sm:$0xff]
  %s1023 = scalar_lea.vmem [#allocation2], 16
  %v1024 = vld [vmem:[%s1023] ss:$2 sm:$0xff]
  %s1025 = scalar_lea.vmem [#allocation2], 32
  %v1026 = vld [vmem:[%s1025] ss:$2 sm:$0xff]
  %s1027 = scalar_lea.vmem [#allocation2], 48
  %v1028 = vld [vmem:[%s1027] ss:$2 sm:$0xff]
  %s1029 = scalar_lea.vmem [#allocation2], 64
  %v1030 = vld [vmem:[%s1029] ss:$2 sm:$0xff]
  %s1031 = scalar_lea.vmem [#allocation2], 80
  %v1032 = vld [vmem:[%s1031] ss:$2 sm:$0xff]
  %s1033 = scalar_lea.vmem [#allocation2], 96
  %v1034 = vld [vmem:[%s1033] ss:$2 sm:$0xff]
  %s1035 = scalar_lea.vmem [#allocation2], 112
  %v1036 = vld [vmem:[%s1035] ss:$2 sm:$0xff]
  %s1037 = scalar_lea.vmem [#allocation2], 128
  %v1038 = vld [vmem:[%s1037] ss:$2 sm:$0xff]
  %s1039 = scalar_lea.vmem [#allocation2], 144
  %v1040 = vld [vmem:[%s1039] ss:$2 sm:$0xff]
  %s1041 = scalar_lea.vmem [#allocation2], 160
  %v1042 = vld [vmem:[%s1041] ss:$2 sm:$0xff]
  %s1043 = scalar_lea.vmem [#allocation2], 176
  %v1044 = vld [vmem:[%s1043] ss:$2 sm:$0xff]
  %s1045 = scalar_lea.vmem [#allocation2], 192
  %v1046 = vld [vmem:[%s1045] ss:$2 sm:$0xff]
  %s1047 = scalar_lea.vmem [#allocation2], 208
  %v1048 = vld [vmem:[%s1047] ss:$2 sm:$0xff]
  %s1049 = scalar_lea.vmem [#allocation2], 224
  %v1050 = vld [vmem:[%s1049] ss:$2 sm:$0xff]
  %s1051 = scalar_lea.vmem [#allocation2], 240
  %v1052 = vld [vmem:[%s1051] ss:$2 sm:$0xff]
  %s1053 = scalar_lea.vmem [#allocation2], 1
  %v1054 = vld [vmem:[%s1053] ss:$2 sm:$0xff]
  %s1055 = scalar_lea.vmem [#allocation2], 17
  %v1056 = vld [vmem:[%s1055] ss:$2 sm:$0xff]
  %s1057 = scalar_lea.vmem [#allocation2], 33
  %v1058 = vld [vmem:[%s1057] ss:$2 sm:$0xff]
  %s1059 = scalar_lea.vmem [#allocation2], 49
  %v1060 = vld [vmem:[%s1059] ss:$2 sm:$0xff]
  %s1061 = scalar_lea.vmem [#allocation2], 65
  %v1062 = vld [vmem:[%s1061] ss:$2 sm:$0xff]
  %s1063 = scalar_lea.vmem [#allocation2], 81
  %v1064 = vld [vmem:[%s1063] ss:$2 sm:$0xff]
  %s1065 = scalar_lea.vmem [#allocation2], 97
  %v1066 = vld [vmem:[%s1065] ss:$2 sm:$0xff]
  %s1067 = scalar_lea.vmem [#allocation2], 113
  %v1068 = vld [vmem:[%s1067] ss:$2 sm:$0xff]
  %s1069 = scalar_lea.vmem [#allocation2], 129
  %v1070 = vld [vmem:[%s1069] ss:$2 sm:$0xff]
  %s1071 = scalar_lea.vmem [#allocation2], 145
  %v1072 = vld [vmem:[%s1071] ss:$2 sm:$0xff]
  %s1073 = scalar_lea.vmem [#allocation2], 161
  %v1074 = vld [vmem:[%s1073] ss:$2 sm:$0xff]
  %s1075 = scalar_lea.vmem [#allocation2], 177
  %v1076 = vld [vmem:[%s1075] ss:$2 sm:$0xff]
  %s1077 = scalar_lea.vmem [#allocation2], 193
  %v1078 = vld [vmem:[%s1077] ss:$2 sm:$0xff]
  %s1079 = scalar_lea.vmem [#allocation2], 209
  %v1080 = vld [vmem:[%s1079] ss:$2 sm:$0xff]
  %s1081 = scalar_lea.vmem [#allocation2], 225
  %v1082 = vld [vmem:[%s1081] ss:$2 sm:$0xff]
  %s1083 = scalar_lea.vmem [#allocation2], 241
  %v1084 = vld [vmem:[%s1083] ss:$2 sm:$0xff]
  %v1085 = vadd.f32 %v1022, %v1054
  %v1086 = vadd.f32 %v1024, %v1056
  %v1087 = vadd.f32 %v1026, %v1058
  %v1088 = vadd.f32 %v1028, %v1060
  %v1089 = vadd.f32 %v1030, %v1062
  %v1090 = vadd.f32 %v1032, %v1064
  %v1091 = vadd.f32 %v1034, %v1066
  %v1092 = vadd.f32 %v1036, %v1068
  %v1093 = vadd.f32 %v1038, %v1070
  %v1094 = vadd.f32 %v1040, %v1072
  %v1095 = vadd.f32 %v1042, %v1074
  %v1096 = vadd.f32 %v1044, %v1076
  %v1097 = vadd.f32 %v1046, %v1078
  %v1098 = vadd.f32 %v1048, %v1080
  %v1099 = vadd.f32 %v1050, %v1082
  %v1100 = vadd.f32 %v1052, %v1084
  %v1101 = vmul.f32 %v1085, 0.5
  %v1102 = vmul.f32 %v1086, 0.5
  %v1103 = vmul.f32 %v1087, 0.5
  %v1104 = vmul.f32 %v1088, 0.5
  %v1105 = vmul.f32 %v1089, 0.5
  %v1106 = vmul.f32 %v1090, 0.5
  %v1107 = vmul.f32 %v1091, 0.5
  %v1108 = vmul.f32 %v1092, 0.5
  %v1109 = vmul.f32 %v1093, 0.5
  %v1110 = vmul.f32 %v1094, 0.5
  %v1111 = vmul.f32 %v1095, 0.5
  %v1112 = vmul.f32 %v1096, 0.5
  %v1113 = vmul.f32 %v1097, 0.5
  %v1114 = vmul.f32 %v1098, 0.5
  %v1115 = vmul.f32 %v1099, 0.5
  %v1116 = vmul.f32 %v1100, 0.5
  %1117 = vst.msk [vmem:[#allocation3] sm:$0xff] %vm989, %v1101
  %1118 = vst.msk [vmem:[#allocation3 + $0x8] sm:$0xff] %vm989, %v1102
  %1119 = vst.msk [vmem:[#allocation3 + $0x10] sm:$0xff] %vm989, %v1103
  %1120 = vst.msk [vmem:[#allocation3 + $0x18] sm:$0xff] %vm989, %v1104
  %1121 = vst.msk [vmem:[#allocation3 + $0x20] sm:$0xff] %vm989, %v1105
  %1122 = vst.msk [vmem:[#allocation3 + $0x28] sm:$0xff] %vm989, %v1106
  %1123 = vst.msk [vmem:[#allocation3 + $0x30] sm:$0xff] %vm989, %v1107
  %1124 = vst.msk [vmem:[#allocation3 + $0x38] sm:$0xff] %vm989, %v1108
  %1125 = vst.msk [vmem:[#allocation3 + $0x40] sm:$0xff] %vm989, %v1109
  %1126 = vst.msk [vmem:[#allocation3 + $0x48] sm:$0xff] %vm989, %v1110
  %1127 = vst.msk [vmem:[#allocation3 + $0x50] sm:$0xff] %vm989, %v1111
  %1128 = vst.msk [vmem:[#allocation3 + $0x58] sm:$0xff] %vm989, %v1112
  %1129 = vst.msk [vmem:[#allocation3 + $0x60] sm:$0xff] %vm989, %v1113
  %1130 = vst.msk [vmem:[#allocation3 + $0x68] sm:$0xff] %vm989, %v1114
  %1131 = vst.msk [vmem:[#allocation3 + $0x70] sm:$0xff] %vm989, %v1115
  %1132 = vst.msk [vmem:[#allocation3 + $0x78] sm:$0xff] %vm989, %v1116
  %1133 = vst.msk [vmem:[#allocation3 + $0x80] sm:$0xff] %vm989, 0.0
  %v1134 = vld [vmem:[#allocation3] sm:$0xff]
  %v1135 = vld [vmem:[#allocation3 + $0x8] sm:$0xff]
  %v1136 = vld [vmem:[#allocation3 + $0x10] sm:$0xff]
  %v1137 = vld [vmem:[#allocation3 + $0x18] sm:$0xff]
  %v1138 = vld [vmem:[#allocation3 + $0x20] sm:$0xff]
  %v1139 = vld [vmem:[#allocation3 + $0x28] sm:$0xff]
  %v1140 = vld [vmem:[#allocation3 + $0x30] sm:$0xff]
  %v1141 = vld [vmem:[#allocation3 + $0x38] sm:$0xff]
  %v1142 = vld [vmem:[#allocation3 + $0x40] sm:$0xff]
  %v1143 = vld [vmem:[#allocation3 + $0x48] sm:$0xff]
  %v1144 = vld [vmem:[#allocation3 + $0x50] sm:$0xff]
  %v1145 = vld [vmem:[#allocation3 + $0x58] sm:$0xff]
  %v1146 = vld [vmem:[#allocation3 + $0x60] sm:$0xff]
  %v1147 = vld [vmem:[#allocation3 + $0x68] sm:$0xff]
  %v1148 = vld [vmem:[#allocation3 + $0x70] sm:$0xff]
  %v1149 = vld [vmem:[#allocation3 + $0x78] sm:$0xff]
  %v1150 = vpack.c.bf16 %v1135, %v1134
  %v1151 = vpack.c.bf16 %v1137, %v1136
  %v1152 = vpack.c.bf16 %v1139, %v1138
  %v1153 = vpack.c.bf16 %v1141, %v1140
  %v1154 = vpack.c.bf16 %v1143, %v1142
  %v1155 = vpack.c.bf16 %v1145, %v1144
  %v1156 = vpack.c.bf16 %v1147, %v1146
  %v1157 = vpack.c.bf16 %v1149, %v1148
  %v1158 = vld [vmem:[%s4] sm:$0xff]
  %v1159 = vld [vmem:[%s4 + $0x8] sm:$0xff]
  %v1160 = vld [vmem:[%s4 + $0x10] sm:$0xff]
  %v1161 = vld [vmem:[%s4 + $0x18] sm:$0xff]
  %v1162 = vld [vmem:[%s4 + $0x20] sm:$0xff]
  %v1163 = vld [vmem:[%s4 + $0x28] sm:$0xff]
  %v1164 = vld [vmem:[%s4 + $0x30] sm:$0xff]
  %v1165 = vld [vmem:[%s4 + $0x38] sm:$0xff]
  %v1166 = vld [vmem:[%s4 + $0x40] sm:$0xff]
  %v1167 = vld [vmem:[%s4 + $0x48] sm:$0xff]
  %v1168 = vld [vmem:[%s4 + $0x50] sm:$0x33]
  %v1169 = vld [vmem:[#allocation3 + $0x1] sm:$0xff]
  %v1170 = vld [vmem:[#allocation3 + $0x9] sm:$0xff]
  %v1171 = vld [vmem:[#allocation3 + $0x11] sm:$0xff]
  %v1172 = vld [vmem:[#allocation3 + $0x19] sm:$0xff]
  %v1173 = vld [vmem:[#allocation3 + $0x21] sm:$0xff]
  %v1174 = vld [vmem:[#allocation3 + $0x29] sm:$0xff]
  %v1175 = vld [vmem:[#allocation3 + $0x31] sm:$0xff]
  %v1176 = vld [vmem:[#allocation3 + $0x39] sm:$0xff]
  %v1177 = vld [vmem:[#allocation3 + $0x41] sm:$0xff]
  %v1178 = vld [vmem:[#allocation3 + $0x49] sm:$0xff]
  %v1179 = vld [vmem:[#allocation3 + $0x51] sm:$0xff]
  %v1180 = vld [vmem:[#allocation3 + $0x59] sm:$0xff]
  %v1181 = vld [vmem:[#allocation3 + $0x61] sm:$0xff]
  %v1182 = vld [vmem:[#allocation3 + $0x69] sm:$0xff]
  %v1183 = vld [vmem:[#allocation3 + $0x71] sm:$0xff]
  %v1184 = vld [vmem:[#allocation3 + $0x79] sm:$0xff]
  %v1185 = vpack.c.bf16 %v1170, %v1169
  %v1186 = vpack.c.bf16 %v1172, %v1171
  %v1187 = vpack.c.bf16 %v1174, %v1173
  %v1188 = vpack.c.bf16 %v1176, %v1175
  %v1189 = vpack.c.bf16 %v1178, %v1177
  %v1190 = vpack.c.bf16 %v1180, %v1179
  %v1191 = vpack.c.bf16 %v1182, %v1181
  %v1192 = vpack.c.bf16 %v1184, %v1183
  %s1193 = scalar_lea.vmem %s4, 88
  %v1194 = vld [vmem:[%s1193] sm:$0xff]
  %v1195 = vld [vmem:[%s1193 + $0x8] sm:$0xff]
  %v1196 = vld [vmem:[%s1193 + $0x10] sm:$0xff]
  %v1197 = vld [vmem:[%s1193 + $0x18] sm:$0xff]
  %v1198 = vld [vmem:[%s1193 + $0x20] sm:$0xff]
  %v1199 = vld [vmem:[%s1193 + $0x28] sm:$0xff]
  %v1200 = vld [vmem:[%s1193 + $0x30] sm:$0xff]
  %v1201 = vld [vmem:[%s1193 + $0x38] sm:$0xff]
  %v1202 = vld [vmem:[%s1193 + $0x40] sm:$0xff]
  %v1203 = vld [vmem:[%s1193 + $0x48] sm:$0xff]
  %v1204 = vld [vmem:[%s1193 + $0x50] sm:$0x33]
  %v1216 = vunpack.c.l.b16 %v1194
  %v1217 = vunpack.c.h.b16 %v1194
  %v1218 = vunpack.c.l.b16 %v1195
  %v1219 = vunpack.c.h.b16 %v1195
  %v1220 = vunpack.c.l.b16 %v1196
  %v1221 = vunpack.c.h.b16 %v1196
  %v1222 = vunpack.c.l.b16 %v1197
  %v1223 = vunpack.c.h.b16 %v1197
  %v1224 = vunpack.c.l.b16 %v1198
  %v1225 = vunpack.c.h.b16 %v1198
  %v1226 = vunpack.c.l.b16 %v1199
  %v1227 = vunpack.c.h.b16 %v1199
  %v1228 = vunpack.c.l.b16 %v1200
  %v1229 = vunpack.c.h.b16 %v1200
  %v1230 = vunpack.c.l.b16 %v1201
  %v1231 = vunpack.c.h.b16 %v1201
  %v1232 = vunpack.c.l.b16 %v1202
  %v1233 = vunpack.c.h.b16 %v1202
  %v1234 = vunpack.c.l.b16 %v1203
  %v1235 = vunpack.c.h.b16 %v1203
  %v1236 = vunpack.c.l.b16 %v1204
  %v1237 = vunpack.c.h.b16 %v1204
  %v1238 = vpack.c.b16 %v1218, %v1216
  %v1239 = vpack.c.b16 %v1219, %v1217
  %v1240 = vpack.c.b16 %v1222, %v1220
  %v1241 = vpack.c.b16 %v1223, %v1221
  %v1242 = vpack.c.b16 %v1226, %v1224
  %v1243 = vpack.c.b16 %v1227, %v1225
  %v1244 = vpack.c.b16 %v1230, %v1228
  %v1245 = vpack.c.b16 %v1231, %v1229
  %v1246 = vpack.c.b16 %v1234, %v1232
  %v1247 = vpack.c.b16 %v1235, %v1233
  %v1248 = vpack.c.b16 %v1236, %v1236
  %v1249 = vpack.c.b16 %v1237, %v1237
  %v1261 = vsel %vm989, %v1185, 0
  %v1264 = vsel %vm989, %v1186, 0
  %v1267 = vsel %vm989, %v1187, 0
  %v1270 = vsel %vm989, %v1188, 0
  %v1273 = vsel %vm989, %v1189, 0
  %v1276 = vsel %vm989, %v1190, 0
  %v1279 = vsel %vm989, %v1191, 0
  %v1282 = vsel %vm989, %v1192, 0
  %vm1284 = vcmask 1041408
  %v1286 = vsel %vm1284, %v1248, 0
  %v1289 = vsel %vm1284, %v1249, 0
  %1291 = vmatprep.subr.bf16.mxu0 0
  %1292 = vmatpush1.bf16.msra.mxu0 0
  %1293 = vmatprep.subr.bf16.mxu0 0
  %1294 = vmatpush1.bf16.msra.mxu0 0
  %1295 = vmatprep.subr.bf16.mxu0 %v1289
  %1296 = vmatpush1.bf16.msra.mxu0 %v1286
  %1297 = vmatprep.subr.bf16.mxu0 %v1247
  %1298 = vmatpush1.bf16.msra.mxu0 %v1246
  %1299 = vmatprep.subr.bf16.mxu0 %v1245
  %1300 = vmatpush1.bf16.msra.mxu0 %v1244
  %1301 = vmatprep.subr.bf16.mxu0 %v1243
  %1302 = vmatpush1.bf16.msra.mxu0 %v1242
  %1303 = vmatprep.subr.bf16.mxu0 %v1241
  %1304 = vmatpush1.bf16.msra.mxu0 %v1240
  %1305 = vmatprep.subr.bf16.mxu0 %v1239
  %1306 = vmatpush1.bf16.msra.mxu0 %v1238
  %1307 = vmatprep.subr.bf16.mxu0 0
  %1308 = vmatpush2.bf16.msra.mxu0 0
  %1309 = vmatprep.subr.bf16.mxu0 0
  %1310 = vmatpush2.bf16.msra.mxu0 0
  %1311 = vmatprep.subr.bf16.mxu0 0
  %1312 = vmatpush2.bf16.msra.mxu0 0
  %1313 = vmatprep.subr.bf16.mxu0 0
  %1314 = vmatpush2.bf16.msra.mxu0 0
  %1315 = vmatprep.subr.bf16.mxu0 0
  %1316 = vmatpush2.bf16.msra.mxu0 0
  %1317 = vmatprep.subr.bf16.mxu0 0
  %1318 = vmatpush2.bf16.msra.mxu0 0
  %1319 = vmatprep.subr.bf16.mxu0 0
  %1320 = vmatpush2.bf16.msra.mxu0 0
  %1321 = vmatprep.subr.bf16.mxu0 0
  %1322 = vmatpush2.bf16.msra.mxu0 0
  %1323 = vmatprep.mubr.bf16.mxu0 0
  %1324 = vmatmul.mubr.bf16.gmra.mxu0 %v1261
  %v1325 = vpop.f32.mrf.mxu0
  %v1326 = vadd.f32 0.0, %v1325
  %v1327 = vpop.f32.mrf.mxu0
  %v1328 = vadd.f32 0.0, %v1327
  %v1329 = vpop.f32.mrf.mxu0
  %v1330 = vadd.f32 0.0, %v1329
  %v1331 = vpop.f32.mrf.mxu0
  %v1332 = vadd.f32 0.0, %v1331
  %1333 = vmatprep.mubr.bf16.mxu0 0
  %1334 = vmatmul.mubr.bf16.gmra.mxu0 %v1264
  %v1335 = vpop.f32.mrf.mxu0
  %v1336 = vadd.f32 0.0, %v1335
  %v1337 = vpop.f32.mrf.mxu0
  %v1338 = vadd.f32 0.0, %v1337
  %v1339 = vpop.f32.mrf.mxu0
  %v1340 = vadd.f32 0.0, %v1339
  %v1341 = vpop.f32.mrf.mxu0
  %v1342 = vadd.f32 0.0, %v1341
  %1343 = vmatprep.mubr.bf16.mxu0 0
  %1344 = vmatmul.mubr.bf16.gmra.mxu0 %v1267
  %v1345 = vpop.f32.mrf.mxu0
  %v1346 = vadd.f32 0.0, %v1345
  %v1347 = vpop.f32.mrf.mxu0
  %v1348 = vadd.f32 0.0, %v1347
  %v1349 = vpop.f32.mrf.mxu0
  %v1350 = vadd.f32 0.0, %v1349
  %v1351 = vpop.f32.mrf.mxu0
  %v1352 = vadd.f32 0.0, %v1351
  %1353 = vmatprep.mubr.bf16.mxu0 0
  %1354 = vmatmul.mubr.bf16.gmra.mxu0 %v1270
  %v1355 = vpop.f32.mrf.mxu0
  %v1356 = vadd.f32 0.0, %v1355
  %v1357 = vpop.f32.mrf.mxu0
  %v1358 = vadd.f32 0.0, %v1357
  %v1359 = vpop.f32.mrf.mxu0
  %v1360 = vadd.f32 0.0, %v1359
  %v1361 = vpop.f32.mrf.mxu0
  %v1362 = vadd.f32 0.0, %v1361
  %1363 = vmatprep.mubr.bf16.mxu0 0
  %1364 = vmatmul.mubr.bf16.gmra.mxu0 %v1273
  %v1365 = vpop.f32.mrf.mxu0
  %v1366 = vadd.f32 0.0, %v1365
  %v1367 = vpop.f32.mrf.mxu0
  %v1368 = vadd.f32 0.0, %v1367
  %v1369 = vpop.f32.mrf.mxu0
  %v1370 = vadd.f32 0.0, %v1369
  %v1371 = vpop.f32.mrf.mxu0
  %v1372 = vadd.f32 0.0, %v1371
  %1373 = vmatprep.mubr.bf16.mxu0 0
  %1374 = vmatmul.mubr.bf16.gmra.mxu0 %v1276
  %v1375 = vpop.f32.mrf.mxu0
  %v1376 = vadd.f32 0.0, %v1375
  %v1377 = vpop.f32.mrf.mxu0
  %v1378 = vadd.f32 0.0, %v1377
  %v1379 = vpop.f32.mrf.mxu0
  %v1380 = vadd.f32 0.0, %v1379
  %v1381 = vpop.f32.mrf.mxu0
  %v1382 = vadd.f32 0.0, %v1381
  %1383 = vmatprep.mubr.bf16.mxu0 0
  %1384 = vmatmul.mubr.bf16.gmra.mxu0 %v1279
  %v1385 = vpop.f32.mrf.mxu0
  %v1386 = vadd.f32 0.0, %v1385
  %v1387 = vpop.f32.mrf.mxu0
  %v1388 = vadd.f32 0.0, %v1387
  %v1389 = vpop.f32.mrf.mxu0
  %v1390 = vadd.f32 0.0, %v1389
  %v1391 = vpop.f32.mrf.mxu0
  %v1392 = vadd.f32 0.0, %v1391
  %1393 = vmatprep.mubr.bf16.mxu0 0
  %1394 = vmatmul.mubr.bf16.gmra.mxu0 %v1282
  %v1395 = vpop.f32.mrf.mxu0
  %v1396 = vadd.f32 0.0, %v1395
  %v1397 = vpop.f32.mrf.mxu0
  %v1398 = vadd.f32 0.0, %v1397
  %v1399 = vpop.f32.mrf.mxu0
  %v1400 = vadd.f32 0.0, %v1399
  %v1401 = vpop.f32.mrf.mxu0
  %v1402 = vadd.f32 0.0, %v1401
  %1403 = vdwg.mxu0
  %v1415 = vunpack.c.l.b16 %v1158
  %v1416 = vunpack.c.h.b16 %v1158
  %v1417 = vunpack.c.l.b16 %v1159
  %v1418 = vunpack.c.h.b16 %v1159
  %v1419 = vunpack.c.l.b16 %v1160
  %v1420 = vunpack.c.h.b16 %v1160
  %v1421 = vunpack.c.l.b16 %v1161
  %v1422 = vunpack.c.h.b16 %v1161
  %v1423 = vunpack.c.l.b16 %v1162
  %v1424 = vunpack.c.h.b16 %v1162
  %v1425 = vunpack.c.l.b16 %v1163
  %v1426 = vunpack.c.h.b16 %v1163
  %v1427 = vunpack.c.l.b16 %v1164
  %v1428 = vunpack.c.h.b16 %v1164
  %v1429 = vunpack.c.l.b16 %v1165
  %v1430 = vunpack.c.h.b16 %v1165
  %v1431 = vunpack.c.l.b16 %v1166
  %v1432 = vunpack.c.h.b16 %v1166
  %v1433 = vunpack.c.l.b16 %v1167
  %v1434 = vunpack.c.h.b16 %v1167
  %v1435 = vunpack.c.l.b16 %v1168
  %v1436 = vunpack.c.h.b16 %v1168
  %v1437 = vpack.c.b16 %v1417, %v1415
  %v1438 = vpack.c.b16 %v1418, %v1416
  %v1439 = vpack.c.b16 %v1421, %v1419
  %v1440 = vpack.c.b16 %v1422, %v1420
  %v1441 = vpack.c.b16 %v1425, %v1423
  %v1442 = vpack.c.b16 %v1426, %v1424
  %v1443 = vpack.c.b16 %v1429, %v1427
  %v1444 = vpack.c.b16 %v1430, %v1428
  %v1445 = vpack.c.b16 %v1433, %v1431
  %v1446 = vpack.c.b16 %v1434, %v1432
  %v1447 = vpack.c.b16 %v1435, %v1435
  %v1448 = vpack.c.b16 %v1436, %v1436
  %v1460 = vsel %vm989, %v1150, 0
  %v1463 = vsel %vm989, %v1151, 0
  %v1466 = vsel %vm989, %v1152, 0
  %v1469 = vsel %vm989, %v1153, 0
  %v1472 = vsel %vm989, %v1154, 0
  %v1475 = vsel %vm989, %v1155, 0
  %v1478 = vsel %vm989, %v1156, 0
  %v1481 = vsel %vm989, %v1157, 0
  %v1484 = vsel %vm1284, %v1447, 0
  %v1487 = vsel %vm1284, %v1448, 0
  %1489 = vmatprep.subr.bf16.mxu0 0
  %1490 = vmatpush1.bf16.msra.mxu0 0
  %1491 = vmatprep.subr.bf16.mxu0 0
  %1492 = vmatpush1.bf16.msra.mxu0 0
  %1493 = vmatprep.subr.bf16.mxu0 %v1487
  %1494 = vmatpush1.bf16.msra.mxu0 %v1484
  %1495 = vmatprep.subr.bf16.mxu0 %v1446
  %1496 = vmatpush1.bf16.msra.mxu0 %v1445
  %1497 = vmatprep.subr.bf16.mxu0 %v1444
  %1498 = vmatpush1.bf16.msra.mxu0 %v1443
  %1499 = vmatprep.subr.bf16.mxu0 %v1442
  %1500 = vmatpush1.bf16.msra.mxu0 %v1441
  %1501 = vmatprep.subr.bf16.mxu0 %v1440
  %1502 = vmatpush1.bf16.msra.mxu0 %v1439
  %1503 = vmatprep.subr.bf16.mxu0 %v1438
  %1504 = vmatpush1.bf16.msra.mxu0 %v1437
  %1505 = vmatprep.subr.bf16.mxu0 0
  %1506 = vmatpush2.bf16.msra.mxu0 0
  %1507 = vmatprep.subr.bf16.mxu0 0
  %1508 = vmatpush2.bf16.msra.mxu0 0
  %1509 = vmatprep.subr.bf16.mxu0 0
  %1510 = vmatpush2.bf16.msra.mxu0 0
  %1511 = vmatprep.subr.bf16.mxu0 0
  %1512 = vmatpush2.bf16.msra.mxu0 0
  %1513 = vmatprep.subr.bf16.mxu0 0
  %1514 = vmatpush2.bf16.msra.mxu0 0
  %1515 = vmatprep.subr.bf16.mxu0 0
  %1516 = vmatpush2.bf16.msra.mxu0 0
  %1517 = vmatprep.subr.bf16.mxu0 0
  %1518 = vmatpush2.bf16.msra.mxu0 0
  %1519 = vmatprep.subr.bf16.mxu0 0
  %1520 = vmatpush2.bf16.msra.mxu0 0
  %1521 = vmatprep.mubr.bf16.mxu0 0
  %1522 = vmatmul.mubr.bf16.gmra.mxu0 %v1460
  %v1523 = vpop.f32.mrf.mxu0
  %v1524 = vadd.f32 %v1326, %v1523
  %v1525 = vpop.f32.mrf.mxu0
  %v1526 = vadd.f32 %v1328, %v1525
  %v1527 = vpop.f32.mrf.mxu0
  %v1528 = vadd.f32 %v1330, %v1527
  %v1529 = vpop.f32.mrf.mxu0
  %v1530 = vadd.f32 %v1332, %v1529
  %1531 = vmatprep.mubr.bf16.mxu0 0
  %1532 = vmatmul.mubr.bf16.gmra.mxu0 %v1463
  %v1533 = vpop.f32.mrf.mxu0
  %v1534 = vadd.f32 %v1336, %v1533
  %v1535 = vpop.f32.mrf.mxu0
  %v1536 = vadd.f32 %v1338, %v1535
  %v1537 = vpop.f32.mrf.mxu0
  %v1538 = vadd.f32 %v1340, %v1537
  %v1539 = vpop.f32.mrf.mxu0
  %v1540 = vadd.f32 %v1342, %v1539
  %1541 = vmatprep.mubr.bf16.mxu0 0
  %1542 = vmatmul.mubr.bf16.gmra.mxu0 %v1466
  %v1543 = vpop.f32.mrf.mxu0
  %v1544 = vadd.f32 %v1346, %v1543
  %v1545 = vpop.f32.mrf.mxu0
  %v1546 = vadd.f32 %v1348, %v1545
  %v1547 = vpop.f32.mrf.mxu0
  %v1548 = vadd.f32 %v1350, %v1547
  %v1549 = vpop.f32.mrf.mxu0
  %v1550 = vadd.f32 %v1352, %v1549
  %1551 = vmatprep.mubr.bf16.mxu0 0
  %1552 = vmatmul.mubr.bf16.gmra.mxu0 %v1469
  %v1553 = vpop.f32.mrf.mxu0
  %v1554 = vadd.f32 %v1356, %v1553
  %v1555 = vpop.f32.mrf.mxu0
  %v1556 = vadd.f32 %v1358, %v1555
  %v1557 = vpop.f32.mrf.mxu0
  %v1558 = vadd.f32 %v1360, %v1557
  %v1559 = vpop.f32.mrf.mxu0
  %v1560 = vadd.f32 %v1362, %v1559
  %1561 = vmatprep.mubr.bf16.mxu0 0
  %1562 = vmatmul.mubr.bf16.gmra.mxu0 %v1472
  %v1563 = vpop.f32.mrf.mxu0
  %v1564 = vadd.f32 %v1366, %v1563
  %v1565 = vpop.f32.mrf.mxu0
  %v1566 = vadd.f32 %v1368, %v1565
  %v1567 = vpop.f32.mrf.mxu0
  %v1568 = vadd.f32 %v1370, %v1567
  %v1569 = vpop.f32.mrf.mxu0
  %v1570 = vadd.f32 %v1372, %v1569
  %1571 = vmatprep.mubr.bf16.mxu0 0
  %1572 = vmatmul.mubr.bf16.gmra.mxu0 %v1475
  %v1573 = vpop.f32.mrf.mxu0
  %v1574 = vadd.f32 %v1376, %v1573
  %v1575 = vpop.f32.mrf.mxu0
  %v1576 = vadd.f32 %v1378, %v1575
  %v1577 = vpop.f32.mrf.mxu0
  %v1578 = vadd.f32 %v1380, %v1577
  %v1579 = vpop.f32.mrf.mxu0
  %v1580 = vadd.f32 %v1382, %v1579
  %1581 = vmatprep.mubr.bf16.mxu0 0
  %1582 = vmatmul.mubr.bf16.gmra.mxu0 %v1478
  %v1583 = vpop.f32.mrf.mxu0
  %v1584 = vadd.f32 %v1386, %v1583
  %v1585 = vpop.f32.mrf.mxu0
  %v1586 = vadd.f32 %v1388, %v1585
  %v1587 = vpop.f32.mrf.mxu0
  %v1588 = vadd.f32 %v1390, %v1587
  %v1589 = vpop.f32.mrf.mxu0
  %v1590 = vadd.f32 %v1392, %v1589
  %1591 = vmatprep.mubr.bf16.mxu0 0
  %1592 = vmatmul.mubr.bf16.gmra.mxu0 %v1481
  %v1593 = vpop.f32.mrf.mxu0
  %v1594 = vadd.f32 %v1396, %v1593
  %v1595 = vpop.f32.mrf.mxu0
  %v1596 = vadd.f32 %v1398, %v1595
  %v1597 = vpop.f32.mrf.mxu0
  %v1598 = vadd.f32 %v1400, %v1597
  %v1599 = vpop.f32.mrf.mxu0
  %v1600 = vadd.f32 %v1402, %v1599
  %1601 = vdwg.mxu0
  %v1602 = vld [vmem:[#allocation3 + $0x2] sm:$0xff]
  %v1603 = vld [vmem:[#allocation3 + $0xa] sm:$0xff]
  %v1604 = vld [vmem:[#allocation3 + $0x12] sm:$0xff]
  %v1605 = vld [vmem:[#allocation3 + $0x1a] sm:$0xff]
  %v1606 = vld [vmem:[#allocation3 + $0x22] sm:$0xff]
  %v1607 = vld [vmem:[#allocation3 + $0x2a] sm:$0xff]
  %v1608 = vld [vmem:[#allocation3 + $0x32] sm:$0xff]
  %v1609 = vld [vmem:[#allocation3 + $0x3a] sm:$0xff]
  %v1610 = vld [vmem:[#allocation3 + $0x42] sm:$0xff]
  %v1611 = vld [vmem:[#allocation3 + $0x4a] sm:$0xff]
  %v1612 = vld [vmem:[#allocation3 + $0x52] sm:$0xff]
  %v1613 = vld [vmem:[#allocation3 + $0x5a] sm:$0xff]
  %v1614 = vld [vmem:[#allocation3 + $0x62] sm:$0xff]
  %v1615 = vld [vmem:[#allocation3 + $0x6a] sm:$0xff]
  %v1616 = vld [vmem:[#allocation3 + $0x72] sm:$0xff]
  %v1617 = vld [vmem:[#allocation3 + $0x7a] sm:$0xff]
  %v1618 = vpack.c.bf16 %v1603, %v1602
  %v1619 = vpack.c.bf16 %v1605, %v1604
  %v1620 = vpack.c.bf16 %v1607, %v1606
  %v1621 = vpack.c.bf16 %v1609, %v1608
  %v1622 = vpack.c.bf16 %v1611, %v1610
  %v1623 = vpack.c.bf16 %v1613, %v1612
  %v1624 = vpack.c.bf16 %v1615, %v1614
  %v1625 = vpack.c.bf16 %v1617, %v1616
  %s1626 = scalar_lea.vmem %s4, 176
  %v1627 = vld [vmem:[%s1626] sm:$0xff]
  %v1628 = vld [vmem:[%s1626 + $0x8] sm:$0xff]
  %v1629 = vld [vmem:[%s1626 + $0x10] sm:$0xff]
  %v1630 = vld [vmem:[%s1626 + $0x18] sm:$0xff]
  %v1631 = vld [vmem:[%s1626 + $0x20] sm:$0xff]
  %v1632 = vld [vmem:[%s1626 + $0x28] sm:$0xff]
  %v1633 = vld [vmem:[%s1626 + $0x30] sm:$0xff]
  %v1634 = vld [vmem:[%s1626 + $0x38] sm:$0xff]
  %v1635 = vld [vmem:[%s1626 + $0x40] sm:$0xff]
  %v1636 = vld [vmem:[%s1626 + $0x48] sm:$0xff]
  %v1637 = vld [vmem:[%s1626 + $0x50] sm:$0x33]
  %v1649 = vunpack.c.l.b16 %v1627
  %v1650 = vunpack.c.h.b16 %v1627
  %v1651 = vunpack.c.l.b16 %v1628
  %v1652 = vunpack.c.h.b16 %v1628
  %v1653 = vunpack.c.l.b16 %v1629
  %v1654 = vunpack.c.h.b16 %v1629
  %v1655 = vunpack.c.l.b16 %v1630
  %v1656 = vunpack.c.h.b16 %v1630
  %v1657 = vunpack.c.l.b16 %v1631
  %v1658 = vunpack.c.h.b16 %v1631
  %v1659 = vunpack.c.l.b16 %v1632
  %v1660 = vunpack.c.h.b16 %v1632
  %v1661 = vunpack.c.l.b16 %v1633
  %v1662 = vunpack.c.h.b16 %v1633
  %v1663 = vunpack.c.l.b16 %v1634
  %v1664 = vunpack.c.h.b16 %v1634
  %v1665 = vunpack.c.l.b16 %v1635
  %v1666 = vunpack.c.h.b16 %v1635
  %v1667 = vunpack.c.l.b16 %v1636
  %v1668 = vunpack.c.h.b16 %v1636
  %v1669 = vunpack.c.l.b16 %v1637
  %v1670 = vunpack.c.h.b16 %v1637
  %v1671 = vpack.c.b16 %v1651, %v1649
  %v1672 = vpack.c.b16 %v1652, %v1650
  %v1673 = vpack.c.b16 %v1655, %v1653
  %v1674 = vpack.c.b16 %v1656, %v1654
  %v1675 = vpack.c.b16 %v1659, %v1657
  %v1676 = vpack.c.b16 %v1660, %v1658
  %v1677 = vpack.c.b16 %v1663, %v1661
  %v1678 = vpack.c.b16 %v1664, %v1662
  %v1679 = vpack.c.b16 %v1667, %v1665
  %v1680 = vpack.c.b16 %v1668, %v1666
  %v1681 = vpack.c.b16 %v1669, %v1669
  %v1682 = vpack.c.b16 %v1670, %v1670
  %v1694 = vsel %vm989, %v1618, 0
  %v1697 = vsel %vm989, %v1619, 0
  %v1700 = vsel %vm989, %v1620, 0
  %v1703 = vsel %vm989, %v1621, 0
  %v1706 = vsel %vm989, %v1622, 0
  %v1709 = vsel %vm989, %v1623, 0
  %v1712 = vsel %vm989, %v1624, 0
  %v1715 = vsel %vm989, %v1625, 0
  %v1718 = vsel %vm1284, %v1681, 0
  %v1721 = vsel %vm1284, %v1682, 0
  %1723 = vmatprep.subr.bf16.mxu0 0
  %1724 = vmatpush1.bf16.msra.mxu0 0
  %1725 = vmatprep.subr.bf16.mxu0 0
  %1726 = vmatpush1.bf16.msra.mxu0 0
  %1727 = vmatprep.subr.bf16.mxu0 %v1721
  %1728 = vmatpush1.bf16.msra.mxu0 %v1718
  %1729 = vmatprep.subr.bf16.mxu0 %v1680
  %1730 = vmatpush1.bf16.msra.mxu0 %v1679
  %1731 = vmatprep.subr.bf16.mxu0 %v1678
  %1732 = vmatpush1.bf16.msra.mxu0 %v1677
  %1733 = vmatprep.subr.bf16.mxu0 %v1676
  %1734 = vmatpush1.bf16.msra.mxu0 %v1675
  %1735 = vmatprep.subr.bf16.mxu0 %v1674
  %1736 = vmatpush1.bf16.msra.mxu0 %v1673
  %1737 = vmatprep.subr.bf16.mxu0 %v1672
  %1738 = vmatpush1.bf16.msra.mxu0 %v1671
  %1739 = vmatprep.subr.bf16.mxu0 0
  %1740 = vmatpush2.bf16.msra.mxu0 0
  %1741 = vmatprep.subr.bf16.mxu0 0
  %1742 = vmatpush2.bf16.msra.mxu0 0
  %1743 = vmatprep.subr.bf16.mxu0 0
  %1744 = vmatpush2.bf16.msra.mxu0 0
  %1745 = vmatprep.subr.bf16.mxu0 0
  %1746 = vmatpush2.bf16.msra.mxu0 0
  %1747 = vmatprep.subr.bf16.mxu0 0
  %1748 = vmatpush2.bf16.msra.mxu0 0
  %1749 = vmatprep.subr.bf16.mxu0 0
  %1750 = vmatpush2.bf16.msra.mxu0 0
  %1751 = vmatprep.subr.bf16.mxu0 0
  %1752 = vmatpush2.bf16.msra.mxu0 0
  %1753 = vmatprep.subr.bf16.mxu0 0
  %1754 = vmatpush2.bf16.msra.mxu0 0
  %1755 = vmatprep.mubr.bf16.mxu0 0
  %1756 = vmatmul.mubr.bf16.gmra.mxu0 %v1694
  %v1757 = vpop.f32.mrf.mxu0
  %v1758 = vadd.f32 0.0, %v1757
  %v1759 = vpop.f32.mrf.mxu0
  %v1760 = vadd.f32 0.0, %v1759
  %v1761 = vpop.f32.mrf.mxu0
  %v1762 = vadd.f32 0.0, %v1761
  %v1763 = vpop.f32.mrf.mxu0
  %v1764 = vadd.f32 0.0, %v1763
  %1765 = vmatprep.mubr.bf16.mxu0 0
  %1766 = vmatmul.mubr.bf16.gmra.mxu0 %v1697
  %v1767 = vpop.f32.mrf.mxu0
  %v1768 = vadd.f32 0.0, %v1767
  %v1769 = vpop.f32.mrf.mxu0
  %v1770 = vadd.f32 0.0, %v1769
  %v1771 = vpop.f32.mrf.mxu0
  %v1772 = vadd.f32 0.0, %v1771
  %v1773 = vpop.f32.mrf.mxu0
  %v1774 = vadd.f32 0.0, %v1773
  %1775 = vmatprep.mubr.bf16.mxu0 0
  %1776 = vmatmul.mubr.bf16.gmra.mxu0 %v1700
  %v1777 = vpop.f32.mrf.mxu0
  %v1778 = vadd.f32 0.0, %v1777
  %v1779 = vpop.f32.mrf.mxu0
  %v1780 = vadd.f32 0.0, %v1779
  %v1781 = vpop.f32.mrf.mxu0
  %v1782 = vadd.f32 0.0, %v1781
  %v1783 = vpop.f32.mrf.mxu0
  %v1784 = vadd.f32 0.0, %v1783
  %1785 = vmatprep.mubr.bf16.mxu0 0
  %1786 = vmatmul.mubr.bf16.gmra.mxu0 %v1703
  %v1787 = vpop.f32.mrf.mxu0
  %v1788 = vadd.f32 0.0, %v1787
  %v1789 = vpop.f32.mrf.mxu0
  %v1790 = vadd.f32 0.0, %v1789
  %v1791 = vpop.f32.mrf.mxu0
  %v1792 = vadd.f32 0.0, %v1791
  %v1793 = vpop.f32.mrf.mxu0
  %v1794 = vadd.f32 0.0, %v1793
  %1795 = vmatprep.mubr.bf16.mxu0 0
  %1796 = vmatmul.mubr.bf16.gmra.mxu0 %v1706
  %v1797 = vpop.f32.mrf.mxu0
  %v1798 = vadd.f32 0.0, %v1797
  %v1799 = vpop.f32.mrf.mxu0
  %v1800 = vadd.f32 0.0, %v1799
  %v1801 = vpop.f32.mrf.mxu0
  %v1802 = vadd.f32 0.0, %v1801
  %v1803 = vpop.f32.mrf.mxu0
  %v1804 = vadd.f32 0.0, %v1803
  %1805 = vmatprep.mubr.bf16.mxu0 0
  %1806 = vmatmul.mubr.bf16.gmra.mxu0 %v1709
  %v1807 = vpop.f32.mrf.mxu0
  %v1808 = vadd.f32 0.0, %v1807
  %v1809 = vpop.f32.mrf.mxu0
  %v1810 = vadd.f32 0.0, %v1809
  %v1811 = vpop.f32.mrf.mxu0
  %v1812 = vadd.f32 0.0, %v1811
  %v1813 = vpop.f32.mrf.mxu0
  %v1814 = vadd.f32 0.0, %v1813
  %1815 = vmatprep.mubr.bf16.mxu0 0
  %1816 = vmatmul.mubr.bf16.gmra.mxu0 %v1712
  %v1817 = vpop.f32.mrf.mxu0
  %v1818 = vadd.f32 0.0, %v1817
  %v1819 = vpop.f32.mrf.mxu0
  %v1820 = vadd.f32 0.0, %v1819
  %v1821 = vpop.f32.mrf.mxu0
  %v1822 = vadd.f32 0.0, %v1821
  %v1823 = vpop.f32.mrf.mxu0
  %v1824 = vadd.f32 0.0, %v1823
  %1825 = vmatprep.mubr.bf16.mxu0 0
  %1826 = vmatmul.mubr.bf16.gmra.mxu0 %v1715
  %v1827 = vpop.f32.mrf.mxu0
  %v1828 = vadd.f32 0.0, %v1827
  %v1829 = vpop.f32.mrf.mxu0
  %v1830 = vadd.f32 0.0, %v1829
  %v1831 = vpop.f32.mrf.mxu0
  %v1832 = vadd.f32 0.0, %v1831
  %v1833 = vpop.f32.mrf.mxu0
  %v1834 = vadd.f32 0.0, %v1833
  %1835 = vdwg.mxu0
  %v1836 = vadd.f32 %v1524, %v1758
  %v1837 = vadd.f32 %v1526, %v1760
  %v1838 = vadd.f32 %v1528, %v1762
  %v1839 = vadd.f32 %v1530, %v1764
  %v1840 = vadd.f32 %v1534, %v1768
  %v1841 = vadd.f32 %v1536, %v1770
  %v1842 = vadd.f32 %v1538, %v1772
  %v1843 = vadd.f32 %v1540, %v1774
  %v1844 = vadd.f32 %v1544, %v1778
  %v1845 = vadd.f32 %v1546, %v1780
  %v1846 = vadd.f32 %v1548, %v1782
  %v1847 = vadd.f32 %v1550, %v1784
  %v1848 = vadd.f32 %v1554, %v1788
  %v1849 = vadd.f32 %v1556, %v1790
  %v1850 = vadd.f32 %v1558, %v1792
  %v1851 = vadd.f32 %v1560, %v1794
  %v1852 = vadd.f32 %v1564, %v1798
  %v1853 = vadd.f32 %v1566, %v1800
  %v1854 = vadd.f32 %v1568, %v1802
  %v1855 = vadd.f32 %v1570, %v1804
  %v1856 = vadd.f32 %v1574, %v1808
  %v1857 = vadd.f32 %v1576, %v1810
  %v1858 = vadd.f32 %v1578, %v1812
  %v1859 = vadd.f32 %v1580, %v1814
  %v1860 = vadd.f32 %v1584, %v1818
  %v1861 = vadd.f32 %v1586, %v1820
  %v1862 = vadd.f32 %v1588, %v1822
  %v1863 = vadd.f32 %v1590, %v1824
  %v1864 = vadd.f32 %v1594, %v1828
  %v1865 = vadd.f32 %v1596, %v1830
  %v1866 = vadd.f32 %v1598, %v1832
  %v1867 = vadd.f32 %v1600, %v1834
  %v1868 = vld [vmem:[#allocation3 + $0x3] sm:$0xff]
  %v1869 = vld [vmem:[#allocation3 + $0xb] sm:$0xff]
  %v1870 = vld [vmem:[#allocation3 + $0x13] sm:$0xff]
  %v1871 = vld [vmem:[#allocation3 + $0x1b] sm:$0xff]
  %v1872 = vld [vmem:[#allocation3 + $0x23] sm:$0xff]
  %v1873 = vld [vmem:[#allocation3 + $0x2b] sm:$0xff]
  %v1874 = vld [vmem:[#allocation3 + $0x33] sm:$0xff]
  %v1875 = vld [vmem:[#allocation3 + $0x3b] sm:$0xff]
  %v1876 = vld [vmem:[#allocation3 + $0x43] sm:$0xff]
  %v1877 = vld [vmem:[#allocation3 + $0x4b] sm:$0xff]
  %v1878 = vld [vmem:[#allocation3 + $0x53] sm:$0xff]
  %v1879 = vld [vmem:[#allocation3 + $0x5b] sm:$0xff]
  %v1880 = vld [vmem:[#allocation3 + $0x63] sm:$0xff]
  %v1881 = vld [vmem:[#allocation3 + $0x6b] sm:$0xff]
  %v1882 = vld [vmem:[#allocation3 + $0x73] sm:$0xff]
  %v1883 = vld [vmem:[#allocation3 + $0x7b] sm:$0xff]
  %v1884 = vpack.c.bf16 %v1869, %v1868
  %v1885 = vpack.c.bf16 %v1871, %v1870
  %v1886 = vpack.c.bf16 %v1873, %v1872
  %v1887 = vpack.c.bf16 %v1875, %v1874
  %v1888 = vpack.c.bf16 %v1877, %v1876
  %v1889 = vpack.c.bf16 %v1879, %v1878
  %v1890 = vpack.c.bf16 %v1881, %v1880
  %v1891 = vpack.c.bf16 %v1883, %v1882
  %s1892 = scalar_lea.vmem %s4, 264
  %v1893 = vld [vmem:[%s1892] sm:$0xff]
  %v1894 = vld [vmem:[%s1892 + $0x8] sm:$0xff]
  %v1895 = vld [vmem:[%s1892 + $0x10] sm:$0xff]
  %v1896 = vld [vmem:[%s1892 + $0x18] sm:$0xff]
  %v1897 = vld [vmem:[%s1892 + $0x20] sm:$0xff]
  %v1898 = vld [vmem:[%s1892 + $0x28] sm:$0xff]
  %v1899 = vld [vmem:[%s1892 + $0x30] sm:$0xff]
  %v1900 = vld [vmem:[%s1892 + $0x38] sm:$0xff]
  %v1901 = vld [vmem:[%s1892 + $0x40] sm:$0xff]
  %v1902 = vld [vmem:[%s1892 + $0x48] sm:$0xff]
  %v1903 = vld [vmem:[%s1892 + $0x50] sm:$0x33]
  %v1915 = vunpack.c.l.b16 %v1893
  %v1916 = vunpack.c.h.b16 %v1893
  %v1917 = vunpack.c.l.b16 %v1894
  %v1918 = vunpack.c.h.b16 %v1894
  %v1919 = vunpack.c.l.b16 %v1895
  %v1920 = vunpack.c.h.b16 %v1895
  %v1921 = vunpack.c.l.b16 %v1896
  %v1922 = vunpack.c.h.b16 %v1896
  %v1923 = vunpack.c.l.b16 %v1897
  %v1924 = vunpack.c.h.b16 %v1897
  %v1925 = vunpack.c.l.b16 %v1898
  %v1926 = vunpack.c.h.b16 %v1898
  %v1927 = vunpack.c.l.b16 %v1899
  %v1928 = vunpack.c.h.b16 %v1899
  %v1929 = vunpack.c.l.b16 %v1900
  %v1930 = vunpack.c.h.b16 %v1900
  %v1931 = vunpack.c.l.b16 %v1901
  %v1932 = vunpack.c.h.b16 %v1901
  %v1933 = vunpack.c.l.b16 %v1902
  %v1934 = vunpack.c.h.b16 %v1902
  %v1935 = vunpack.c.l.b16 %v1903
  %v1936 = vunpack.c.h.b16 %v1903
  %v1937 = vpack.c.b16 %v1917, %v1915
  %v1938 = vpack.c.b16 %v1918, %v1916
  %v1939 = vpack.c.b16 %v1921, %v1919
  %v1940 = vpack.c.b16 %v1922, %v1920
  %v1941 = vpack.c.b16 %v1925, %v1923
  %v1942 = vpack.c.b16 %v1926, %v1924
  %v1943 = vpack.c.b16 %v1929, %v1927
  %v1944 = vpack.c.b16 %v1930, %v1928
  %v1945 = vpack.c.b16 %v1933, %v1931
  %v1946 = vpack.c.b16 %v1934, %v1932
  %v1947 = vpack.c.b16 %v1935, %v1935
  %v1948 = vpack.c.b16 %v1936, %v1936
  %v1960 = vsel %vm989, %v1884, 0
  %v1963 = vsel %vm989, %v1885, 0
  %v1966 = vsel %vm989, %v1886, 0
  %v1969 = vsel %vm989, %v1887, 0
  %v1972 = vsel %vm989, %v1888, 0
  %v1975 = vsel %vm989, %v1889, 0
  %v1978 = vsel %vm989, %v1890, 0
  %v1981 = vsel %vm989, %v1891, 0
  %v1984 = vsel %vm1284, %v1947, 0
  %v1987 = vsel %vm1284, %v1948, 0
  %1989 = vmatprep.subr.bf16.mxu0 0
  %1990 = vmatpush1.bf16.msra.mxu0 0
  %1991 = vmatprep.subr.bf16.mxu0 0
  %1992 = vmatpush1.bf16.msra.mxu0 0
  %1993 = vmatprep.subr.bf16.mxu0 %v1987
  %1994 = vmatpush1.bf16.msra.mxu0 %v1984
  %1995 = vmatprep.subr.bf16.mxu0 %v1946
  %1996 = vmatpush1.bf16.msra.mxu0 %v1945
  %1997 = vmatprep.subr.bf16.mxu0 %v1944
  %1998 = vmatpush1.bf16.msra.mxu0 %v1943
  %1999 = vmatprep.subr.bf16.mxu0 %v1942
  %2000 = vmatpush1.bf16.msra.mxu0 %v1941
  %2001 = vmatprep.subr.bf16.mxu0 %v1940
  %2002 = vmatpush1.bf16.msra.mxu0 %v1939
  %2003 = vmatprep.subr.bf16.mxu0 %v1938
  %2004 = vmatpush1.bf16.msra.mxu0 %v1937
  %2005 = vmatprep.subr.bf16.mxu0 0
  %2006 = vmatpush2.bf16.msra.mxu0 0
  %2007 = vmatprep.subr.bf16.mxu0 0
  %2008 = vmatpush2.bf16.msra.mxu0 0
  %2009 = vmatprep.subr.bf16.mxu0 0
  %2010 = vmatpush2.bf16.msra.mxu0 0
  %2011 = vmatprep.subr.bf16.mxu0 0
  %2012 = vmatpush2.bf16.msra.mxu0 0
  %2013 = vmatprep.subr.bf16.mxu0 0
  %2014 = vmatpush2.bf16.msra.mxu0 0
  %2015 = vmatprep.subr.bf16.mxu0 0
  %2016 = vmatpush2.bf16.msra.mxu0 0
  %2017 = vmatprep.subr.bf16.mxu0 0
  %2018 = vmatpush2.bf16.msra.mxu0 0
  %2019 = vmatprep.subr.bf16.mxu0 0
  %2020 = vmatpush2.bf16.msra.mxu0 0
  %2021 = vmatprep.mubr.bf16.mxu0 0
  %2022 = vmatmul.mubr.bf16.gmra.mxu0 %v1960
  %v2023 = vpop.f32.mrf.mxu0
  %v2024 = vadd.f32 0.0, %v2023
  %v2025 = vpop.f32.mrf.mxu0
  %v2026 = vadd.f32 0.0, %v2025
  %v2027 = vpop.f32.mrf.mxu0
  %v2028 = vadd.f32 0.0, %v2027
  %v2029 = vpop.f32.mrf.mxu0
  %v2030 = vadd.f32 0.0, %v2029
  %2031 = vmatprep.mubr.bf16.mxu0 0
  %2032 = vmatmul.mubr.bf16.gmra.mxu0 %v1963
  %v2033 = vpop.f32.mrf.mxu0
  %v2034 = vadd.f32 0.0, %v2033
  %v2035 = vpop.f32.mrf.mxu0
  %v2036 = vadd.f32 0.0, %v2035
  %v2037 = vpop.f32.mrf.mxu0
  %v2038 = vadd.f32 0.0, %v2037
  %v2039 = vpop.f32.mrf.mxu0
  %v2040 = vadd.f32 0.0, %v2039
  %2041 = vmatprep.mubr.bf16.mxu0 0
  %2042 = vmatmul.mubr.bf16.gmra.mxu0 %v1966
  %v2043 = vpop.f32.mrf.mxu0
  %v2044 = vadd.f32 0.0, %v2043
  %v2045 = vpop.f32.mrf.mxu0
  %v2046 = vadd.f32 0.0, %v2045
  %v2047 = vpop.f32.mrf.mxu0
  %v2048 = vadd.f32 0.0, %v2047
  %v2049 = vpop.f32.mrf.mxu0
  %v2050 = vadd.f32 0.0, %v2049
  %2051 = vmatprep.mubr.bf16.mxu0 0
  %2052 = vmatmul.mubr.bf16.gmra.mxu0 %v1969
  %v2053 = vpop.f32.mrf.mxu0
  %v2054 = vadd.f32 0.0, %v2053
  %v2055 = vpop.f32.mrf.mxu0
  %v2056 = vadd.f32 0.0, %v2055
  %v2057 = vpop.f32.mrf.mxu0
  %v2058 = vadd.f32 0.0, %v2057
  %v2059 = vpop.f32.mrf.mxu0
  %v2060 = vadd.f32 0.0, %v2059
  %2061 = vmatprep.mubr.bf16.mxu0 0
  %2062 = vmatmul.mubr.bf16.gmra.mxu0 %v1972
  %v2063 = vpop.f32.mrf.mxu0
  %v2064 = vadd.f32 0.0, %v2063
  %v2065 = vpop.f32.mrf.mxu0
  %v2066 = vadd.f32 0.0, %v2065
  %v2067 = vpop.f32.mrf.mxu0
  %v2068 = vadd.f32 0.0, %v2067
  %v2069 = vpop.f32.mrf.mxu0
  %v2070 = vadd.f32 0.0, %v2069
  %2071 = vmatprep.mubr.bf16.mxu0 0
  %2072 = vmatmul.mubr.bf16.gmra.mxu0 %v1975
  %v2073 = vpop.f32.mrf.mxu0
  %v2074 = vadd.f32 0.0, %v2073
  %v2075 = vpop.f32.mrf.mxu0
  %v2076 = vadd.f32 0.0, %v2075
  %v2077 = vpop.f32.mrf.mxu0
  %v2078 = vadd.f32 0.0, %v2077
  %v2079 = vpop.f32.mrf.mxu0
  %v2080 = vadd.f32 0.0, %v2079
  %2081 = vmatprep.mubr.bf16.mxu0 0
  %2082 = vmatmul.mubr.bf16.gmra.mxu0 %v1978
  %v2083 = vpop.f32.mrf.mxu0
  %v2084 = vadd.f32 0.0, %v2083
  %v2085 = vpop.f32.mrf.mxu0
  %v2086 = vadd.f32 0.0, %v2085
  %v2087 = vpop.f32.mrf.mxu0
  %v2088 = vadd.f32 0.0, %v2087
  %v2089 = vpop.f32.mrf.mxu0
  %v2090 = vadd.f32 0.0, %v2089
  %2091 = vmatprep.mubr.bf16.mxu0 0
  %2092 = vmatmul.mubr.bf16.gmra.mxu0 %v1981
  %v2093 = vpop.f32.mrf.mxu0
  %v2094 = vadd.f32 0.0, %v2093
  %v2095 = vpop.f32.mrf.mxu0
  %v2096 = vadd.f32 0.0, %v2095
  %v2097 = vpop.f32.mrf.mxu0
  %v2098 = vadd.f32 0.0, %v2097
  %v2099 = vpop.f32.mrf.mxu0
  %v2100 = vadd.f32 0.0, %v2099
  %2101 = vdwg.mxu0
  %v2102 = vadd.f32 %v1836, %v2024
  %v2103 = vadd.f32 %v1837, %v2026
  %v2104 = vadd.f32 %v1838, %v2028
  %v2105 = vadd.f32 %v1839, %v2030
  %v2106 = vadd.f32 %v1840, %v2034
  %v2107 = vadd.f32 %v1841, %v2036
  %v2108 = vadd.f32 %v1842, %v2038
  %v2109 = vadd.f32 %v1843, %v2040
  %v2110 = vadd.f32 %v1844, %v2044
  %v2111 = vadd.f32 %v1845, %v2046
  %v2112 = vadd.f32 %v1846, %v2048
  %v2113 = vadd.f32 %v1847, %v2050
  %v2114 = vadd.f32 %v1848, %v2054
  %v2115 = vadd.f32 %v1849, %v2056
  %v2116 = vadd.f32 %v1850, %v2058
  %v2117 = vadd.f32 %v1851, %v2060
  %v2118 = vadd.f32 %v1852, %v2064
  %v2119 = vadd.f32 %v1853, %v2066
  %v2120 = vadd.f32 %v1854, %v2068
  %v2121 = vadd.f32 %v1855, %v2070
  %v2122 = vadd.f32 %v1856, %v2074
  %v2123 = vadd.f32 %v1857, %v2076
  %v2124 = vadd.f32 %v1858, %v2078
  %v2125 = vadd.f32 %v1859, %v2080
  %v2126 = vadd.f32 %v1860, %v2084
  %v2127 = vadd.f32 %v1861, %v2086
  %v2128 = vadd.f32 %v1862, %v2088
  %v2129 = vadd.f32 %v1863, %v2090
  %v2130 = vadd.f32 %v1864, %v2094
  %v2131 = vadd.f32 %v1865, %v2096
  %v2132 = vadd.f32 %v1866, %v2098
  %v2133 = vadd.f32 %v1867, %v2100
  %v2134 = vld [vmem:[#allocation3 + $0x4] sm:$0xff]
  %v2135 = vld [vmem:[#allocation3 + $0xc] sm:$0xff]
  %v2136 = vld [vmem:[#allocation3 + $0x14] sm:$0xff]
  %v2137 = vld [vmem:[#allocation3 + $0x1c] sm:$0xff]
  %v2138 = vld [vmem:[#allocation3 + $0x24] sm:$0xff]
  %v2139 = vld [vmem:[#allocation3 + $0x2c] sm:$0xff]
  %v2140 = vld [vmem:[#allocation3 + $0x34] sm:$0xff]
  %v2141 = vld [vmem:[#allocation3 + $0x3c] sm:$0xff]
  %v2142 = vld [vmem:[#allocation3 + $0x44] sm:$0xff]
  %v2143 = vld [vmem:[#allocation3 + $0x4c] sm:$0xff]
  %v2144 = vld [vmem:[#allocation3 + $0x54] sm:$0xff]
  %v2145 = vld [vmem:[#allocation3 + $0x5c] sm:$0xff]
  %v2146 = vld [vmem:[#allocation3 + $0x64] sm:$0xff]
  %v2147 = vld [vmem:[#allocation3 + $0x6c] sm:$0xff]
  %v2148 = vld [vmem:[#allocation3 + $0x74] sm:$0xff]
  %v2149 = vld [vmem:[#allocation3 + $0x7c] sm:$0xff]
  %v2150 = vpack.c.bf16 %v2135, %v2134
  %v2151 = vpack.c.bf16 %v2137, %v2136
  %v2152 = vpack.c.bf16 %v2139, %v2138
  %v2153 = vpack.c.bf16 %v2141, %v2140
  %v2154 = vpack.c.bf16 %v2143, %v2142
  %v2155 = vpack.c.bf16 %v2145, %v2144
  %v2156 = vpack.c.bf16 %v2147, %v2146
  %v2157 = vpack.c.bf16 %v2149, %v2148
  %s2158 = scalar_lea.vmem %s4, 352
  %v2159 = vld [vmem:[%s2158] sm:$0xff]
  %v2160 = vld [vmem:[%s2158 + $0x8] sm:$0xff]
  %v2161 = vld [vmem:[%s2158 + $0x10] sm:$0xff]
  %v2162 = vld [vmem:[%s2158 + $0x18] sm:$0xff]
  %v2163 = vld [vmem:[%s2158 + $0x20] sm:$0xff]
  %v2164 = vld [vmem:[%s2158 + $0x28] sm:$0xff]
  %v2165 = vld [vmem:[%s2158 + $0x30] sm:$0xff]
  %v2166 = vld [vmem:[%s2158 + $0x38] sm:$0xff]
  %v2167 = vld [vmem:[%s2158 + $0x40] sm:$0xff]
  %v2168 = vld [vmem:[%s2158 + $0x48] sm:$0xff]
  %v2169 = vld [vmem:[%s2158 + $0x50] sm:$0x33]
  %v2181 = vunpack.c.l.b16 %v2159
  %v2182 = vunpack.c.h.b16 %v2159
  %v2183 = vunpack.c.l.b16 %v2160
  %v2184 = vunpack.c.h.b16 %v2160
  %v2185 = vunpack.c.l.b16 %v2161
  %v2186 = vunpack.c.h.b16 %v2161
  %v2187 = vunpack.c.l.b16 %v2162
  %v2188 = vunpack.c.h.b16 %v2162
  %v2189 = vunpack.c.l.b16 %v2163
  %v2190 = vunpack.c.h.b16 %v2163
  %v2191 = vunpack.c.l.b16 %v2164
  %v2192 = vunpack.c.h.b16 %v2164
  %v2193 = vunpack.c.l.b16 %v2165
  %v2194 = vunpack.c.h.b16 %v2165
  %v2195 = vunpack.c.l.b16 %v2166
  %v2196 = vunpack.c.h.b16 %v2166
  %v2197 = vunpack.c.l.b16 %v2167
  %v2198 = vunpack.c.h.b16 %v2167
  %v2199 = vunpack.c.l.b16 %v2168
  %v2200 = vunpack.c.h.b16 %v2168
  %v2201 = vunpack.c.l.b16 %v2169
  %v2202 = vunpack.c.h.b16 %v2169
  %v2203 = vpack.c.b16 %v2183, %v2181
  %v2204 = vpack.c.b16 %v2184, %v2182
  %v2205 = vpack.c.b16 %v2187, %v2185
  %v2206 = vpack.c.b16 %v2188, %v2186
  %v2207 = vpack.c.b16 %v2191, %v2189
  %v2208 = vpack.c.b16 %v2192, %v2190
  %v2209 = vpack.c.b16 %v2195, %v2193
  %v2210 = vpack.c.b16 %v2196, %v2194
  %v2211 = vpack.c.b16 %v2199, %v2197
  %v2212 = vpack.c.b16 %v2200, %v2198
  %v2213 = vpack.c.b16 %v2201, %v2201
  %v2214 = vpack.c.b16 %v2202, %v2202
  %v2226 = vsel %vm989, %v2150, 0
  %v2229 = vsel %vm989, %v2151, 0
  %v2232 = vsel %vm989, %v2152, 0
  %v2235 = vsel %vm989, %v2153, 0
  %v2238 = vsel %vm989, %v2154, 0
  %v2241 = vsel %vm989, %v2155, 0
  %v2244 = vsel %vm989, %v2156, 0
  %v2247 = vsel %vm989, %v2157, 0
  %v2250 = vsel %vm1284, %v2213, 0
  %v2253 = vsel %vm1284, %v2214, 0
  %2255 = vmatprep.subr.bf16.mxu0 0
  %2256 = vmatpush1.bf16.msra.mxu0 0
  %2257 = vmatprep.subr.bf16.mxu0 0
  %2258 = vmatpush1.bf16.msra.mxu0 0
  %2259 = vmatprep.subr.bf16.mxu0 %v2253
  %2260 = vmatpush1.bf16.msra.mxu0 %v2250
  %2261 = vmatprep.subr.bf16.mxu0 %v2212
  %2262 = vmatpush1.bf16.msra.mxu0 %v2211
  %2263 = vmatprep.subr.bf16.mxu0 %v2210
  %2264 = vmatpush1.bf16.msra.mxu0 %v2209
  %2265 = vmatprep.subr.bf16.mxu0 %v2208
  %2266 = vmatpush1.bf16.msra.mxu0 %v2207
  %2267 = vmatprep.subr.bf16.mxu0 %v2206
  %2268 = vmatpush1.bf16.msra.mxu0 %v2205
  %2269 = vmatprep.subr.bf16.mxu0 %v2204
  %2270 = vmatpush1.bf16.msra.mxu0 %v2203
  %2271 = vmatprep.subr.bf16.mxu0 0
  %2272 = vmatpush2.bf16.msra.mxu0 0
  %2273 = vmatprep.subr.bf16.mxu0 0
  %2274 = vmatpush2.bf16.msra.mxu0 0
  %2275 = vmatprep.subr.bf16.mxu0 0
  %2276 = vmatpush2.bf16.msra.mxu0 0
  %2277 = vmatprep.subr.bf16.mxu0 0
  %2278 = vmatpush2.bf16.msra.mxu0 0
  %2279 = vmatprep.subr.bf16.mxu0 0
  %2280 = vmatpush2.bf16.msra.mxu0 0
  %2281 = vmatprep.subr.bf16.mxu0 0
  %2282 = vmatpush2.bf16.msra.mxu0 0
  %2283 = vmatprep.subr.bf16.mxu0 0
  %2284 = vmatpush2.bf16.msra.mxu0 0
  %2285 = vmatprep.subr.bf16.mxu0 0
  %2286 = vmatpush2.bf16.msra.mxu0 0
  %2287 = vmatprep.mubr.bf16.mxu0 0
  %2288 = vmatmul.mubr.bf16.gmra.mxu0 %v2226
  %v2289 = vpop.f32.mrf.mxu0
  %v2290 = vadd.f32 0.0, %v2289
  %v2291 = vpop.f32.mrf.mxu0
  %v2292 = vadd.f32 0.0, %v2291
  %v2293 = vpop.f32.mrf.mxu0
  %v2294 = vadd.f32 0.0, %v2293
  %v2295 = vpop.f32.mrf.mxu0
  %v2296 = vadd.f32 0.0, %v2295
  %2297 = vmatprep.mubr.bf16.mxu0 0
  %2298 = vmatmul.mubr.bf16.gmra.mxu0 %v2229
  %v2299 = vpop.f32.mrf.mxu0
  %v2300 = vadd.f32 0.0, %v2299
  %v2301 = vpop.f32.mrf.mxu0
  %v2302 = vadd.f32 0.0, %v2301
  %v2303 = vpop.f32.mrf.mxu0
  %v2304 = vadd.f32 0.0, %v2303
  %v2305 = vpop.f32.mrf.mxu0
  %v2306 = vadd.f32 0.0, %v2305
  %2307 = vmatprep.mubr.bf16.mxu0 0
  %2308 = vmatmul.mubr.bf16.gmra.mxu0 %v2232
  %v2309 = vpop.f32.mrf.mxu0
  %v2310 = vadd.f32 0.0, %v2309
  %v2311 = vpop.f32.mrf.mxu0
  %v2312 = vadd.f32 0.0, %v2311
  %v2313 = vpop.f32.mrf.mxu0
  %v2314 = vadd.f32 0.0, %v2313
  %v2315 = vpop.f32.mrf.mxu0
  %v2316 = vadd.f32 0.0, %v2315
  %2317 = vmatprep.mubr.bf16.mxu0 0
  %2318 = vmatmul.mubr.bf16.gmra.mxu0 %v2235
  %v2319 = vpop.f32.mrf.mxu0
  %v2320 = vadd.f32 0.0, %v2319
  %v2321 = vpop.f32.mrf.mxu0
  %v2322 = vadd.f32 0.0, %v2321
  %v2323 = vpop.f32.mrf.mxu0
  %v2324 = vadd.f32 0.0, %v2323
  %v2325 = vpop.f32.mrf.mxu0
  %v2326 = vadd.f32 0.0, %v2325
  %2327 = vmatprep.mubr.bf16.mxu0 0
  %2328 = vmatmul.mubr.bf16.gmra.mxu0 %v2238
  %v2329 = vpop.f32.mrf.mxu0
  %v2330 = vadd.f32 0.0, %v2329
  %v2331 = vpop.f32.mrf.mxu0
  %v2332 = vadd.f32 0.0, %v2331
  %v2333 = vpop.f32.mrf.mxu0
  %v2334 = vadd.f32 0.0, %v2333
  %v2335 = vpop.f32.mrf.mxu0
  %v2336 = vadd.f32 0.0, %v2335
  %2337 = vmatprep.mubr.bf16.mxu0 0
  %2338 = vmatmul.mubr.bf16.gmra.mxu0 %v2241
  %v2339 = vpop.f32.mrf.mxu0
  %v2340 = vadd.f32 0.0, %v2339
  %v2341 = vpop.f32.mrf.mxu0
  %v2342 = vadd.f32 0.0, %v2341
  %v2343 = vpop.f32.mrf.mxu0
  %v2344 = vadd.f32 0.0, %v2343
  %v2345 = vpop.f32.mrf.mxu0
  %v2346 = vadd.f32 0.0, %v2345
  %2347 = vmatprep.mubr.bf16.mxu0 0
  %2348 = vmatmul.mubr.bf16.gmra.mxu0 %v2244
  %v2349 = vpop.f32.mrf.mxu0
  %v2350 = vadd.f32 0.0, %v2349
  %v2351 = vpop.f32.mrf.mxu0
  %v2352 = vadd.f32 0.0, %v2351
  %v2353 = vpop.f32.mrf.mxu0
  %v2354 = vadd.f32 0.0, %v2353
  %v2355 = vpop.f32.mrf.mxu0
  %v2356 = vadd.f32 0.0, %v2355
  %2357 = vmatprep.mubr.bf16.mxu0 0
  %2358 = vmatmul.mubr.bf16.gmra.mxu0 %v2247
  %v2359 = vpop.f32.mrf.mxu0
  %v2360 = vadd.f32 0.0, %v2359
  %v2361 = vpop.f32.mrf.mxu0
  %v2362 = vadd.f32 0.0, %v2361
  %v2363 = vpop.f32.mrf.mxu0
  %v2364 = vadd.f32 0.0, %v2363
  %v2365 = vpop.f32.mrf.mxu0
  %v2366 = vadd.f32 0.0, %v2365
  %2367 = vdwg.mxu0
  %v2368 = vadd.f32 %v2102, %v2290
  %v2369 = vadd.f32 %v2103, %v2292
  %v2370 = vadd.f32 %v2104, %v2294
  %v2371 = vadd.f32 %v2105, %v2296
  %v2372 = vadd.f32 %v2106, %v2300
  %v2373 = vadd.f32 %v2107, %v2302
  %v2374 = vadd.f32 %v2108, %v2304
  %v2375 = vadd.f32 %v2109, %v2306
  %v2376 = vadd.f32 %v2110, %v2310
  %v2377 = vadd.f32 %v2111, %v2312
  %v2378 = vadd.f32 %v2112, %v2314
  %v2379 = vadd.f32 %v2113, %v2316
  %v2380 = vadd.f32 %v2114, %v2320
  %v2381 = vadd.f32 %v2115, %v2322
  %v2382 = vadd.f32 %v2116, %v2324
  %v2383 = vadd.f32 %v2117, %v2326
  %v2384 = vadd.f32 %v2118, %v2330
  %v2385 = vadd.f32 %v2119, %v2332
  %v2386 = vadd.f32 %v2120, %v2334
  %v2387 = vadd.f32 %v2121, %v2336
  %v2388 = vadd.f32 %v2122, %v2340
  %v2389 = vadd.f32 %v2123, %v2342
  %v2390 = vadd.f32 %v2124, %v2344
  %v2391 = vadd.f32 %v2125, %v2346
  %v2392 = vadd.f32 %v2126, %v2350
  %v2393 = vadd.f32 %v2127, %v2352
  %v2394 = vadd.f32 %v2128, %v2354
  %v2395 = vadd.f32 %v2129, %v2356
  %v2396 = vadd.f32 %v2130, %v2360
  %v2397 = vadd.f32 %v2131, %v2362
  %v2398 = vadd.f32 %v2132, %v2364
  %v2399 = vadd.f32 %v2133, %v2366
  %v2400 = vld [vmem:[%s5] sm:$0x3]
  %v2402 = vlaneseq
  %v2403 = vshrl.u32 %v2402, 7
  %v2404 = vsub.s32 0, %v2403
  %v2405 = vrot.slane %v2400, %v2404
  %v2406 = vlaneseq
  %v2407 = vshrl.u32 %v2406, 7
  %v2408 = vsub.s32 1, %v2407
  %v2409 = vrot.slane %v2400, %v2408
  %v2412 = vadd.f32 %v2368, %v2405
  %v2413 = vadd.f32 %v2369, %v2409
  %v2414 = vadd.f32 %v2370, %v2405
  %v2415 = vadd.f32 %v2371, %v2409
  %v2416 = vadd.f32 %v2372, %v2405
  %v2417 = vadd.f32 %v2373, %v2409
  %v2418 = vadd.f32 %v2374, %v2405
  %v2419 = vadd.f32 %v2375, %v2409
  %v2420 = vadd.f32 %v2376, %v2405
  %v2421 = vadd.f32 %v2377, %v2409
  %v2422 = vadd.f32 %v2378, %v2405
  %v2423 = vadd.f32 %v2379, %v2409
  %v2424 = vadd.f32 %v2380, %v2405
  %v2425 = vadd.f32 %v2381, %v2409
  %v2426 = vadd.f32 %v2382, %v2405
  %v2427 = vadd.f32 %v2383, %v2409
  %v2428 = vadd.f32 %v2384, %v2405
  %v2429 = vadd.f32 %v2385, %v2409
  %v2430 = vadd.f32 %v2386, %v2405
  %v2431 = vadd.f32 %v2387, %v2409
  %v2432 = vadd.f32 %v2388, %v2405
  %v2433 = vadd.f32 %v2389, %v2409
  %v2434 = vadd.f32 %v2390, %v2405
  %v2435 = vadd.f32 %v2391, %v2409
  %v2436 = vadd.f32 %v2392, %v2405
  %v2437 = vadd.f32 %v2393, %v2409
  %v2438 = vadd.f32 %v2394, %v2405
  %v2439 = vadd.f32 %v2395, %v2409
  %v2440 = vadd.f32 %v2396, %v2405
  %v2441 = vadd.f32 %v2397, %v2409
  %v2442 = vadd.f32 %v2398, %v2405
  %v2443 = vadd.f32 %v2399, %v2409
  %v2444 = vtanh.pop %v2412
  %v2445 = vtanh.pop %v2413
  %v2446 = vtanh.pop %v2414
  %v2447 = vtanh.pop %v2415
  %v2448 = vtanh.pop %v2416
  %v2449 = vtanh.pop %v2417
  %v2450 = vtanh.pop %v2418
  %v2451 = vtanh.pop %v2419
  %v2452 = vtanh.pop %v2420
  %v2453 = vtanh.pop %v2421
  %v2454 = vtanh.pop %v2422
  %v2455 = vtanh.pop %v2423
  %v2456 = vtanh.pop %v2424
  %v2457 = vtanh.pop %v2425
  %v2458 = vtanh.pop %v2426
  %v2459 = vtanh.pop %v2427
  %v2460 = vtanh.pop %v2428
  %v2461 = vtanh.pop %v2429
  %v2462 = vtanh.pop %v2430
  %v2463 = vtanh.pop %v2431
  %v2464 = vtanh.pop %v2432
  %v2465 = vtanh.pop %v2433
  %v2466 = vtanh.pop %v2434
  %v2467 = vtanh.pop %v2435
  %v2468 = vtanh.pop %v2436
  %v2469 = vtanh.pop %v2437
  %v2470 = vtanh.pop %v2438
  %v2471 = vtanh.pop %v2439
  %v2472 = vtanh.pop %v2440
  %v2473 = vtanh.pop %v2441
  %v2474 = vtanh.pop %v2442
  %v2475 = vtanh.pop %v2443
  %v2476 = vpack.c.bf16 %v2446, %v2444
  %v2477 = vpack.c.bf16 %v2447, %v2445
  %v2478 = vpack.c.bf16 %v2450, %v2448
  %v2479 = vpack.c.bf16 %v2451, %v2449
  %v2480 = vpack.c.bf16 %v2454, %v2452
  %v2481 = vpack.c.bf16 %v2455, %v2453
  %v2482 = vpack.c.bf16 %v2458, %v2456
  %v2483 = vpack.c.bf16 %v2459, %v2457
  %v2484 = vpack.c.bf16 %v2462, %v2460
  %v2485 = vpack.c.bf16 %v2463, %v2461
  %v2486 = vpack.c.bf16 %v2466, %v2464
  %v2487 = vpack.c.bf16 %v2467, %v2465
  %v2488 = vpack.c.bf16 %v2470, %v2468
  %v2489 = vpack.c.bf16 %v2471, %v2469
  %v2490 = vpack.c.bf16 %v2474, %v2472
  %v2491 = vpack.c.bf16 %v2475, %v2473
  %v2492 = vld [vmem:[%s6] sm:$0xf]
  %v2493 = vld [vmem:[%s6 + $0x4] sm:$0xf]
  %v2494 = vld [vmem:[%s6 + $0x8] sm:$0xf]
  %v2495 = vld [vmem:[%s6 + $0xc] sm:$0xf]
  %v2496 = vld [vmem:[%s6 + $0x10] sm:$0xf]
  %v2497 = vld [vmem:[%s6 + $0x14] sm:$0xf]
  %v2498 = vld [vmem:[%s6 + $0x18] sm:$0xf]
  %v2499 = vld [vmem:[%s6 + $0x1c] sm:$0xf]
  %v2500 = vld [vmem:[%s6 + $0x20] sm:$0xf]
  %v2501 = vld [vmem:[%s6 + $0x24] sm:$0xf]
  %v2502 = vld [vmem:[%s6 + $0x28] sm:$0xf]
  %v2503 = vld [vmem:[%s6 + $0x2c] sm:$0xf]
  %v2504 = vld [vmem:[%s6 + $0x30] sm:$0xf]
  %v2505 = vld [vmem:[%s6 + $0x34] sm:$0xf]
  %v2506 = vld [vmem:[%s6 + $0x38] sm:$0xf]
  %v2507 = vld [vmem:[%s6 + $0x3c] sm:$0xf]
  %v2508 = vld [vmem:[%s6 + $0x40] sm:$0xf]
  %v2509 = vld [vmem:[%s6 + $0x44] sm:$0xf]
  %v2510 = vld [vmem:[%s6 + $0x48] sm:$0xf]
  %v2511 = vld [vmem:[%s6 + $0x4c] sm:$0xf]
  %v2532 = vunpack.c.l.b16 %v2492
  %v2533 = vunpack.c.l.b16 %v2493
  %v2534 = vunpack.c.l.b16 %v2494
  %v2535 = vunpack.c.l.b16 %v2495
  %v2536 = vunpack.c.l.b16 %v2496
  %v2537 = vunpack.c.l.b16 %v2497
  %v2538 = vunpack.c.l.b16 %v2498
  %v2539 = vunpack.c.l.b16 %v2499
  %v2540 = vunpack.c.l.b16 %v2500
  %v2541 = vunpack.c.l.b16 %v2501
  %v2542 = vunpack.c.l.b16 %v2502
  %v2543 = vunpack.c.l.b16 %v2503
  %v2544 = vunpack.c.l.b16 %v2504
  %v2545 = vunpack.c.l.b16 %v2505
  %v2546 = vunpack.c.l.b16 %v2506
  %v2547 = vunpack.c.l.b16 %v2507
  %v2548 = vunpack.c.l.b16 %v2508
  %v2549 = vunpack.c.l.b16 %v2509
  %v2550 = vunpack.c.l.b16 %v2510
  %v2551 = vunpack.c.l.b16 %v2511
  %v2552 = vpack.c.b16 %v2533, %v2532
  %v2553 = vpack.c.b16 %v2535, %v2534
  %v2554 = vpack.c.b16 %v2537, %v2536
  %v2555 = vpack.c.b16 %v2539, %v2538
  %v2556 = vpack.c.b16 %v2541, %v2540
  %v2557 = vpack.c.b16 %v2543, %v2542
  %v2558 = vpack.c.b16 %v2545, %v2544
  %v2559 = vpack.c.b16 %v2547, %v2546
  %v2560 = vpack.c.b16 %v2549, %v2548
  %v2561 = vpack.c.b16 %v2551, %v2550
  %v2573 = vsel %vm353, %v2477, 0
  %v2576 = vsel %vm353, %v2479, 0
  %v2579 = vsel %vm353, %v2481, 0
  %v2582 = vsel %vm353, %v2483, 0
  %v2585 = vsel %vm353, %v2485, 0
  %v2588 = vsel %vm353, %v2487, 0
  %v2591 = vsel %vm353, %v2489, 0
  %v2594 = vsel %vm353, %v2491, 0
  %2596 = vmatprep.subr.bf16.mxu0 0
  %2597 = vmatpush1.bf16.msra.mxu0 %v2559
  %2598 = vmatprep.subr.bf16.mxu0 0
  %2599 = vmatpush1.bf16.msra.mxu0 %v2558
  %2600 = vmatprep.subr.bf16.mxu0 0
  %2601 = vmatpush1.bf16.msra.mxu0 %v2557
  %2602 = vmatprep.subr.bf16.mxu0 0
  %2603 = vmatpush1.bf16.msra.mxu0 %v2556
  %2604 = vmatprep.subr.bf16.mxu0 0
  %2605 = vmatpush1.bf16.msra.mxu0 %v2555
  %2606 = vmatprep.subr.bf16.mxu0 0
  %2607 = vmatpush1.bf16.msra.mxu0 %v2554
  %2608 = vmatprep.subr.bf16.mxu0 0
  %2609 = vmatpush1.bf16.msra.mxu0 %v2553
  %2610 = vmatprep.subr.bf16.mxu0 0
  %2611 = vmatpush1.bf16.msra.mxu0 %v2552
  %2612 = vmatprep.subr.bf16.mxu0 0
  %2613 = vmatpush2.bf16.msra.mxu0 0
  %2614 = vmatprep.subr.bf16.mxu0 0
  %2615 = vmatpush2.bf16.msra.mxu0 0
  %2616 = vmatprep.subr.bf16.mxu0 0
  %2617 = vmatpush2.bf16.msra.mxu0 0
  %2618 = vmatprep.subr.bf16.mxu0 0
  %2619 = vmatpush2.bf16.msra.mxu0 0
  %2620 = vmatprep.subr.bf16.mxu0 0
  %2621 = vmatpush2.bf16.msra.mxu0 0
  %2622 = vmatprep.subr.bf16.mxu0 0
  %2623 = vmatpush2.bf16.msra.mxu0 0
  %2624 = vmatprep.subr.bf16.mxu0 0
  %2625 = vmatpush2.bf16.msra.mxu0 %v2561
  %2626 = vmatprep.subr.bf16.mxu0 0
  %2627 = vmatpush2.bf16.msra.mxu0 %v2560
  %2628 = vmatprep.mubr.bf16.mxu0 %v2573
  %2629 = vmatmul.mubr.bf16.gmra.mxu0 %v2476
  %v2630 = vpop.f32.mrf.mxu0
  %v2631 = vadd.f32 0.0, %v2630
  %v2632 = vpop.f32.mrf.mxu0
  %v2633 = vpop.f32.mrf.mxu0
  %v2634 = vadd.f32 0.0, %v2633
  %v2635 = vpop.f32.mrf.mxu0
  %2636 = vmatprep.mubr.bf16.mxu0 %v2576
  %2637 = vmatmul.mubr.bf16.gmra.mxu0 %v2478
  %v2638 = vpop.f32.mrf.mxu0
  %v2639 = vadd.f32 0.0, %v2638
  %v2640 = vpop.f32.mrf.mxu0
  %v2641 = vpop.f32.mrf.mxu0
  %v2642 = vadd.f32 0.0, %v2641
  %v2643 = vpop.f32.mrf.mxu0
  %2644 = vmatprep.mubr.bf16.mxu0 %v2579
  %2645 = vmatmul.mubr.bf16.gmra.mxu0 %v2480
  %v2646 = vpop.f32.mrf.mxu0
  %v2647 = vadd.f32 0.0, %v2646
  %v2648 = vpop.f32.mrf.mxu0
  %v2649 = vpop.f32.mrf.mxu0
  %v2650 = vadd.f32 0.0, %v2649
  %v2651 = vpop.f32.mrf.mxu0
  %2652 = vmatprep.mubr.bf16.mxu0 %v2582
  %2653 = vmatmul.mubr.bf16.gmra.mxu0 %v2482
  %v2654 = vpop.f32.mrf.mxu0
  %v2655 = vadd.f32 0.0, %v2654
  %v2656 = vpop.f32.mrf.mxu0
  %v2657 = vpop.f32.mrf.mxu0
  %v2658 = vadd.f32 0.0, %v2657
  %v2659 = vpop.f32.mrf.mxu0
  %2660 = vmatprep.mubr.bf16.mxu0 %v2585
  %2661 = vmatmul.mubr.bf16.gmra.mxu0 %v2484
  %v2662 = vpop.f32.mrf.mxu0
  %v2663 = vadd.f32 0.0, %v2662
  %v2664 = vpop.f32.mrf.mxu0
  %v2665 = vpop.f32.mrf.mxu0
  %v2666 = vadd.f32 0.0, %v2665
  %v2667 = vpop.f32.mrf.mxu0
  %2668 = vmatprep.mubr.bf16.mxu0 %v2588
  %2669 = vmatmul.mubr.bf16.gmra.mxu0 %v2486
  %v2670 = vpop.f32.mrf.mxu0
  %v2671 = vadd.f32 0.0, %v2670
  %v2672 = vpop.f32.mrf.mxu0
  %v2673 = vpop.f32.mrf.mxu0
  %v2674 = vadd.f32 0.0, %v2673
  %v2675 = vpop.f32.mrf.mxu0
  %2676 = vmatprep.mubr.bf16.mxu0 %v2591
  %2677 = vmatmul.mubr.bf16.gmra.mxu0 %v2488
  %v2678 = vpop.f32.mrf.mxu0
  %v2679 = vadd.f32 0.0, %v2678
  %v2680 = vpop.f32.mrf.mxu0
  %v2681 = vpop.f32.mrf.mxu0
  %v2682 = vadd.f32 0.0, %v2681
  %v2683 = vpop.f32.mrf.mxu0
  %2684 = vmatprep.mubr.bf16.mxu0 %v2594
  %2685 = vmatmul.mubr.bf16.gmra.mxu0 %v2490
  %v2686 = vpop.f32.mrf.mxu0
  %v2687 = vadd.f32 0.0, %v2686
  %v2688 = vpop.f32.mrf.mxu0
  %v2689 = vpop.f32.mrf.mxu0
  %v2690 = vadd.f32 0.0, %v2689
  %v2691 = vpop.f32.mrf.mxu0
  %2692 = vdwg.mxu0
  %vm2693 = vcmask 654336
  %2694 = vst.msk [vmem:[#allocation4] sm:$0xff] %vm2693, %v2631
  %2695 = vst.msk [vmem:[#allocation4 + $0x8] sm:$0xff] %vm2693, %v2634
  %2696 = vst.msk [vmem:[#allocation4 + $0x10] sm:$0xff] %vm2693, %v2639
  %2697 = vst.msk [vmem:[#allocation4 + $0x18] sm:$0xff] %vm2693, %v2642
  %2698 = vst.msk [vmem:[#allocation4 + $0x20] sm:$0xff] %vm2693, %v2647
  %2699 = vst.msk [vmem:[#allocation4 + $0x28] sm:$0xff] %vm2693, %v2650
  %2700 = vst.msk [vmem:[#allocation4 + $0x30] sm:$0xff] %vm2693, %v2655
  %2701 = vst.msk [vmem:[#allocation4 + $0x38] sm:$0xff] %vm2693, %v2658
  %2702 = vst.msk [vmem:[#allocation4 + $0x40] sm:$0xff] %vm2693, %v2663
  %2703 = vst.msk [vmem:[#allocation4 + $0x48] sm:$0xff] %vm2693, %v2666
  %2704 = vst.msk [vmem:[#allocation4 + $0x50] sm:$0xff] %vm2693, %v2671
  %2705 = vst.msk [vmem:[#allocation4 + $0x58] sm:$0xff] %vm2693, %v2674
  %2706 = vst.msk [vmem:[#allocation4 + $0x60] sm:$0xff] %vm2693, %v2679
  %2707 = vst.msk [vmem:[#allocation4 + $0x68] sm:$0xff] %vm2693, %v2682
  %2708 = vst.msk [vmem:[#allocation4 + $0x70] sm:$0xff] %vm2693, %v2687
  %2709 = vst.msk [vmem:[#allocation4 + $0x78] sm:$0xff] %vm2693, %v2690
  %v2710 = vld [vmem:[#allocation4] ss:$16 sm:$0x3]
  %v2711 = vld [vmem:[#allocation4] ss:$16 sm:$0xc]
  %v2712 = vor.u32 %v2710, %v2711
  %v2713 = vld [vmem:[#allocation4] ss:$16 sm:$0x30]
  %v2714 = vor.u32 %v2712, %v2713
  %v2715 = vld [vmem:[#allocation4] ss:$16 sm:$0xc0]
  %v2716 = vor.u32 %v2714, %v2715
  %s2717 = scalar_lea.vmem [#allocation4], 1
  %v2718 = vld [vmem:[%s2717] ss:$16 sm:$0x3]
  %v2719 = vld [vmem:[%s2717] ss:$16 sm:$0xc]
  %v2720 = vor.u32 %v2718, %v2719
  %v2721 = vld [vmem:[%s2717] ss:$16 sm:$0x30]
  %v2722 = vor.u32 %v2720, %v2721
  %v2723 = vld [vmem:[%s2717] ss:$16 sm:$0xc0]
  %v2724 = vor.u32 %v2722, %v2723
  %v2725 = vadd.f32 %v2716, %v2724
  %v2726 = vmul.f32 %v2725, 0.5
  %v2727 = vpack.c.bf16 %v2726, %v2726
  %v2728 = vld [vmem:[%s7] sm:$0xf]
  %v2729 = vld [vmem:[%s7 + $0x4] sm:$0xf]
  %v2730 = vld [vmem:[%s7 + $0x8] sm:$0xf]
  %v2731 = vld [vmem:[%s7 + $0xc] sm:$0xf]
  %v2732 = vld [vmem:[%s7 + $0x10] sm:$0xf]
  %v2733 = vld [vmem:[%s7 + $0x14] sm:$0xf]
  %v2734 = vld [vmem:[%s7 + $0x18] sm:$0xf]
  %v2735 = vld [vmem:[%s7 + $0x1c] sm:$0xf]
  %v2736 = vld [vmem:[%s7 + $0x20] sm:$0xf]
  %v2737 = vld [vmem:[%s7 + $0x24] sm:$0xf]
  %s2738 = scalar_lea.vmem [#allocation4], 2
  %v2739 = vld [vmem:[%s2738] ss:$16 sm:$0x3]
  %v2740 = vld [vmem:[%s2738] ss:$16 sm:$0xc]
  %v2741 = vor.u32 %v2739, %v2740
  %v2742 = vld [vmem:[%s2738] ss:$16 sm:$0x30]
  %v2743 = vor.u32 %v2741, %v2742
  %v2744 = vld [vmem:[%s2738] ss:$16 sm:$0xc0]
  %v2745 = vor.u32 %v2743, %v2744
  %s2746 = scalar_lea.vmem [#allocation4], 3
  %v2747 = vld [vmem:[%s2746] ss:$16 sm:$0x3]
  %v2748 = vld [vmem:[%s2746] ss:$16 sm:$0xc]
  %v2749 = vor.u32 %v2747, %v2748
  %v2750 = vld [vmem:[%s2746] ss:$16 sm:$0x30]
  %v2751 = vor.u32 %v2749, %v2750
  %v2752 = vld [vmem:[%s2746] ss:$16 sm:$0xc0]
  %v2753 = vor.u32 %v2751, %v2752
  %v2754 = vadd.f32 %v2745, %v2753
  %v2755 = vmul.f32 %v2754, 0.5
  %v2756 = vpack.c.bf16 %v2755, %v2755
  %s2757 = scalar_lea.vmem %s7, 40
  %v2758 = vld [vmem:[%s2757] sm:$0xf]
  %v2759 = vld [vmem:[%s2757 + $0x4] sm:$0xf]
  %v2760 = vld [vmem:[%s2757 + $0x8] sm:$0xf]
  %v2761 = vld [vmem:[%s2757 + $0xc] sm:$0xf]
  %v2762 = vld [vmem:[%s2757 + $0x10] sm:$0xf]
  %v2763 = vld [vmem:[%s2757 + $0x14] sm:$0xf]
  %v2764 = vld [vmem:[%s2757 + $0x18] sm:$0xf]
  %v2765 = vld [vmem:[%s2757 + $0x1c] sm:$0xf]
  %v2766 = vld [vmem:[%s2757 + $0x20] sm:$0xf]
  %v2767 = vld [vmem:[%s2757 + $0x24] sm:$0xf]
  %v2778 = vunpack.c.l.b16 %v2758
  %v2779 = vunpack.c.l.b16 %v2759
  %v2780 = vunpack.c.l.b16 %v2760
  %v2781 = vunpack.c.l.b16 %v2761
  %v2782 = vunpack.c.l.b16 %v2762
  %v2783 = vunpack.c.l.b16 %v2763
  %v2784 = vunpack.c.l.b16 %v2764
  %v2785 = vunpack.c.l.b16 %v2765
  %v2786 = vunpack.c.l.b16 %v2766
  %v2787 = vunpack.c.l.b16 %v2767
  %v2788 = vpack.c.b16 %v2779, %v2778
  %v2789 = vpack.c.b16 %v2781, %v2780
  %v2790 = vpack.c.b16 %v2783, %v2782
  %v2791 = vpack.c.b16 %v2785, %v2784
  %v2792 = vpack.c.b16 %v2787, %v2786
  %v2799 = vsel %vm2693, %v2756, 0
  %2801 = vmatprep.subr.bf16.mxu0 0
  %2802 = vmatpush1.bf16.msra.mxu0 0
  %2803 = vmatprep.subr.bf16.mxu0 0
  %2804 = vmatpush1.bf16.msra.mxu0 0
  %2805 = vmatprep.subr.bf16.mxu0 0
  %2806 = vmatpush1.bf16.msra.mxu0 0
  %2807 = vmatprep.subr.bf16.mxu0 0
  %2808 = vmatpush1.bf16.msra.mxu0 %v2792
  %2809 = vmatprep.subr.bf16.mxu0 0
  %2810 = vmatpush1.bf16.msra.mxu0 %v2791
  %2811 = vmatprep.subr.bf16.mxu0 0
  %2812 = vmatpush1.bf16.msra.mxu0 %v2790
  %2813 = vmatprep.subr.bf16.mxu0 0
  %2814 = vmatpush1.bf16.msra.mxu0 %v2789
  %2815 = vmatprep.subr.bf16.mxu0 0
  %2816 = vmatpush1.bf16.msra.mxu0 %v2788
  %2817 = vmatprep.subr.bf16.mxu0 0
  %2818 = vmatpush2.bf16.msra.mxu0 0
  %2819 = vmatprep.subr.bf16.mxu0 0
  %2820 = vmatpush2.bf16.msra.mxu0 0
  %2821 = vmatprep.subr.bf16.mxu0 0
  %2822 = vmatpush2.bf16.msra.mxu0 0
  %2823 = vmatprep.subr.bf16.mxu0 0
  %2824 = vmatpush2.bf16.msra.mxu0 0
  %2825 = vmatprep.subr.bf16.mxu0 0
  %2826 = vmatpush2.bf16.msra.mxu0 0
  %2827 = vmatprep.subr.bf16.mxu0 0
  %2828 = vmatpush2.bf16.msra.mxu0 0
  %2829 = vmatprep.subr.bf16.mxu0 0
  %2830 = vmatpush2.bf16.msra.mxu0 0
  %2831 = vmatprep.subr.bf16.mxu0 0
  %2832 = vmatpush2.bf16.msra.mxu0 0
  %2833 = vmatprep.mubr.bf16.mxu0 0
  %2834 = vmatmul.mubr.bf16.gmra.mxu0 %v2799
  %v2835 = vpop.f32.mrf.mxu0
  %v2836 = vadd.f32 0.0, %v2835
  %v2837 = vpop.f32.mrf.mxu0
  %v2838 = vpop.f32.mrf.mxu0
  %v2839 = vpop.f32.mrf.mxu0
  %2840 = vdwg.mxu0
  %v2851 = vunpack.c.l.b16 %v2728
  %v2852 = vunpack.c.l.b16 %v2729
  %v2853 = vunpack.c.l.b16 %v2730
  %v2854 = vunpack.c.l.b16 %v2731
  %v2855 = vunpack.c.l.b16 %v2732
  %v2856 = vunpack.c.l.b16 %v2733
  %v2857 = vunpack.c.l.b16 %v2734
  %v2858 = vunpack.c.l.b16 %v2735
  %v2859 = vunpack.c.l.b16 %v2736
  %v2860 = vunpack.c.l.b16 %v2737
  %v2861 = vpack.c.b16 %v2852, %v2851
  %v2862 = vpack.c.b16 %v2854, %v2853
  %v2863 = vpack.c.b16 %v2856, %v2855
  %v2864 = vpack.c.b16 %v2858, %v2857
  %v2865 = vpack.c.b16 %v2860, %v2859
  %v2872 = vsel %vm2693, %v2727, 0
  %2874 = vmatprep.subr.bf16.mxu0 0
  %2875 = vmatpush1.bf16.msra.mxu0 0
  %2876 = vmatprep.subr.bf16.mxu0 0
  %2877 = vmatpush1.bf16.msra.mxu0 0
  %2878 = vmatprep.subr.bf16.mxu0 0
  %2879 = vmatpush1.bf16.msra.mxu0 0
  %2880 = vmatprep.subr.bf16.mxu0 0
  %2881 = vmatpush1.bf16.msra.mxu0 %v2865
  %2882 = vmatprep.subr.bf16.mxu0 0
  %2883 = vmatpush1.bf16.msra.mxu0 %v2864
  %2884 = vmatprep.subr.bf16.mxu0 0
  %2885 = vmatpush1.bf16.msra.mxu0 %v2863
  %2886 = vmatprep.subr.bf16.mxu0 0
  %2887 = vmatpush1.bf16.msra.mxu0 %v2862
  %2888 = vmatprep.subr.bf16.mxu0 0
  %2889 = vmatpush1.bf16.msra.mxu0 %v2861
  %2890 = vmatprep.subr.bf16.mxu0 0
  %2891 = vmatpush2.bf16.msra.mxu0 0
  %2892 = vmatprep.subr.bf16.mxu0 0
  %2893 = vmatpush2.bf16.msra.mxu0 0
  %2894 = vmatprep.subr.bf16.mxu0 0
  %2895 = vmatpush2.bf16.msra.mxu0 0
  %2896 = vmatprep.subr.bf16.mxu0 0
  %2897 = vmatpush2.bf16.msra.mxu0 0
  %2898 = vmatprep.subr.bf16.mxu0 0
  %2899 = vmatpush2.bf16.msra.mxu0 0
  %2900 = vmatprep.subr.bf16.mxu0 0
  %2901 = vmatpush2.bf16.msra.mxu0 0
  %2902 = vmatprep.subr.bf16.mxu0 0
  %2903 = vmatpush2.bf16.msra.mxu0 0
  %2904 = vmatprep.subr.bf16.mxu0 0
  %2905 = vmatpush2.bf16.msra.mxu0 0
  %2906 = vmatprep.mubr.bf16.mxu0 0
  %2907 = vmatmul.mubr.bf16.gmra.mxu0 %v2872
  %v2908 = vpop.f32.mrf.mxu0
  %v2909 = vadd.f32 %v2836, %v2908
  %v2910 = vpop.f32.mrf.mxu0
  %v2911 = vpop.f32.mrf.mxu0
  %v2912 = vpop.f32.mrf.mxu0
  %2913 = vdwg.mxu0
  %s2914 = scalar_lea.vmem [#allocation4], 4
  %v2915 = vld [vmem:[%s2914] ss:$16 sm:$0x3]
  %v2916 = vld [vmem:[%s2914] ss:$16 sm:$0xc]
  %v2917 = vor.u32 %v2915, %v2916
  %v2918 = vld [vmem:[%s2914] ss:$16 sm:$0x30]
  %v2919 = vor.u32 %v2917, %v2918
  %v2920 = vld [vmem:[%s2914] ss:$16 sm:$0xc0]
  %v2921 = vor.u32 %v2919, %v2920
  %s2922 = scalar_lea.vmem [#allocation4], 5
  %v2923 = vld [vmem:[%s2922] ss:$16 sm:$0x3]
  %v2924 = vld [vmem:[%s2922] ss:$16 sm:$0xc]
  %v2925 = vor.u32 %v2923, %v2924
  %v2926 = vld [vmem:[%s2922] ss:$16 sm:$0x30]
  %v2927 = vor.u32 %v2925, %v2926
  %v2928 = vld [vmem:[%s2922] ss:$16 sm:$0xc0]
  %v2929 = vor.u32 %v2927, %v2928
  %v2930 = vadd.f32 %v2921, %v2929
  %v2931 = vmul.f32 %v2930, 0.5
  %v2932 = vpack.c.bf16 %v2931, %v2931
  %s2933 = scalar_lea.vmem %s7, 80
  %v2934 = vld [vmem:[%s2933] sm:$0xf]
  %v2935 = vld [vmem:[%s2933 + $0x4] sm:$0xf]
  %v2936 = vld [vmem:[%s2933 + $0x8] sm:$0xf]
  %v2937 = vld [vmem:[%s2933 + $0xc] sm:$0xf]
  %v2938 = vld [vmem:[%s2933 + $0x10] sm:$0xf]
  %v2939 = vld [vmem:[%s2933 + $0x14] sm:$0xf]
  %v2940 = vld [vmem:[%s2933 + $0x18] sm:$0xf]
  %v2941 = vld [vmem:[%s2933 + $0x1c] sm:$0xf]
  %v2942 = vld [vmem:[%s2933 + $0x20] sm:$0xf]
  %v2943 = vld [vmem:[%s2933 + $0x24] sm:$0xf]
  %v2954 = vunpack.c.l.b16 %v2934
  %v2955 = vunpack.c.l.b16 %v2935
  %v2956 = vunpack.c.l.b16 %v2936
  %v2957 = vunpack.c.l.b16 %v2937
  %v2958 = vunpack.c.l.b16 %v2938
  %v2959 = vunpack.c.l.b16 %v2939
  %v2960 = vunpack.c.l.b16 %v2940
  %v2961 = vunpack.c.l.b16 %v2941
  %v2962 = vunpack.c.l.b16 %v2942
  %v2963 = vunpack.c.l.b16 %v2943
  %v2964 = vpack.c.b16 %v2955, %v2954
  %v2965 = vpack.c.b16 %v2957, %v2956
  %v2966 = vpack.c.b16 %v2959, %v2958
  %v2967 = vpack.c.b16 %v2961, %v2960
  %v2968 = vpack.c.b16 %v2963, %v2962
  %v2975 = vsel %vm2693, %v2932, 0
  %2977 = vmatprep.subr.bf16.mxu0 0
  %2978 = vmatpush1.bf16.msra.mxu0 0
  %2979 = vmatprep.subr.bf16.mxu0 0
  %2980 = vmatpush1.bf16.msra.mxu0 0
  %2981 = vmatprep.subr.bf16.mxu0 0
  %2982 = vmatpush1.bf16.msra.mxu0 0
  %2983 = vmatprep.subr.bf16.mxu0 0
  %2984 = vmatpush1.bf16.msra.mxu0 %v2968
  %2985 = vmatprep.subr.bf16.mxu0 0
  %2986 = vmatpush1.bf16.msra.mxu0 %v2967
  %2987 = vmatprep.subr.bf16.mxu0 0
  %2988 = vmatpush1.bf16.msra.mxu0 %v2966
  %2989 = vmatprep.subr.bf16.mxu0 0
  %2990 = vmatpush1.bf16.msra.mxu0 %v2965
  %2991 = vmatprep.subr.bf16.mxu0 0
  %2992 = vmatpush1.bf16.msra.mxu0 %v2964
  %2993 = vmatprep.subr.bf16.mxu0 0
  %2994 = vmatpush2.bf16.msra.mxu0 0
  %2995 = vmatprep.subr.bf16.mxu0 0
  %2996 = vmatpush2.bf16.msra.mxu0 0
  %2997 = vmatprep.subr.bf16.mxu0 0
  %2998 = vmatpush2.bf16.msra.mxu0 0
  %2999 = vmatprep.subr.bf16.mxu0 0
  %3000 = vmatpush2.bf16.msra.mxu0 0
  %3001 = vmatprep.subr.bf16.mxu0 0
  %3002 = vmatpush2.bf16.msra.mxu0 0
  %3003 = vmatprep.subr.bf16.mxu0 0
  %3004 = vmatpush2.bf16.msra.mxu0 0
  %3005 = vmatprep.subr.bf16.mxu0 0
  %3006 = vmatpush2.bf16.msra.mxu0 0
  %3007 = vmatprep.subr.bf16.mxu0 0
  %3008 = vmatpush2.bf16.msra.mxu0 0
  %3009 = vmatprep.mubr.bf16.mxu0 0
  %3010 = vmatmul.mubr.bf16.gmra.mxu0 %v2975
  %v3011 = vpop.f32.mrf.mxu0
  %v3012 = vadd.f32 0.0, %v3011
  %v3013 = vpop.f32.mrf.mxu0
  %v3014 = vpop.f32.mrf.mxu0
  %v3015 = vpop.f32.mrf.mxu0
  %3016 = vdwg.mxu0
  %v3017 = vadd.f32 %v2909, %v3012
  %s3018 = scalar_lea.vmem [#allocation4], 6
  %v3019 = vld [vmem:[%s3018] ss:$16 sm:$0x3]
  %v3020 = vld [vmem:[%s3018] ss:$16 sm:$0xc]
  %v3021 = vor.u32 %v3019, %v3020
  %v3022 = vld [vmem:[%s3018] ss:$16 sm:$0x30]
  %v3023 = vor.u32 %v3021, %v3022
  %v3024 = vld [vmem:[%s3018] ss:$16 sm:$0xc0]
  %v3025 = vor.u32 %v3023, %v3024
  %s3026 = scalar_lea.vmem [#allocation4], 7
  %v3027 = vld [vmem:[%s3026] ss:$16 sm:$0x3]
  %v3028 = vld [vmem:[%s3026] ss:$16 sm:$0xc]
  %v3029 = vor.u32 %v3027, %v3028
  %v3030 = vld [vmem:[%s3026] ss:$16 sm:$0x30]
  %v3031 = vor.u32 %v3029, %v3030
  %v3032 = vld [vmem:[%s3026] ss:$16 sm:$0xc0]
  %v3033 = vor.u32 %v3031, %v3032
  %v3034 = vadd.f32 %v3025, %v3033
  %v3035 = vmul.f32 %v3034, 0.5
  %v3036 = vpack.c.bf16 %v3035, %v3035
  %s3037 = scalar_lea.vmem %s7, 120
  %v3038 = vld [vmem:[%s3037] sm:$0xf]
  %v3039 = vld [vmem:[%s3037 + $0x4] sm:$0xf]
  %v3040 = vld [vmem:[%s3037 + $0x8] sm:$0xf]
  %v3041 = vld [vmem:[%s3037 + $0xc] sm:$0xf]
  %v3042 = vld [vmem:[%s3037 + $0x10] sm:$0xf]
  %v3043 = vld [vmem:[%s3037 + $0x14] sm:$0xf]
  %v3044 = vld [vmem:[%s3037 + $0x18] sm:$0xf]
  %v3045 = vld [vmem:[%s3037 + $0x1c] sm:$0xf]
  %v3046 = vld [vmem:[%s3037 + $0x20] sm:$0xf]
  %v3047 = vld [vmem:[%s3037 + $0x24] sm:$0xf]
  %v3058 = vunpack.c.l.b16 %v3038
  %v3059 = vunpack.c.l.b16 %v3039
  %v3060 = vunpack.c.l.b16 %v3040
  %v3061 = vunpack.c.l.b16 %v3041
  %v3062 = vunpack.c.l.b16 %v3042
  %v3063 = vunpack.c.l.b16 %v3043
  %v3064 = vunpack.c.l.b16 %v3044
  %v3065 = vunpack.c.l.b16 %v3045
  %v3066 = vunpack.c.l.b16 %v3046
  %v3067 = vunpack.c.l.b16 %v3047
  %v3068 = vpack.c.b16 %v3059, %v3058
  %v3069 = vpack.c.b16 %v3061, %v3060
  %v3070 = vpack.c.b16 %v3063, %v3062
  %v3071 = vpack.c.b16 %v3065, %v3064
  %v3072 = vpack.c.b16 %v3067, %v3066
  %v3079 = vsel %vm2693, %v3036, 0
  %3081 = vmatprep.subr.bf16.mxu0 0
  %3082 = vmatpush1.bf16.msra.mxu0 0
  %3083 = vmatprep.subr.bf16.mxu0 0
  %3084 = vmatpush1.bf16.msra.mxu0 0
  %3085 = vmatprep.subr.bf16.mxu0 0
  %3086 = vmatpush1.bf16.msra.mxu0 0
  %3087 = vmatprep.subr.bf16.mxu0 0
  %3088 = vmatpush1.bf16.msra.mxu0 %v3072
  %3089 = vmatprep.subr.bf16.mxu0 0
  %3090 = vmatpush1.bf16.msra.mxu0 %v3071
  %3091 = vmatprep.subr.bf16.mxu0 0
  %3092 = vmatpush1.bf16.msra.mxu0 %v3070
  %3093 = vmatprep.subr.bf16.mxu0 0
  %3094 = vmatpush1.bf16.msra.mxu0 %v3069
  %3095 = vmatprep.subr.bf16.mxu0 0
  %3096 = vmatpush1.bf16.msra.mxu0 %v3068
  %3097 = vmatprep.subr.bf16.mxu0 0
  %3098 = vmatpush2.bf16.msra.mxu0 0
  %3099 = vmatprep.subr.bf16.mxu0 0
  %3100 = vmatpush2.bf16.msra.mxu0 0
  %3101 = vmatprep.subr.bf16.mxu0 0
  %3102 = vmatpush2.bf16.msra.mxu0 0
  %3103 = vmatprep.subr.bf16.mxu0 0
  %3104 = vmatpush2.bf16.msra.mxu0 0
  %3105 = vmatprep.subr.bf16.mxu0 0
  %3106 = vmatpush2.bf16.msra.mxu0 0
  %3107 = vmatprep.subr.bf16.mxu0 0
  %3108 = vmatpush2.bf16.msra.mxu0 0
  %3109 = vmatprep.subr.bf16.mxu0 0
  %3110 = vmatpush2.bf16.msra.mxu0 0
  %3111 = vmatprep.subr.bf16.mxu0 0
  %3112 = vmatpush2.bf16.msra.mxu0 0
  %3113 = vmatprep.mubr.bf16.mxu0 0
  %3114 = vmatmul.mubr.bf16.gmra.mxu0 %v3079
  %v3115 = vpop.f32.mrf.mxu0
  %v3116 = vadd.f32 0.0, %v3115
  %v3117 = vpop.f32.mrf.mxu0
  %v3118 = vpop.f32.mrf.mxu0
  %v3119 = vpop.f32.mrf.mxu0
  %3120 = vdwg.mxu0
  %v3121 = vadd.f32 %v3017, %v3116
  %s3122 = scalar_lea.vmem [#allocation4], 8
  %v3123 = vld [vmem:[%s3122] ss:$16 sm:$0x3]
  %v3124 = vld [vmem:[%s3122] ss:$16 sm:$0xc]
  %v3125 = vor.u32 %v3123, %v3124
  %v3126 = vld [vmem:[%s3122] ss:$16 sm:$0x30]
  %v3127 = vor.u32 %v3125, %v3126
  %v3128 = vld [vmem:[%s3122] ss:$16 sm:$0xc0]
  %v3129 = vor.u32 %v3127, %v3128
  %s3130 = scalar_lea.vmem [#allocation4], 9
  %v3131 = vld [vmem:[%s3130] ss:$16 sm:$0x3]
  %v3132 = vld [vmem:[%s3130] ss:$16 sm:$0xc]
  %v3133 = vor.u32 %v3131, %v3132
  %v3134 = vld [vmem:[%s3130] ss:$16 sm:$0x30]
  %v3135 = vor.u32 %v3133, %v3134
  %v3136 = vld [vmem:[%s3130] ss:$16 sm:$0xc0]
  %v3137 = vor.u32 %v3135, %v3136
  %v3138 = vadd.f32 %v3129, %v3137
  %v3139 = vmul.f32 %v3138, 0.5
  %v3140 = vpack.c.bf16 %v3139, %v3139
  %s3141 = scalar_lea.vmem %s7, 160
  %v3142 = vld [vmem:[%s3141] sm:$0xf]
  %v3143 = vld [vmem:[%s3141 + $0x4] sm:$0xf]
  %v3144 = vld [vmem:[%s3141 + $0x8] sm:$0xf]
  %v3145 = vld [vmem:[%s3141 + $0xc] sm:$0xf]
  %v3146 = vld [vmem:[%s3141 + $0x10] sm:$0xf]
  %v3147 = vld [vmem:[%s3141 + $0x14] sm:$0xf]
  %v3148 = vld [vmem:[%s3141 + $0x18] sm:$0xf]
  %v3149 = vld [vmem:[%s3141 + $0x1c] sm:$0xf]
  %v3150 = vld [vmem:[%s3141 + $0x20] sm:$0xf]
  %v3151 = vld [vmem:[%s3141 + $0x24] sm:$0xf]
  %v3162 = vunpack.c.l.b16 %v3142
  %v3163 = vunpack.c.l.b16 %v3143
  %v3164 = vunpack.c.l.b16 %v3144
  %v3165 = vunpack.c.l.b16 %v3145
  %v3166 = vunpack.c.l.b16 %v3146
  %v3167 = vunpack.c.l.b16 %v3147
  %v3168 = vunpack.c.l.b16 %v3148
  %v3169 = vunpack.c.l.b16 %v3149
  %v3170 = vunpack.c.l.b16 %v3150
  %v3171 = vunpack.c.l.b16 %v3151
  %v3172 = vpack.c.b16 %v3163, %v3162
  %v3173 = vpack.c.b16 %v3165, %v3164
  %v3174 = vpack.c.b16 %v3167, %v3166
  %v3175 = vpack.c.b16 %v3169, %v3168
  %v3176 = vpack.c.b16 %v3171, %v3170
  %v3183 = vsel %vm2693, %v3140, 0
  %3185 = vmatprep.subr.bf16.mxu0 0
  %3186 = vmatpush1.bf16.msra.mxu0 0
  %3187 = vmatprep.subr.bf16.mxu0 0
  %3188 = vmatpush1.bf16.msra.mxu0 0
  %3189 = vmatprep.subr.bf16.mxu0 0
  %3190 = vmatpush1.bf16.msra.mxu0 0
  %3191 = vmatprep.subr.bf16.mxu0 0
  %3192 = vmatpush1.bf16.msra.mxu0 %v3176
  %3193 = vmatprep.subr.bf16.mxu0 0
  %3194 = vmatpush1.bf16.msra.mxu0 %v3175
  %3195 = vmatprep.subr.bf16.mxu0 0
  %3196 = vmatpush1.bf16.msra.mxu0 %v3174
  %3197 = vmatprep.subr.bf16.mxu0 0
  %3198 = vmatpush1.bf16.msra.mxu0 %v3173
  %3199 = vmatprep.subr.bf16.mxu0 0
  %3200 = vmatpush1.bf16.msra.mxu0 %v3172
  %3201 = vmatprep.subr.bf16.mxu0 0
  %3202 = vmatpush2.bf16.msra.mxu0 0
  %3203 = vmatprep.subr.bf16.mxu0 0
  %3204 = vmatpush2.bf16.msra.mxu0 0
  %3205 = vmatprep.subr.bf16.mxu0 0
  %3206 = vmatpush2.bf16.msra.mxu0 0
  %3207 = vmatprep.subr.bf16.mxu0 0
  %3208 = vmatpush2.bf16.msra.mxu0 0
  %3209 = vmatprep.subr.bf16.mxu0 0
  %3210 = vmatpush2.bf16.msra.mxu0 0
  %3211 = vmatprep.subr.bf16.mxu0 0
  %3212 = vmatpush2.bf16.msra.mxu0 0
  %3213 = vmatprep.subr.bf16.mxu0 0
  %3214 = vmatpush2.bf16.msra.mxu0 0
  %3215 = vmatprep.subr.bf16.mxu0 0
  %3216 = vmatpush2.bf16.msra.mxu0 0
  %3217 = vmatprep.mubr.bf16.mxu0 0
  %3218 = vmatmul.mubr.bf16.gmra.mxu0 %v3183
  %v3219 = vpop.f32.mrf.mxu0
  %v3220 = vadd.f32 0.0, %v3219
  %v3221 = vpop.f32.mrf.mxu0
  %v3222 = vpop.f32.mrf.mxu0
  %v3223 = vpop.f32.mrf.mxu0
  %3224 = vdwg.mxu0
  %v3225 = vadd.f32 %v3121, %v3220
  %v3226 = vld [vmem:[%s8] sm:$0x1]
  %v3228 = vlaneseq
  %v3229 = vshrl.u32 %v3228, 7
  %v3230 = vsub.s32 0, %v3229
  %v3231 = vrot.slane %v3226, %v3230
  %v3233 = vadd.f32 %v3225, %v3231
  %v3234 = vtanh.pop %v3233
  %v3235 = vpack.c.bf16 %v3234, %v3234
  %v3236 = vld [vmem:[%s9] sm:$0xf]
  %v3237 = vld [vmem:[%s9 + $0x4] sm:$0xf]
  %v3238 = vld [vmem:[%s9 + $0x8] sm:$0xf]
  %v3239 = vld [vmem:[%s9 + $0xc] sm:$0xf]
  %v3240 = vld [vmem:[%s9 + $0x10] sm:$0xf]
  %v3241 = vld [vmem:[%s9 + $0x14] sm:$0xf]
  %v3242 = vld [vmem:[%s9 + $0x18] sm:$0xf]
  %v3243 = vld [vmem:[%s9 + $0x1c] sm:$0xf]
  %v3244 = vld [vmem:[%s9 + $0x20] sm:$0xf]
  %v3245 = vld [vmem:[%s9 + $0x24] sm:$0xf]
  %v3246 = vld [vmem:[%s9 + $0x28] sm:$0xf]
  %v3247 = vld [vmem:[%s9 + $0x2c] sm:$0xf]
  %v3248 = vld [vmem:[%s9 + $0x30] sm:$0xf]
  %v3249 = vld [vmem:[%s9 + $0x34] sm:$0xf]
  %v3250 = vld [vmem:[%s9 + $0x38] sm:$0xf]
  %v3251 = vld [vmem:[%s10] sm:$0x1]
  %v3253 = vlaneseq
  %v3254 = vshrl.u32 %v3253, 7
  %v3255 = vsub.s32 0, %v3254
  %v3256 = vrot.slane %v3251, %v3255
  %v3273 = vunpack.c.l.b16 %v3236
  %v3274 = vunpack.c.l.b16 %v3237
  %v3275 = vunpack.c.l.b16 %v3238
  %v3276 = vunpack.c.l.b16 %v3239
  %v3277 = vunpack.c.l.b16 %v3240
  %v3278 = vunpack.c.l.b16 %v3241
  %v3279 = vunpack.c.l.b16 %v3242
  %v3280 = vunpack.c.l.b16 %v3243
  %v3281 = vunpack.c.l.b16 %v3244
  %v3282 = vunpack.c.l.b16 %v3245
  %v3283 = vunpack.c.l.b16 %v3246
  %v3284 = vunpack.c.l.b16 %v3247
  %v3285 = vunpack.c.l.b16 %v3248
  %v3286 = vunpack.c.l.b16 %v3249
  %v3287 = vunpack.c.l.b16 %v3250
  %v3288 = vpack.c.b16 %v3274, %v3273
  %v3289 = vpack.c.b16 %v3276, %v3275
  %v3290 = vpack.c.b16 %v3278, %v3277
  %v3291 = vpack.c.b16 %v3280, %v3279
  %v3292 = vpack.c.b16 %v3282, %v3281
  %v3293 = vpack.c.b16 %v3284, %v3283
  %v3294 = vpack.c.b16 %v3286, %v3285
  %v3295 = vpack.c.b16 %v3287, %v3287
  %vm3303 = vcmask 982016
  %v3305 = vsel %vm3303, %v3235, 0
  %v3308 = vsel %vm824, %v3295, 0
  %3310 = vmatprep.subr.bf16.mxu0 0
  %3311 = vmatpush1.bf16.msra.mxu0 %v3308
  %3312 = vmatprep.subr.bf16.mxu0 0
  %3313 = vmatpush1.bf16.msra.mxu0 %v3294
  %3314 = vmatprep.subr.bf16.mxu0 0
  %3315 = vmatpush1.bf16.msra.mxu0 %v3293
  %3316 = vmatprep.subr.bf16.mxu0 0
  %3317 = vmatpush1.bf16.msra.mxu0 %v3292
  %3318 = vmatprep.subr.bf16.mxu0 0
  %3319 = vmatpush1.bf16.msra.mxu0 %v3291
  %3320 = vmatprep.subr.bf16.mxu0 0
  %3321 = vmatpush1.bf16.msra.mxu0 %v3290
  %3322 = vmatprep.subr.bf16.mxu0 0
  %3323 = vmatpush1.bf16.msra.mxu0 %v3289
  %3324 = vmatprep.subr.bf16.mxu0 0
  %3325 = vmatpush1.bf16.msra.mxu0 %v3288
  %3326 = vmatprep.subr.bf16.mxu0 0
  %3327 = vmatpush2.bf16.msra.mxu0 0
  %3328 = vmatprep.subr.bf16.mxu0 0
  %3329 = vmatpush2.bf16.msra.mxu0 0
  %3330 = vmatprep.subr.bf16.mxu0 0
  %3331 = vmatpush2.bf16.msra.mxu0 0
  %3332 = vmatprep.subr.bf16.mxu0 0
  %3333 = vmatpush2.bf16.msra.mxu0 0
  %3334 = vmatprep.subr.bf16.mxu0 0
  %3335 = vmatpush2.bf16.msra.mxu0 0
  %3336 = vmatprep.subr.bf16.mxu0 0
  %3337 = vmatpush2.bf16.msra.mxu0 0
  %3338 = vmatprep.subr.bf16.mxu0 0
  %3339 = vmatpush2.bf16.msra.mxu0 0
  %3340 = vmatprep.subr.bf16.mxu0 0
  %3341 = vmatpush2.bf16.msra.mxu0 0
  %3342 = vmatprep.mubr.bf16.mxu0 0
  %3343 = vmatmul.mubr.bf16.gmra.mxu0 %v3305
  %v3344 = vpop.f32.mrf.mxu0
  %v3345 = vadd.f32 %v3256, %v3344
  %v3346 = vpop.f32.mrf.mxu0
  %v3347 = vpop.f32.mrf.mxu0
  %v3348 = vpop.f32.mrf.mxu0
  %3349 = vdwg.mxu0
  %v3350 = vtanh.pop %v3345
  %v3351 = vpack.c.bf16 %v3350, %v3350
  %v3352 = vld [vmem:[%s11] sm:$0xf]
  %v3353 = vld [vmem:[%s11 + $0x4] sm:$0xf]
  %v3354 = vld [vmem:[%s11 + $0x8] sm:$0xf]
  %v3355 = vld [vmem:[%s11 + $0xc] sm:$0xf]
  %v3356 = vld [vmem:[%s11 + $0x10] sm:$0xf]
  %v3357 = vld [vmem:[%s11 + $0x14] sm:$0xf]
  %v3358 = vld [vmem:[%s11 + $0x18] sm:$0xf]
  %v3359 = vld [vmem:[%s11 + $0x1c] sm:$0xf]
  %v3360 = vld [vmem:[%s11 + $0x20] sm:$0xf]
  %v3361 = vld [vmem:[%s11 + $0x24] sm:$0xf]
  %v3362 = vld [vmem:[%s11 + $0x28] sm:$0x3]
  %v3363 = vld [vmem:[%s12] sm:$0x1]
  %v3365 = vlaneseq
  %v3366 = vshrl.u32 %v3365, 7
  %v3367 = vsub.s32 0, %v3366
  %v3368 = vrot.slane %v3363, %v3367
  %v3381 = vunpack.c.l.b16 %v3352
  %v3382 = vunpack.c.l.b16 %v3353
  %v3383 = vunpack.c.l.b16 %v3354
  %v3384 = vunpack.c.l.b16 %v3355
  %v3385 = vunpack.c.l.b16 %v3356
  %v3386 = vunpack.c.l.b16 %v3357
  %v3387 = vunpack.c.l.b16 %v3358
  %v3388 = vunpack.c.l.b16 %v3359
  %v3389 = vunpack.c.l.b16 %v3360
  %v3390 = vunpack.c.l.b16 %v3361
  %v3391 = vunpack.c.l.b16 %v3362
  %v3392 = vpack.c.b16 %v3382, %v3381
  %v3393 = vpack.c.b16 %v3384, %v3383
  %v3394 = vpack.c.b16 %v3386, %v3385
  %v3395 = vpack.c.b16 %v3388, %v3387
  %v3396 = vpack.c.b16 %v3390, %v3389
  %v3397 = vpack.c.b16 %v3391, %v3391
  %v3404 = vsel %vm989, %v3351, 0
  %v3407 = vsel %vm1284, %v3397, 0
  %3409 = vmatprep.subr.bf16.mxu0 0
  %3410 = vmatpush1.bf16.msra.mxu0 0
  %3411 = vmatprep.subr.bf16.mxu0 0
  %3412 = vmatpush1.bf16.msra.mxu0 0
  %3413 = vmatprep.subr.bf16.mxu0 0
  %3414 = vmatpush1.bf16.msra.mxu0 %v3407
  %3415 = vmatprep.subr.bf16.mxu0 0
  %3416 = vmatpush1.bf16.msra.mxu0 %v3396
  %3417 = vmatprep.subr.bf16.mxu0 0
  %3418 = vmatpush1.bf16.msra.mxu0 %v3395
  %3419 = vmatprep.subr.bf16.mxu0 0
  %3420 = vmatpush1.bf16.msra.mxu0 %v3394
  %3421 = vmatprep.subr.bf16.mxu0 0
  %3422 = vmatpush1.bf16.msra.mxu0 %v3393
  %3423 = vmatprep.subr.bf16.mxu0 0
  %3424 = vmatpush1.bf16.msra.mxu0 %v3392
  %3425 = vmatprep.subr.bf16.mxu0 0
  %3426 = vmatpush2.bf16.msra.mxu0 0
  %3427 = vmatprep.subr.bf16.mxu0 0
  %3428 = vmatpush2.bf16.msra.mxu0 0
  %3429 = vmatprep.subr.bf16.mxu0 0
  %3430 = vmatpush2.bf16.msra.mxu0 0
  %3431 = vmatprep.subr.bf16.mxu0 0
  %3432 = vmatpush2.bf16.msra.mxu0 0
  %3433 = vmatprep.subr.bf16.mxu0 0
  %3434 = vmatpush2.bf16.msra.mxu0 0
  %3435 = vmatprep.subr.bf16.mxu0 0
  %3436 = vmatpush2.bf16.msra.mxu0 0
  %3437 = vmatprep.subr.bf16.mxu0 0
  %3438 = vmatpush2.bf16.msra.mxu0 0
  %3439 = vmatprep.subr.bf16.mxu0 0
  %3440 = vmatpush2.bf16.msra.mxu0 0
  %3441 = vmatprep.mubr.bf16.mxu0 0
  %3442 = vmatmul.mubr.bf16.gmra.mxu0 %v3404
  %v3443 = vpop.f32.mrf.mxu0
  %v3444 = vadd.f32 %v3368, %v3443
  %v3445 = vpop.f32.mrf.mxu0
  %v3446 = vpop.f32.mrf.mxu0
  %v3447 = vpop.f32.mrf.mxu0
  %3448 = vdwg.mxu0
  %3449 = vmax.xlane.f32.xlu0 %v3444
  %v3450 = vpop.xlane.xlu0 %3449
  %v3451 = vsub.f32 %v3444, %v3450
  %v3452 = vmul.f32 %v3451, 1.442695
  %v3453 = vpow.pop %v3452
  %3454 = vadd.xlane.f32.xlu0 %v3453
  %v3455 = vpop.xlane.xlu0 %3454
  %v3456 = vrcp.pop %v3455
  %v3457 = vmul.f32 %v3453, %v3456
  %3458 = vst [vmem:[%s13] sm:$0xff] %v3457
  // Predicated region
  $region54: #{lenet5_forward.1} parent=0 // pred_check
    _
  $region55: #{lenet5_forward.1} parent=0 // pred_check_branch
    %3460 = sbr.rel (0) target = $region57
  $region56: #{lenet5_forward.1} parent=0 // pred_region
    _
  $region57: #{lenet5_forward.1} parent=0 // pred_fallthru
    _
  // Predicated region
  $region58: #{lenet5_forward.1} parent=0 // pred_check
    _
  $region59: #{lenet5_forward.1} parent=0 // pred_check_branch
    %3462 = sbr.rel (0) target = $region61
  $region60: #{lenet5_forward.1} parent=0 // pred_region
    _
  $region61: #{lenet5_forward.1} parent=0 // pred_fallthru
    _

</llo_original>
